<compile_context>
chip_gen: v5e
topology: v5e:2x2
jax: 0.10.0
libtpu: 0.0.40
codegen_flags: <defaults>
</compile_context>

<pallas_src>
import functools
import math

import jax
import jax.numpy as jnp
from jax.experimental import pallas as pl
from jax.experimental.pallas import tpu as pltpu  # noqa: F401  (TPU backend)


# ----------------------------- in-kernel helpers ----------------------------

def _layer_norm(x, g, b, eps=1e-5):
    mu = jnp.mean(x, axis=-1, keepdims=True)
    var = jnp.mean(jnp.square(x - mu), axis=-1, keepdims=True)
    return (x - mu) * jax.lax.rsqrt(var + eps) * g + b


# ------------------------------- fused kernel -------------------------------

def _fused_forward_kernel(x_ref, bias_ref, in_g_ref, in_b_ref, *rest,
                          layer_cfgs, hidden_channels):
    """Whole GATv2 forward (eval mode) in one kernel.

    x_ref    : [N, F_in]   node features
    bias_ref : [N*N, 1]    additive attention mask, row i*N+j is 0 if there is
                           an edge j -> i (or i == j), else -1e30
    in_*_ref : [1, F_in]   input LayerNorm scale / shift
    rest     : per conv layer (w, att_block, head_expand, ln_g, ln_b), then
               (w1, b1, w2v, b2) for the fused dual MLP head, then o_ref.
      w           : [F_in_l, 2*H*C]  fused [lin_l | lin_r] weight
      att_block   : [H*C, H]         block-diag per-head attention vectors
      head_expand : [H, H*C]         block-diag ones (alpha -> head_dim lanes)
    o_ref    : [N, 2]      cat([rtt_pred, retrans_pred], dim=1)
    """
    num_layers = len(layer_cfgs)
    layer_refs = [rest[5 * i:5 * i + 5] for i in range(num_layers)]
    w1_ref, b1_ref, w2v_ref, b2_ref, o_ref = rest[5 * num_layers:]

    n = x_ref.shape[0]
    apply_norms = n > 1            # static python bool (matches `x.size(0) > 1`)

    x = x_ref[...]
    bias = bias_ref[...]           # [N*N, 1], loaded once, reused every layer
    if apply_norms:
        x = _layer_norm(x, in_g_ref[...], in_b_ref[...])

    for i, ((w_ref, a_ref, e_ref, g_ref, b_ref),
            (heads, head_dim)) in enumerate(zip(layer_refs, layer_cfgs)):
        hc = heads * head_dim
        in_f = x.shape[-1]

        # fused lin_l / lin_r projection — one MXU dot
        xlr = jnp.dot(x, w_ref[...], preferred_element_type=jnp.float32)
        xl = xlr[:, :hc]           # source-side features  [N, H*C]
        xr = xlr[:, hc:]           # target-side features  [N, H*C]

        # pairwise GATv2 pre-activations for all heads at once (f32):
        #   s[i, j, h*C+c] = LeakyReLU(xr[i, h*C+c] + xl[j, h*C+c])
        s = xr[:, None, :] + xl[None, :, :]                   # [N, N, H*C]
        s = jnp.where(s > 0, s, 0.2 * s)

        # per-head score reduction as ONE MXU dot with the block-diagonal
        # attention matrix, plus the precomputed additive mask bias
        scores = jnp.dot(s.reshape(n * n, hc), a_ref[...],
                         preferred_element_type=jnp.float32) + bias  # [N*N, H]

        # masked softmax over incoming edges j for each (target i, head h)
        sc3 = scores.reshape(n, n, heads)                     # [N(i), N(j), H]
        m = jnp.max(sc3, axis=1, keepdims=True)               # [N, 1, H]
        p = jnp.exp(sc3 - m)
        l = jnp.sum(p, axis=1, keepdims=True)
        alpha = p / l                                         # exact f32 softmax

        # aggregate: out[i, h*C+c] = sum_j alpha[i, j, h] * xl[j, h*C+c]
        a_exp = jnp.dot(alpha.reshape(n * n, heads), e_ref[...],
                        preferred_element_type=jnp.float32)   # [N*N, H*C]
        out = jnp.sum(a_exp.reshape(n, n, hc) * xl[None, :, :], axis=1)

        if apply_norms:
            out = _layer_norm(out, g_ref[...], b_ref[...])
        if (in_f == hidden_channels) and (i > 0) and (hc == in_f):
            out = out + x * 0.1
        if i < num_layers - 1:
            out = jnp.maximum(out, 0.0)
            # feature dropout between layers: eval mode -> identity
        x = out

    # output_dropout: eval mode -> identity
    # fused dual MLP head: relu(x @ [W1_rtt | W1_ret] + b1); each scalar head
    # is then a VPU multiply + lane reduce (no zero-padded MXU second matmul)
    h = jnp.dot(x, w1_ref[...], preferred_element_type=jnp.float32) + b1_ref[...]
    h = jnp.maximum(h, 0.0)
    prod = h * w2v_ref[...]
    half = prod.shape[-1] // 2
    rtt = jnp.sum(prod[:, :half], axis=-1, keepdims=True)
    ret = jnp.sum(prod[:, half:], axis=-1, keepdims=True)
    o_ref[...] = jnp.concatenate([rtt, ret], axis=-1) + b2_ref[...]


# ------------------------------ model forward --------------------------------

def gatv2_forward(params, x, edge_index, hidden_channels):
    n = x.shape[0]
    # additive attention-mask bias built once OUTSIDE the kernel, without any
    # scatter: bias[i*N+j] = 0 iff edge j -> i exists (or i == j), else -1e30
    idx = jnp.arange(n)
    src, dst = edge_index[0], edge_index[1]
    dst_oh = (dst[:, None] == idx[None, :]).astype(jnp.float32)   # [E, N]
    src_oh = (src[:, None] == idx[None, :]).astype(jnp.float32)   # [E, N]
    adj = jnp.dot(dst_oh.T, src_oh) + jnp.eye(n, dtype=jnp.float32)
    bias = jnp.where(adj > 0, 0.0, -1e30).reshape(n * n, 1)

    layer_cfgs = tuple((c["heads"], c["head_dim"]) for c in params["convs"])
    kern = functools.partial(_fused_forward_kernel,
                             layer_cfgs=layer_cfgs,
                             hidden_channels=hidden_channels)

    inputs = [x, bias, params["input_norm"]["g"], params["input_norm"]["b"]]
    for conv, norm in zip(params["convs"], params["norms"]):
        inputs += [conv["w"], conv["att_block"], conv["head_expand"],
                   norm["g"], norm["b"]]
    mlp = params["mlp"]
    inputs += [mlp["w1"], mlp["b1"], mlp["w2v"], mlp["b2"]]

    # single fused pallas_call: everything VMEM-resident, no grid needed
    return pl.pallas_call(
        kern,
        out_shape=jax.ShapeDtypeStruct((n, 2), jnp.float32),
    )(*inputs)


# ------------------------------ parameter init --------------------------------

def _xavier_uniform(key, out_f, in_f, gain):
    bound = gain * math.sqrt(6.0 / (in_f + out_f))
    return jax.random.uniform(key, (out_f, in_f), jnp.float32, -bound, bound)


def init_params(key, num_node_features, hidden_channels, num_layers, heads):
    head_dim = hidden_channels // heads
    keys = iter(jax.random.split(key, 64))

    params = {
        "input_norm": {"g": jnp.ones((1, num_node_features), jnp.float32),
                       "b": jnp.zeros((1, num_node_features), jnp.float32)},
        "convs": [],
        "norms": [],
    }

    conv_cfgs = [(num_node_features, head_dim, heads)]
    for _ in range(num_layers - 2):
        conv_cfgs.append((hidden_channels, head_dim, heads))
    if num_layers > 1:
        conv_cfgs.append((hidden_channels, hidden_channels, 1))

    for in_c, out_c, h in conv_cfgs:
        # PyTorch Linear weight is [out, in]; store transposed [in, out] and
        # fuse lin_l || lin_r along the output axis (bias=False in GATv2Conv).
        w_l = _xavier_uniform(next(keys), h * out_c, in_c, 0.3).T
        w_r = _xavier_uniform(next(keys), h * out_c, in_c, 0.3).T
        w = jnp.concatenate([w_l, w_r], axis=1)               # [in_c, 2*h*out_c]
        a_bound = math.sqrt(6.0 / (h + out_c))                # PyG glorot on att
        att = jax.random.uniform(next(keys), (h, out_c), jnp.float32,
                                 -a_bound, a_bound)
        eye_h = jnp.eye(h, dtype=jnp.float32)
        # block-diagonal attention matrix: att_block[h*C+c, h'] = att[h,c]*(h==h')
        att_block = (att[:, :, None] * eye_h[:, None, :]).reshape(h * out_c, h)
        # head expander: head_expand[h, h'*C+c] = (h == h')
        head_expand = jnp.repeat(eye_h, out_c, axis=1)        # [h, h*out_c]
        params["convs"].append({"w": w, "att_block": att_block,
                                "head_expand": head_expand,
                                "heads": h, "head_dim": out_c})
        params["norms"].append({"g": jnp.ones((1, h * out_c), jnp.float32),
                                "b": jnp.zeros((1, h * out_c), jnp.float32)})

    # Fused dual MLP head: W1 = [W1_rtt | W1_retrans]; the two 1-output second
    # linears are kept as a single per-lane weight vector (VPU path in-kernel).
    half = hidden_channels // 2
    w1_rtt = _xavier_uniform(next(keys), half, hidden_channels, 0.3).T
    w1_ret = _xavier_uniform(next(keys), half, hidden_channels, 0.3).T
    w2_rtt = _xavier_uniform(next(keys), 1, half, 0.3)        # [1, half]
    w2_ret = _xavier_uniform(next(keys), 1, half, 0.3)        # [1, half]
    params["mlp"] = {
        "w1": jnp.concatenate([w1_rtt, w1_ret], axis=1),      # [hidden, 2*half]
        "b1": jnp.zeros((1, 2 * half), jnp.float32),
        "w2v": jnp.concatenate([w2_rtt, w2_ret], axis=1),     # [1, 2*half]
        "b2": jnp.zeros((1, 2), jnp.float32),
    }
    return params


# ----------------------------------- main -------------------------------------

if __name__ == "__main__":
    num_node_features = 8
    hidden_channels = 32
    num_layers = 3
    heads = 4
    N = 16

    key = jax.random.PRNGKey(0)
    kx, ke, kp = jax.random.split(key, 3)

    x = jax.random.normal(kx, (N, num_node_features), jnp.float32)

    # random, duplicate-free directed edge set (off-diagonal);
    # edge_index[0] = src, edge_index[1] = dst  (rand_adj[i, j] => edge j -> i)
    rand_adj = (jax.random.uniform(ke, (N, N)) < 0.25) & (~jnp.eye(N, dtype=bool))
    dst_idx, src_idx = jnp.nonzero(rand_adj)
    edge_index = jnp.stack([src_idx, dst_idx], axis=0).astype(jnp.int32)

    params = init_params(kp, num_node_features, hidden_channels,
                         num_layers, heads)

    out = gatv2_forward(params, x, edge_index, hidden_channels)
    out = jax.block_until_ready(out)

    assert out.shape == (N, 2), out.shape
    assert bool(jnp.all(jnp.isfinite(out)))
    print("KERNEL_OK")
</pallas_src>

<mosaic_0001>
module attributes {stable_mosaic.version = 11 : i64} {
  func.func @_fused_forward_kernel(%arg0: memref<16x8xf32, #tpu.memory_space<vmem>>, %arg1: memref<256x1xf32, #tpu.memory_space<vmem>>, %arg2: memref<1x8xf32, #tpu.memory_space<vmem>>, %arg3: memref<1x8xf32, #tpu.memory_space<vmem>>, %arg4: memref<8x64xf32, #tpu.memory_space<vmem>>, %arg5: memref<32x4xf32, #tpu.memory_space<vmem>>, %arg6: memref<4x32xf32, #tpu.memory_space<vmem>>, %arg7: memref<1x32xf32, #tpu.memory_space<vmem>>, %arg8: memref<1x32xf32, #tpu.memory_space<vmem>>, %arg9: memref<32x64xf32, #tpu.memory_space<vmem>>, %arg10: memref<32x4xf32, #tpu.memory_space<vmem>>, %arg11: memref<4x32xf32, #tpu.memory_space<vmem>>, %arg12: memref<1x32xf32, #tpu.memory_space<vmem>>, %arg13: memref<1x32xf32, #tpu.memory_space<vmem>>, %arg14: memref<32x64xf32, #tpu.memory_space<vmem>>, %arg15: memref<32x1xf32, #tpu.memory_space<vmem>>, %arg16: memref<1x32xf32, #tpu.memory_space<vmem>>, %arg17: memref<1x32xf32, #tpu.memory_space<vmem>>, %arg18: memref<1x32xf32, #tpu.memory_space<vmem>>, %arg19: memref<32x32xf32, #tpu.memory_space<vmem>>, %arg20: memref<1x32xf32, #tpu.memory_space<vmem>>, %arg21: memref<1x32xf32, #tpu.memory_space<vmem>>, %arg22: memref<1x2xf32, #tpu.memory_space<vmem>>, %arg23: memref<16x2xf32, #tpu.memory_space<vmem>>) attributes {dimension_semantics = [], scalar_prefetch = 0 : i64, scratch_operands = 0 : i64, tpu.core_type = #tpu.core_type<tc>} {
    %c0 = arith.constant 0 : index
    %c0_0 = arith.constant 0 : index
    %0 = vector.load %arg0[%c0, %c0_0] : memref<16x8xf32, #tpu.memory_space<vmem>>, vector<16x8xf32>
    %c0_1 = arith.constant 0 : index
    %c0_2 = arith.constant 0 : index
    %1 = vector.load %arg1[%c0_1, %c0_2] : memref<256x1xf32, #tpu.memory_space<vmem>>, vector<256x1xf32>
    %c0_3 = arith.constant 0 : index
    %c0_4 = arith.constant 0 : index
    %2 = vector.load %arg2[%c0_3, %c0_4] : memref<1x8xf32, #tpu.memory_space<vmem>>, vector<1x8xf32>
    %c0_5 = arith.constant 0 : index
    %c0_6 = arith.constant 0 : index
    %3 = vector.load %arg3[%c0_5, %c0_6] : memref<1x8xf32, #tpu.memory_space<vmem>>, vector<1x8xf32>
    %cst = arith.constant dense<0.000000e+00> : vector<16xf32>
    %4 = vector.multi_reduction <add>, %0, %cst [1] : vector<16x8xf32> to vector<16xf32>
    %5 = vector.shape_cast %4 : vector<16xf32> to vector<16x1xf32>
    %cst_7 = arith.constant 8.000000e+00 : f32
    %6 = vector.broadcast %cst_7 : f32 to vector<16x1xf32>
    %7 = arith.divf %5, %6 : vector<16x1xf32>
    %8 = vector.broadcast %7 : vector<16x1xf32> to vector<16x8xf32>
    %9 = arith.subf %0, %8 : vector<16x8xf32>
    %10 = arith.mulf %9, %9 : vector<16x8xf32>
    %cst_8 = arith.constant dense<0.000000e+00> : vector<16xf32>
    %11 = vector.multi_reduction <add>, %10, %cst_8 [1] : vector<16x8xf32> to vector<16xf32>
    %12 = vector.shape_cast %11 : vector<16xf32> to vector<16x1xf32>
    %cst_9 = arith.constant 8.000000e+00 : f32
    %13 = vector.broadcast %cst_9 : f32 to vector<16x1xf32>
    %14 = arith.divf %12, %13 : vector<16x1xf32>
    %15 = vector.broadcast %7 : vector<16x1xf32> to vector<16x8xf32>
    %16 = arith.subf %0, %15 : vector<16x8xf32>
    %cst_10 = arith.constant 9.99999974E-6 : f32
    %17 = vector.broadcast %cst_10 : f32 to vector<16x1xf32>
    %18 = arith.addf %14, %17 : vector<16x1xf32>
    %19 = math.rsqrt %18 : vector<16x1xf32>
    %20 = vector.broadcast %19 : vector<16x1xf32> to vector<16x8xf32>
    %21 = arith.mulf %16, %20 : vector<16x8xf32>
    %22 = vector.broadcast %2 : vector<1x8xf32> to vector<16x8xf32>
    %23 = arith.mulf %21, %22 : vector<16x8xf32>
    %24 = vector.broadcast %3 : vector<1x8xf32> to vector<16x8xf32>
    %25 = arith.addf %23, %24 : vector<16x8xf32>
    %c0_11 = arith.constant 0 : index
    %c0_12 = arith.constant 0 : index
    %26 = vector.load %arg4[%c0_11, %c0_12] : memref<8x64xf32, #tpu.memory_space<vmem>>, vector<8x64xf32>
    %cst_13 = arith.constant dense<0.000000e+00> : vector<16x64xf32>
    %27 = tpu.matmul %25, %26, %cst_13 {dimension_numbers = #tpu.dot_dimension_numbers<[1], [0], [0], [1], [0, 0, 1, 1], [], []>} : vector<16x8xf32>, vector<8x64xf32>, vector<16x64xf32> -> vector<16x64xf32>
    %28 = vector.extract_strided_slice %27 {offsets = [0, 0], sizes = [16, 32], strides = [1, 1]} : vector<16x64xf32> to vector<16x32xf32>
    %29 = vector.extract_strided_slice %27 {offsets = [0, 32], sizes = [16, 32], strides = [1, 1]} : vector<16x64xf32> to vector<16x32xf32>
    %30 = vector.shape_cast %29 : vector<16x32xf32> to vector<16x1x32xf32>
    %31 = vector.shape_cast %28 : vector<16x32xf32> to vector<1x16x32xf32>
    %32 = vector.broadcast %30 : vector<16x1x32xf32> to vector<16x16x32xf32>
    %33 = vector.broadcast %31 : vector<1x16x32xf32> to vector<16x16x32xf32>
    %34 = arith.addf %32, %33 : vector<16x16x32xf32>
    %cst_14 = arith.constant 0.000000e+00 : f32
    %35 = vector.broadcast %cst_14 : f32 to vector<16x16x32xf32>
    %36 = arith.cmpf ogt, %34, %35 : vector<16x16x32xf32>
    %cst_15 = arith.constant 2.000000e-01 : f32
    %37 = vector.broadcast %cst_15 : f32 to vector<16x16x32xf32>
    %38 = arith.mulf %37, %34 : vector<16x16x32xf32>
    %39 = arith.select %36, %34, %38 : vector<16x16x32xi1>, vector<16x16x32xf32>
    %40 = vector.shape_cast %39 : vector<16x16x32xf32> to vector<256x32xf32>
    %c0_16 = arith.constant 0 : index
    %c0_17 = arith.constant 0 : index
    %41 = vector.load %arg5[%c0_16, %c0_17] : memref<32x4xf32, #tpu.memory_space<vmem>>, vector<32x4xf32>
    %cst_18 = arith.constant dense<0.000000e+00> : vector<256x4xf32>
    %42 = tpu.matmul %40, %41, %cst_18 {dimension_numbers = #tpu.dot_dimension_numbers<[1], [0], [0], [1], [0, 0, 1, 1], [], []>} : vector<256x32xf32>, vector<32x4xf32>, vector<256x4xf32> -> vector<256x4xf32>
    %43 = vector.broadcast %1 : vector<256x1xf32> to vector<256x4xf32>
    %44 = arith.addf %42, %43 : vector<256x4xf32>
    %45 = vector.shape_cast %44 : vector<256x4xf32> to vector<16x16x4xf32>
    %cst_19 = arith.constant dense<0xFF800000> : vector<16x4xf32>
    %46 = vector.multi_reduction <maximumf>, %45, %cst_19 [1] : vector<16x16x4xf32> to vector<16x4xf32>
    %47 = vector.shape_cast %46 : vector<16x4xf32> to vector<16x1x4xf32>
    %48 = vector.broadcast %47 : vector<16x1x4xf32> to vector<16x16x4xf32>
    %49 = arith.subf %45, %48 : vector<16x16x4xf32>
    %50 = math.exp %49 : vector<16x16x4xf32>
    %cst_20 = arith.constant dense<0.000000e+00> : vector<16x4xf32>
    %51 = vector.multi_reduction <add>, %50, %cst_20 [1] : vector<16x16x4xf32> to vector<16x4xf32>
    %52 = vector.shape_cast %51 : vector<16x4xf32> to vector<16x1x4xf32>
    %53 = vector.broadcast %52 : vector<16x1x4xf32> to vector<16x16x4xf32>
    %54 = arith.divf %50, %53 : vector<16x16x4xf32>
    %55 = vector.shape_cast %54 : vector<16x16x4xf32> to vector<256x4xf32>
    %c0_21 = arith.constant 0 : index
    %c0_22 = arith.constant 0 : index
    %56 = vector.load %arg6[%c0_21, %c0_22] : memref<4x32xf32, #tpu.memory_space<vmem>>, vector<4x32xf32>
    %cst_23 = arith.constant dense<0.000000e+00> : vector<256x32xf32>
    %57 = tpu.matmul %55, %56, %cst_23 {dimension_numbers = #tpu.dot_dimension_numbers<[1], [0], [0], [1], [0, 0, 1, 1], [], []>} : vector<256x4xf32>, vector<4x32xf32>, vector<256x32xf32> -> vector<256x32xf32>
    %58 = vector.shape_cast %57 : vector<256x32xf32> to vector<16x16x32xf32>
    %59 = vector.shape_cast %28 : vector<16x32xf32> to vector<1x16x32xf32>
    %60 = vector.broadcast %59 : vector<1x16x32xf32> to vector<16x16x32xf32>
    %61 = arith.mulf %58, %60 : vector<16x16x32xf32>
    %cst_24 = arith.constant dense<0.000000e+00> : vector<16x32xf32>
    %62 = vector.multi_reduction <add>, %61, %cst_24 [1] : vector<16x16x32xf32> to vector<16x32xf32>
    %c0_25 = arith.constant 0 : index
    %c0_26 = arith.constant 0 : index
    %63 = vector.load %arg7[%c0_25, %c0_26] : memref<1x32xf32, #tpu.memory_space<vmem>>, vector<1x32xf32>
    %c0_27 = arith.constant 0 : index
    %c0_28 = arith.constant 0 : index
    %64 = vector.load %arg8[%c0_27, %c0_28] : memref<1x32xf32, #tpu.memory_space<vmem>>, vector<1x32xf32>
    %cst_29 = arith.constant dense<0.000000e+00> : vector<16xf32>
    %65 = vector.multi_reduction <add>, %62, %cst_29 [1] : vector<16x32xf32> to vector<16xf32>
    %66 = vector.shape_cast %65 : vector<16xf32> to vector<16x1xf32>
    %cst_30 = arith.constant 3.200000e+01 : f32
    %67 = vector.broadcast %cst_30 : f32 to vector<16x1xf32>
    %68 = arith.divf %66, %67 : vector<16x1xf32>
    %69 = vector.broadcast %68 : vector<16x1xf32> to vector<16x32xf32>
    %70 = arith.subf %62, %69 : vector<16x32xf32>
    %71 = arith.mulf %70, %70 : vector<16x32xf32>
    %cst_31 = arith.constant dense<0.000000e+00> : vector<16xf32>
    %72 = vector.multi_reduction <add>, %71, %cst_31 [1] : vector<16x32xf32> to vector<16xf32>
    %73 = vector.shape_cast %72 : vector<16xf32> to vector<16x1xf32>
    %cst_32 = arith.constant 3.200000e+01 : f32
    %74 = vector.broadcast %cst_32 : f32 to vector<16x1xf32>
    %75 = arith.divf %73, %74 : vector<16x1xf32>
    %76 = vector.broadcast %68 : vector<16x1xf32> to vector<16x32xf32>
    %77 = arith.subf %62, %76 : vector<16x32xf32>
    %cst_33 = arith.constant 9.99999974E-6 : f32
    %78 = vector.broadcast %cst_33 : f32 to vector<16x1xf32>
    %79 = arith.addf %75, %78 : vector<16x1xf32>
    %80 = math.rsqrt %79 : vector<16x1xf32>
    %81 = vector.broadcast %80 : vector<16x1xf32> to vector<16x32xf32>
    %82 = arith.mulf %77, %81 : vector<16x32xf32>
    %83 = vector.broadcast %63 : vector<1x32xf32> to vector<16x32xf32>
    %84 = arith.mulf %82, %83 : vector<16x32xf32>
    %85 = vector.broadcast %64 : vector<1x32xf32> to vector<16x32xf32>
    %86 = arith.addf %84, %85 : vector<16x32xf32>
    %cst_34 = arith.constant 0.000000e+00 : f32
    %87 = vector.broadcast %cst_34 : f32 to vector<16x32xf32>
    %88 = arith.maximumf %86, %87 : vector<16x32xf32>
    %c0_35 = arith.constant 0 : index
    %c0_36 = arith.constant 0 : index
    %89 = vector.load %arg9[%c0_35, %c0_36] : memref<32x64xf32, #tpu.memory_space<vmem>>, vector<32x64xf32>
    %cst_37 = arith.constant dense<0.000000e+00> : vector<16x64xf32>
    %90 = tpu.matmul %88, %89, %cst_37 {dimension_numbers = #tpu.dot_dimension_numbers<[1], [0], [0], [1], [0, 0, 1, 1], [], []>} : vector<16x32xf32>, vector<32x64xf32>, vector<16x64xf32> -> vector<16x64xf32>
    %91 = vector.extract_strided_slice %90 {offsets = [0, 0], sizes = [16, 32], strides = [1, 1]} : vector<16x64xf32> to vector<16x32xf32>
    %92 = vector.extract_strided_slice %90 {offsets = [0, 32], sizes = [16, 32], strides = [1, 1]} : vector<16x64xf32> to vector<16x32xf32>
    %93 = vector.shape_cast %92 : vector<16x32xf32> to vector<16x1x32xf32>
    %94 = vector.shape_cast %91 : vector<16x32xf32> to vector<1x16x32xf32>
    %95 = vector.broadcast %93 : vector<16x1x32xf32> to vector<16x16x32xf32>
    %96 = vector.broadcast %94 : vector<1x16x32xf32> to vector<16x16x32xf32>
    %97 = arith.addf %95, %96 : vector<16x16x32xf32>
    %cst_38 = arith.constant 0.000000e+00 : f32
    %98 = vector.broadcast %cst_38 : f32 to vector<16x16x32xf32>
    %99 = arith.cmpf ogt, %97, %98 : vector<16x16x32xf32>
    %cst_39 = arith.constant 2.000000e-01 : f32
    %100 = vector.broadcast %cst_39 : f32 to vector<16x16x32xf32>
    %101 = arith.mulf %100, %97 : vector<16x16x32xf32>
    %102 = arith.select %99, %97, %101 : vector<16x16x32xi1>, vector<16x16x32xf32>
    %103 = vector.shape_cast %102 : vector<16x16x32xf32> to vector<256x32xf32>
    %c0_40 = arith.constant 0 : index
    %c0_41 = arith.constant 0 : index
    %104 = vector.load %arg10[%c0_40, %c0_41] : memref<32x4xf32, #tpu.memory_space<vmem>>, vector<32x4xf32>
    %cst_42 = arith.constant dense<0.000000e+00> : vector<256x4xf32>
    %105 = tpu.matmul %103, %104, %cst_42 {dimension_numbers = #tpu.dot_dimension_numbers<[1], [0], [0], [1], [0, 0, 1, 1], [], []>} : vector<256x32xf32>, vector<32x4xf32>, vector<256x4xf32> -> vector<256x4xf32>
    %106 = vector.broadcast %1 : vector<256x1xf32> to vector<256x4xf32>
    %107 = arith.addf %105, %106 : vector<256x4xf32>
    %108 = vector.shape_cast %107 : vector<256x4xf32> to vector<16x16x4xf32>
    %cst_43 = arith.constant dense<0xFF800000> : vector<16x4xf32>
    %109 = vector.multi_reduction <maximumf>, %108, %cst_43 [1] : vector<16x16x4xf32> to vector<16x4xf32>
    %110 = vector.shape_cast %109 : vector<16x4xf32> to vector<16x1x4xf32>
    %111 = vector.broadcast %110 : vector<16x1x4xf32> to vector<16x16x4xf32>
    %112 = arith.subf %108, %111 : vector<16x16x4xf32>
    %113 = math.exp %112 : vector<16x16x4xf32>
    %cst_44 = arith.constant dense<0.000000e+00> : vector<16x4xf32>
    %114 = vector.multi_reduction <add>, %113, %cst_44 [1] : vector<16x16x4xf32> to vector<16x4xf32>
    %115 = vector.shape_cast %114 : vector<16x4xf32> to vector<16x1x4xf32>
    %116 = vector.broadcast %115 : vector<16x1x4xf32> to vector<16x16x4xf32>
    %117 = arith.divf %113, %116 : vector<16x16x4xf32>
    %118 = vector.shape_cast %117 : vector<16x16x4xf32> to vector<256x4xf32>
    %c0_45 = arith.constant 0 : index
    %c0_46 = arith.constant 0 : index
    %119 = vector.load %arg11[%c0_45, %c0_46] : memref<4x32xf32, #tpu.memory_space<vmem>>, vector<4x32xf32>
    %cst_47 = arith.constant dense<0.000000e+00> : vector<256x32xf32>
    %120 = tpu.matmul %118, %119, %cst_47 {dimension_numbers = #tpu.dot_dimension_numbers<[1], [0], [0], [1], [0, 0, 1, 1], [], []>} : vector<256x4xf32>, vector<4x32xf32>, vector<256x32xf32> -> vector<256x32xf32>
    %121 = vector.shape_cast %120 : vector<256x32xf32> to vector<16x16x32xf32>
    %122 = vector.shape_cast %91 : vector<16x32xf32> to vector<1x16x32xf32>
    %123 = vector.broadcast %122 : vector<1x16x32xf32> to vector<16x16x32xf32>
    %124 = arith.mulf %121, %123 : vector<16x16x32xf32>
    %cst_48 = arith.constant dense<0.000000e+00> : vector<16x32xf32>
    %125 = vector.multi_reduction <add>, %124, %cst_48 [1] : vector<16x16x32xf32> to vector<16x32xf32>
    %c0_49 = arith.constant 0 : index
    %c0_50 = arith.constant 0 : index
    %126 = vector.load %arg12[%c0_49, %c0_50] : memref<1x32xf32, #tpu.memory_space<vmem>>, vector<1x32xf32>
    %c0_51 = arith.constant 0 : index
    %c0_52 = arith.constant 0 : index
    %127 = vector.load %arg13[%c0_51, %c0_52] : memref<1x32xf32, #tpu.memory_space<vmem>>, vector<1x32xf32>
    %cst_53 = arith.constant dense<0.000000e+00> : vector<16xf32>
    %128 = vector.multi_reduction <add>, %125, %cst_53 [1] : vector<16x32xf32> to vector<16xf32>
    %129 = vector.shape_cast %128 : vector<16xf32> to vector<16x1xf32>
    %cst_54 = arith.constant 3.200000e+01 : f32
    %130 = vector.broadcast %cst_54 : f32 to vector<16x1xf32>
    %131 = arith.divf %129, %130 : vector<16x1xf32>
    %132 = vector.broadcast %131 : vector<16x1xf32> to vector<16x32xf32>
    %133 = arith.subf %125, %132 : vector<16x32xf32>
    %134 = arith.mulf %133, %133 : vector<16x32xf32>
    %cst_55 = arith.constant dense<0.000000e+00> : vector<16xf32>
    %135 = vector.multi_reduction <add>, %134, %cst_55 [1] : vector<16x32xf32> to vector<16xf32>
    %136 = vector.shape_cast %135 : vector<16xf32> to vector<16x1xf32>
    %cst_56 = arith.constant 3.200000e+01 : f32
    %137 = vector.broadcast %cst_56 : f32 to vector<16x1xf32>
    %138 = arith.divf %136, %137 : vector<16x1xf32>
    %139 = vector.broadcast %131 : vector<16x1xf32> to vector<16x32xf32>
    %140 = arith.subf %125, %139 : vector<16x32xf32>
    %cst_57 = arith.constant 9.99999974E-6 : f32
    %141 = vector.broadcast %cst_57 : f32 to vector<16x1xf32>
    %142 = arith.addf %138, %141 : vector<16x1xf32>
    %143 = math.rsqrt %142 : vector<16x1xf32>
    %144 = vector.broadcast %143 : vector<16x1xf32> to vector<16x32xf32>
    %145 = arith.mulf %140, %144 : vector<16x32xf32>
    %146 = vector.broadcast %126 : vector<1x32xf32> to vector<16x32xf32>
    %147 = arith.mulf %145, %146 : vector<16x32xf32>
    %148 = vector.broadcast %127 : vector<1x32xf32> to vector<16x32xf32>
    %149 = arith.addf %147, %148 : vector<16x32xf32>
    %cst_58 = arith.constant 1.000000e-01 : f32
    %150 = vector.broadcast %cst_58 : f32 to vector<16x32xf32>
    %151 = arith.mulf %88, %150 : vector<16x32xf32>
    %152 = arith.addf %149, %151 : vector<16x32xf32>
    %cst_59 = arith.constant 0.000000e+00 : f32
    %153 = vector.broadcast %cst_59 : f32 to vector<16x32xf32>
    %154 = arith.maximumf %152, %153 : vector<16x32xf32>
    %c0_60 = arith.constant 0 : index
    %c0_61 = arith.constant 0 : index
    %155 = vector.load %arg14[%c0_60, %c0_61] : memref<32x64xf32, #tpu.memory_space<vmem>>, vector<32x64xf32>
    %cst_62 = arith.constant dense<0.000000e+00> : vector<16x64xf32>
    %156 = tpu.matmul %154, %155, %cst_62 {dimension_numbers = #tpu.dot_dimension_numbers<[1], [0], [0], [1], [0, 0, 1, 1], [], []>} : vector<16x32xf32>, vector<32x64xf32>, vector<16x64xf32> -> vector<16x64xf32>
    %157 = vector.extract_strided_slice %156 {offsets = [0, 0], sizes = [16, 32], strides = [1, 1]} : vector<16x64xf32> to vector<16x32xf32>
    %158 = vector.extract_strided_slice %156 {offsets = [0, 32], sizes = [16, 32], strides = [1, 1]} : vector<16x64xf32> to vector<16x32xf32>
    %159 = vector.shape_cast %158 : vector<16x32xf32> to vector<16x1x32xf32>
    %160 = vector.shape_cast %157 : vector<16x32xf32> to vector<1x16x32xf32>
    %161 = vector.broadcast %159 : vector<16x1x32xf32> to vector<16x16x32xf32>
    %162 = vector.broadcast %160 : vector<1x16x32xf32> to vector<16x16x32xf32>
    %163 = arith.addf %161, %162 : vector<16x16x32xf32>
    %cst_63 = arith.constant 0.000000e+00 : f32
    %164 = vector.broadcast %cst_63 : f32 to vector<16x16x32xf32>
    %165 = arith.cmpf ogt, %163, %164 : vector<16x16x32xf32>
    %cst_64 = arith.constant 2.000000e-01 : f32
    %166 = vector.broadcast %cst_64 : f32 to vector<16x16x32xf32>
    %167 = arith.mulf %166, %163 : vector<16x16x32xf32>
    %168 = arith.select %165, %163, %167 : vector<16x16x32xi1>, vector<16x16x32xf32>
    %169 = vector.shape_cast %168 : vector<16x16x32xf32> to vector<256x32xf32>
    %c0_65 = arith.constant 0 : index
    %c0_66 = arith.constant 0 : index
    %170 = vector.load %arg15[%c0_65, %c0_66] : memref<32x1xf32, #tpu.memory_space<vmem>>, vector<32x1xf32>
    %cst_67 = arith.constant dense<0.000000e+00> : vector<256x1xf32>
    %171 = tpu.matmul %169, %170, %cst_67 {dimension_numbers = #tpu.dot_dimension_numbers<[1], [0], [0], [1], [0, 0, 1, 1], [], []>} : vector<256x32xf32>, vector<32x1xf32>, vector<256x1xf32> -> vector<256x1xf32>
    %172 = arith.addf %171, %1 : vector<256x1xf32>
    %173 = vector.shape_cast %172 : vector<256x1xf32> to vector<16x16x1xf32>
    %cst_68 = arith.constant dense<0xFF800000> : vector<16x1xf32>
    %174 = vector.multi_reduction <maximumf>, %173, %cst_68 [1] : vector<16x16x1xf32> to vector<16x1xf32>
    %175 = vector.shape_cast %174 : vector<16x1xf32> to vector<16x1x1xf32>
    %176 = vector.broadcast %175 : vector<16x1x1xf32> to vector<16x16x1xf32>
    %177 = arith.subf %173, %176 : vector<16x16x1xf32>
    %178 = math.exp %177 : vector<16x16x1xf32>
    %cst_69 = arith.constant dense<0.000000e+00> : vector<16x1xf32>
    %179 = vector.multi_reduction <add>, %178, %cst_69 [1] : vector<16x16x1xf32> to vector<16x1xf32>
    %180 = vector.shape_cast %179 : vector<16x1xf32> to vector<16x1x1xf32>
    %181 = vector.broadcast %180 : vector<16x1x1xf32> to vector<16x16x1xf32>
    %182 = arith.divf %178, %181 : vector<16x16x1xf32>
    %183 = vector.shape_cast %182 : vector<16x16x1xf32> to vector<256x1xf32>
    %c0_70 = arith.constant 0 : index
    %c0_71 = arith.constant 0 : index
    %184 = vector.load %arg16[%c0_70, %c0_71] : memref<1x32xf32, #tpu.memory_space<vmem>>, vector<1x32xf32>
    %cst_72 = arith.constant dense<0.000000e+00> : vector<256x32xf32>
    %185 = tpu.matmul %183, %184, %cst_72 {dimension_numbers = #tpu.dot_dimension_numbers<[1], [0], [0], [1], [0, 0, 1, 1], [], []>} : vector<256x1xf32>, vector<1x32xf32>, vector<256x32xf32> -> vector<256x32xf32>
    %186 = vector.shape_cast %185 : vector<256x32xf32> to vector<16x16x32xf32>
    %187 = vector.shape_cast %157 : vector<16x32xf32> to vector<1x16x32xf32>
    %188 = vector.broadcast %187 : vector<1x16x32xf32> to vector<16x16x32xf32>
    %189 = arith.mulf %186, %188 : vector<16x16x32xf32>
    %cst_73 = arith.constant dense<0.000000e+00> : vector<16x32xf32>
    %190 = vector.multi_reduction <add>, %189, %cst_73 [1] : vector<16x16x32xf32> to vector<16x32xf32>
    %c0_74 = arith.constant 0 : index
    %c0_75 = arith.constant 0 : index
    %191 = vector.load %arg17[%c0_74, %c0_75] : memref<1x32xf32, #tpu.memory_space<vmem>>, vector<1x32xf32>
    %c0_76 = arith.constant 0 : index
    %c0_77 = arith.constant 0 : index
    %192 = vector.load %arg18[%c0_76, %c0_77] : memref<1x32xf32, #tpu.memory_space<vmem>>, vector<1x32xf32>
    %cst_78 = arith.constant dense<0.000000e+00> : vector<16xf32>
    %193 = vector.multi_reduction <add>, %190, %cst_78 [1] : vector<16x32xf32> to vector<16xf32>
    %194 = vector.shape_cast %193 : vector<16xf32> to vector<16x1xf32>
    %cst_79 = arith.constant 3.200000e+01 : f32
    %195 = vector.broadcast %cst_79 : f32 to vector<16x1xf32>
    %196 = arith.divf %194, %195 : vector<16x1xf32>
    %197 = vector.broadcast %196 : vector<16x1xf32> to vector<16x32xf32>
    %198 = arith.subf %190, %197 : vector<16x32xf32>
    %199 = arith.mulf %198, %198 : vector<16x32xf32>
    %cst_80 = arith.constant dense<0.000000e+00> : vector<16xf32>
    %200 = vector.multi_reduction <add>, %199, %cst_80 [1] : vector<16x32xf32> to vector<16xf32>
    %201 = vector.shape_cast %200 : vector<16xf32> to vector<16x1xf32>
    %cst_81 = arith.constant 3.200000e+01 : f32
    %202 = vector.broadcast %cst_81 : f32 to vector<16x1xf32>
    %203 = arith.divf %201, %202 : vector<16x1xf32>
    %204 = vector.broadcast %196 : vector<16x1xf32> to vector<16x32xf32>
    %205 = arith.subf %190, %204 : vector<16x32xf32>
    %cst_82 = arith.constant 9.99999974E-6 : f32
    %206 = vector.broadcast %cst_82 : f32 to vector<16x1xf32>
    %207 = arith.addf %203, %206 : vector<16x1xf32>
    %208 = math.rsqrt %207 : vector<16x1xf32>
    %209 = vector.broadcast %208 : vector<16x1xf32> to vector<16x32xf32>
    %210 = arith.mulf %205, %209 : vector<16x32xf32>
    %211 = vector.broadcast %191 : vector<1x32xf32> to vector<16x32xf32>
    %212 = arith.mulf %210, %211 : vector<16x32xf32>
    %213 = vector.broadcast %192 : vector<1x32xf32> to vector<16x32xf32>
    %214 = arith.addf %212, %213 : vector<16x32xf32>
    %cst_83 = arith.constant 1.000000e-01 : f32
    %215 = vector.broadcast %cst_83 : f32 to vector<16x32xf32>
    %216 = arith.mulf %154, %215 : vector<16x32xf32>
    %217 = arith.addf %214, %216 : vector<16x32xf32>
    %c0_84 = arith.constant 0 : index
    %c0_85 = arith.constant 0 : index
    %218 = vector.load %arg19[%c0_84, %c0_85] : memref<32x32xf32, #tpu.memory_space<vmem>>, vector<32x32xf32>
    %cst_86 = arith.constant dense<0.000000e+00> : vector<16x32xf32>
    %219 = tpu.matmul %217, %218, %cst_86 {dimension_numbers = #tpu.dot_dimension_numbers<[1], [0], [0], [1], [0, 0, 1, 1], [], []>} : vector<16x32xf32>, vector<32x32xf32>, vector<16x32xf32> -> vector<16x32xf32>
    %c0_87 = arith.constant 0 : index
    %c0_88 = arith.constant 0 : index
    %220 = vector.load %arg20[%c0_87, %c0_88] : memref<1x32xf32, #tpu.memory_space<vmem>>, vector<1x32xf32>
    %221 = vector.broadcast %220 : vector<1x32xf32> to vector<16x32xf32>
    %222 = arith.addf %219, %221 : vector<16x32xf32>
    %cst_89 = arith.constant 0.000000e+00 : f32
    %223 = vector.broadcast %cst_89 : f32 to vector<16x32xf32>
    %224 = arith.maximumf %222, %223 : vector<16x32xf32>
    %c0_90 = arith.constant 0 : index
    %c0_91 = arith.constant 0 : index
    %225 = vector.load %arg21[%c0_90, %c0_91] : memref<1x32xf32, #tpu.memory_space<vmem>>, vector<1x32xf32>
    %226 = vector.broadcast %225 : vector<1x32xf32> to vector<16x32xf32>
    %227 = arith.mulf %224, %226 : vector<16x32xf32>
    %228 = vector.extract_strided_slice %227 {offsets = [0, 0], sizes = [16, 16], strides = [1, 1]} : vector<16x32xf32> to vector<16x16xf32>
    %cst_92 = arith.constant dense<0.000000e+00> : vector<16xf32>
    %229 = vector.multi_reduction <add>, %228, %cst_92 [1] : vector<16x16xf32> to vector<16xf32>
    %230 = vector.shape_cast %229 : vector<16xf32> to vector<16x1xf32>
    %231 = vector.extract_strided_slice %227 {offsets = [0, 16], sizes = [16, 16], strides = [1, 1]} : vector<16x32xf32> to vector<16x16xf32>
    %cst_93 = arith.constant dense<0.000000e+00> : vector<16xf32>
    %232 = vector.multi_reduction <add>, %231, %cst_93 [1] : vector<16x16xf32> to vector<16xf32>
    %233 = vector.shape_cast %232 : vector<16xf32> to vector<16x1xf32>
    %234 = tpu.concatenate %230, %233 in 1 : vector<16x1xf32>, vector<16x1xf32> -> vector<16x2xf32>
    %c0_94 = arith.constant 0 : index
    %c0_95 = arith.constant 0 : index
    %235 = vector.load %arg22[%c0_94, %c0_95] : memref<1x2xf32, #tpu.memory_space<vmem>>, vector<1x2xf32>
    %236 = vector.broadcast %235 : vector<1x2xf32> to vector<16x2xf32>
    %237 = arith.addf %234, %236 : vector<16x2xf32>
    %c0_96 = arith.constant 0 : index
    %c0_97 = arith.constant 0 : index
    %238 = vector.load %arg23[%c0_96, %c0_97] : memref<16x2xf32, #tpu.memory_space<vmem>>, vector<16x2xf32>
    tpu.vector_store %arg23[%c0_96, %c0_97], %237 {strides = array<i32>} : memref<16x2xf32, #tpu.memory_space<vmem>>, vector<16x2xf32>,
    return
  }
}

</mosaic_0001>

<llo_original>
// kernel: tpu_custom_call.1
$region0: #{tpu_custom_call.1}
  #allocation0 [shape = 'u32[]', space=smem, size = 0x4, offset = 0x4, fixed_abs, tag = 'smem constant byte address 0x4 - core index']
  #allocation1 [shape = 'u32[72,128]{1,0:T(1,128)}', space=vmem, size = 0x9000, scoped, tag = 'internal scratch']
  %s0 = inlined_call_operand.vmem [shape: f32[16,8], index: 0, kind: input, shape index: {}]
  %s1 = inlined_call_operand.vmem [shape: f32[256,1], index: 1, kind: input, shape index: {}]
  %s2 = inlined_call_operand.vmem [shape: f32[1,8], index: 2, kind: input, shape index: {}]
  %s3 = inlined_call_operand.vmem [shape: f32[1,8], index: 3, kind: input, shape index: {}]
  %s4 = inlined_call_operand.vmem [shape: f32[8,64], index: 4, kind: input, shape index: {}]
  %s5 = inlined_call_operand.vmem [shape: f32[32,4], index: 5, kind: input, shape index: {}]
  %s6 = inlined_call_operand.vmem [shape: f32[4,32], index: 6, kind: input, shape index: {}]
  %s7 = inlined_call_operand.vmem [shape: f32[1,32], index: 7, kind: input, shape index: {}]
  %s8 = inlined_call_operand.vmem [shape: f32[1,32], index: 8, kind: input, shape index: {}]
  %s9 = inlined_call_operand.vmem [shape: f32[32,64], index: 9, kind: input, shape index: {}]
  %s10 = inlined_call_operand.vmem [shape: f32[32,4], index: 10, kind: input, shape index: {}]
  %s11 = inlined_call_operand.vmem [shape: f32[4,32], index: 11, kind: input, shape index: {}]
  %s12 = inlined_call_operand.vmem [shape: f32[1,32], index: 12, kind: input, shape index: {}]
  %s13 = inlined_call_operand.vmem [shape: f32[1,32], index: 13, kind: input, shape index: {}]
  %s14 = inlined_call_operand.vmem [shape: f32[32,64], index: 14, kind: input, shape index: {}]
  %s15 = inlined_call_operand.vmem [shape: f32[32,1], index: 15, kind: input, shape index: {}]
  %s16 = inlined_call_operand.vmem [shape: f32[1,32], index: 16, kind: input, shape index: {}]
  %s17 = inlined_call_operand.vmem [shape: f32[1,32], index: 17, kind: input, shape index: {}]
  %s18 = inlined_call_operand.vmem [shape: f32[1,32], index: 18, kind: input, shape index: {}]
  %s19 = inlined_call_operand.vmem [shape: f32[32,32], index: 19, kind: input, shape index: {}]
  %s20 = inlined_call_operand.vmem [shape: f32[1,32], index: 20, kind: input, shape index: {}]
  %s21 = inlined_call_operand.vmem [shape: f32[1,32], index: 21, kind: input, shape index: {}]
  %s22 = inlined_call_operand.vmem [shape: f32[1,2], index: 22, kind: input, shape index: {}]
  %s23 = inlined_call_operand.vmem [shape: f32[16,2], index: 23, kind: output, shape index: {}]
  %s24 = sld [smem:[#allocation0]]
  $region102: #{tpu_custom_call.1} parent=0
    _
  %s26 = ssub.s32 1, %s24
  %s27 = scalar_select 0, %s26, %s24
  // Predicated region
  $region2: #{tpu_custom_call.1} parent=0 // pred_check
    _
  $region3: #{tpu_custom_call.1} parent=0 // pred_check_branch
    %29 = sbr.rel (0) target = $region5
  $region4: #{tpu_custom_call.1} parent=0 // pred_region
    _
  $region5: #{tpu_custom_call.1} parent=0 // pred_fallthru
    _
  // Predicated region
  $region6: #{tpu_custom_call.1} parent=0 // pred_check
    _
  $region7: #{tpu_custom_call.1} parent=0 // pred_check_branch
    %31 = sbr.rel (0) target = $region9
  $region8: #{tpu_custom_call.1} parent=0 // pred_region
    _
  $region9: #{tpu_custom_call.1} parent=0 // pred_fallthru
    _
  // Predicated region
  $region10: #{tpu_custom_call.1} parent=0 // pred_check
    _
  $region11: #{tpu_custom_call.1} parent=0 // pred_check_branch
    %33 = sbr.rel (0) target = $region13
  $region12: #{tpu_custom_call.1} parent=0 // pred_region
    _
  $region13: #{tpu_custom_call.1} parent=0 // pred_fallthru
    _
  // Predicated region
  $region14: #{tpu_custom_call.1} parent=0 // pred_check
    _
  $region15: #{tpu_custom_call.1} parent=0 // pred_check_branch
    %35 = sbr.rel (0) target = $region17
  $region16: #{tpu_custom_call.1} parent=0 // pred_region
    _
  $region17: #{tpu_custom_call.1} parent=0 // pred_fallthru
    _
  // Predicated region
  $region18: #{tpu_custom_call.1} parent=0 // pred_check
    _
  $region19: #{tpu_custom_call.1} parent=0 // pred_check_branch
    %37 = sbr.rel (0) target = $region21
  $region20: #{tpu_custom_call.1} parent=0 // pred_region
    _
  $region21: #{tpu_custom_call.1} parent=0 // pred_fallthru
    _
  // Predicated region
  $region22: #{tpu_custom_call.1} parent=0 // pred_check
    _
  $region23: #{tpu_custom_call.1} parent=0 // pred_check_branch
    %39 = sbr.rel (0) target = $region25
  $region24: #{tpu_custom_call.1} parent=0 // pred_region
    _
  $region25: #{tpu_custom_call.1} parent=0 // pred_fallthru
    _
  // Predicated region
  $region26: #{tpu_custom_call.1} parent=0 // pred_check
    _
  $region27: #{tpu_custom_call.1} parent=0 // pred_check_branch
    %41 = sbr.rel (0) target = $region29
  $region28: #{tpu_custom_call.1} parent=0 // pred_region
    _
  $region29: #{tpu_custom_call.1} parent=0 // pred_fallthru
    _
  // Predicated region
  $region30: #{tpu_custom_call.1} parent=0 // pred_check
    _
  $region31: #{tpu_custom_call.1} parent=0 // pred_check_branch
    %43 = sbr.rel (0) target = $region33
  $region32: #{tpu_custom_call.1} parent=0 // pred_region
    _
  $region33: #{tpu_custom_call.1} parent=0 // pred_fallthru
    _
  // Predicated region
  $region34: #{tpu_custom_call.1} parent=0 // pred_check
    _
  $region35: #{tpu_custom_call.1} parent=0 // pred_check_branch
    %45 = sbr.rel (0) target = $region37
  $region36: #{tpu_custom_call.1} parent=0 // pred_region
    _
  $region37: #{tpu_custom_call.1} parent=0 // pred_fallthru
    _
  // Predicated region
  $region38: #{tpu_custom_call.1} parent=0 // pred_check
    _
  $region39: #{tpu_custom_call.1} parent=0 // pred_check_branch
    %47 = sbr.rel (0) target = $region41
  $region40: #{tpu_custom_call.1} parent=0 // pred_region
    _
  $region41: #{tpu_custom_call.1} parent=0 // pred_fallthru
    _
  // Predicated region
  $region42: #{tpu_custom_call.1} parent=0 // pred_check
    _
  $region43: #{tpu_custom_call.1} parent=0 // pred_check_branch
    %49 = sbr.rel (0) target = $region45
  $region44: #{tpu_custom_call.1} parent=0 // pred_region
    _
  $region45: #{tpu_custom_call.1} parent=0 // pred_fallthru
    _
  // Predicated region
  $region46: #{tpu_custom_call.1} parent=0 // pred_check
    _
  $region47: #{tpu_custom_call.1} parent=0 // pred_check_branch
    %51 = sbr.rel (0) target = $region49
  $region48: #{tpu_custom_call.1} parent=0 // pred_region
    _
  $region49: #{tpu_custom_call.1} parent=0 // pred_fallthru
    _
  // Predicated region
  $region50: #{tpu_custom_call.1} parent=0 // pred_check
    _
  $region51: #{tpu_custom_call.1} parent=0 // pred_check_branch
    %53 = sbr.rel (0) target = $region53
  $region52: #{tpu_custom_call.1} parent=0 // pred_region
    _
  $region53: #{tpu_custom_call.1} parent=0 // pred_fallthru
    _
  // Predicated region
  $region54: #{tpu_custom_call.1} parent=0 // pred_check
    _
  $region55: #{tpu_custom_call.1} parent=0 // pred_check_branch
    %55 = sbr.rel (0) target = $region57
  $region56: #{tpu_custom_call.1} parent=0 // pred_region
    _
  $region57: #{tpu_custom_call.1} parent=0 // pred_fallthru
    _
  // Predicated region
  $region58: #{tpu_custom_call.1} parent=0 // pred_check
    _
  $region59: #{tpu_custom_call.1} parent=0 // pred_check_branch
    %57 = sbr.rel (0) target = $region61
  $region60: #{tpu_custom_call.1} parent=0 // pred_region
    _
  $region61: #{tpu_custom_call.1} parent=0 // pred_fallthru
    _
  // Predicated region
  $region62: #{tpu_custom_call.1} parent=0 // pred_check
    _
  $region63: #{tpu_custom_call.1} parent=0 // pred_check_branch
    %59 = sbr.rel (0) target = $region65
  $region64: #{tpu_custom_call.1} parent=0 // pred_region
    _
  $region65: #{tpu_custom_call.1} parent=0 // pred_fallthru
    _
  // Predicated region
  $region66: #{tpu_custom_call.1} parent=0 // pred_check
    _
  $region67: #{tpu_custom_call.1} parent=0 // pred_check_branch
    %61 = sbr.rel (0) target = $region69
  $region68: #{tpu_custom_call.1} parent=0 // pred_region
    _
  $region69: #{tpu_custom_call.1} parent=0 // pred_fallthru
    _
  // Predicated region
  $region70: #{tpu_custom_call.1} parent=0 // pred_check
    _
  $region71: #{tpu_custom_call.1} parent=0 // pred_check_branch
    %63 = sbr.rel (0) target = $region73
  $region72: #{tpu_custom_call.1} parent=0 // pred_region
    _
  $region73: #{tpu_custom_call.1} parent=0 // pred_fallthru
    _
  // Predicated region
  $region74: #{tpu_custom_call.1} parent=0 // pred_check
    _
  $region75: #{tpu_custom_call.1} parent=0 // pred_check_branch
    %65 = sbr.rel (0) target = $region77
  $region76: #{tpu_custom_call.1} parent=0 // pred_region
    _
  $region77: #{tpu_custom_call.1} parent=0 // pred_fallthru
    _
  // Predicated region
  $region78: #{tpu_custom_call.1} parent=0 // pred_check
    _
  $region79: #{tpu_custom_call.1} parent=0 // pred_check_branch
    %67 = sbr.rel (0) target = $region81
  $region80: #{tpu_custom_call.1} parent=0 // pred_region
    _
  $region81: #{tpu_custom_call.1} parent=0 // pred_fallthru
    _
  // Predicated region
  $region82: #{tpu_custom_call.1} parent=0 // pred_check
    _
  $region83: #{tpu_custom_call.1} parent=0 // pred_check_branch
    %69 = sbr.rel (0) target = $region85
  $region84: #{tpu_custom_call.1} parent=0 // pred_region
    _
  $region85: #{tpu_custom_call.1} parent=0 // pred_fallthru
    _
  // Predicated region
  $region86: #{tpu_custom_call.1} parent=0 // pred_check
    _
  $region87: #{tpu_custom_call.1} parent=0 // pred_check_branch
    %71 = sbr.rel (0) target = $region89
  $region88: #{tpu_custom_call.1} parent=0 // pred_region
    _
  $region89: #{tpu_custom_call.1} parent=0 // pred_fallthru
    _
  // Predicated region
  $region90: #{tpu_custom_call.1} parent=0 // pred_check
    _
  $region91: #{tpu_custom_call.1} parent=0 // pred_check_branch
    %73 = sbr.rel (0) target = $region93
  $region92: #{tpu_custom_call.1} parent=0 // pred_region
    _
  $region93: #{tpu_custom_call.1} parent=0 // pred_fallthru
    _
  %v74 = vld [vmem:[%s0] sm:$0xff]
  %v75 = vld [vmem:[%s0 + $0x8] sm:$0xff]
  %v76 = vld [vmem:[%s1] sm:$0xff]
  %v77 = vld [vmem:[%s1 + $0x8] sm:$0xff]
  %v78 = vld [vmem:[%s1 + $0x10] sm:$0xff]
  %v79 = vld [vmem:[%s1 + $0x18] sm:$0xff]
  %v80 = vld [vmem:[%s1 + $0x20] sm:$0xff]
  %v81 = vld [vmem:[%s1 + $0x28] sm:$0xff]
  %v82 = vld [vmem:[%s1 + $0x30] sm:$0xff]
  %v83 = vld [vmem:[%s1 + $0x38] sm:$0xff]
  %v84 = vld [vmem:[%s1 + $0x40] sm:$0xff]
  %v85 = vld [vmem:[%s1 + $0x48] sm:$0xff]
  %v86 = vld [vmem:[%s1 + $0x50] sm:$0xff]
  %v87 = vld [vmem:[%s1 + $0x58] sm:$0xff]
  %v88 = vld [vmem:[%s1 + $0x60] sm:$0xff]
  %v89 = vld [vmem:[%s1 + $0x68] sm:$0xff]
  %v90 = vld [vmem:[%s1 + $0x70] sm:$0xff]
  %v91 = vld [vmem:[%s1 + $0x78] sm:$0xff]
  %v92 = vld [vmem:[%s1 + $0x80] sm:$0xff]
  %v93 = vld [vmem:[%s1 + $0x88] sm:$0xff]
  %v94 = vld [vmem:[%s1 + $0x90] sm:$0xff]
  %v95 = vld [vmem:[%s1 + $0x98] sm:$0xff]
  %v96 = vld [vmem:[%s1 + $0xa0] sm:$0xff]
  %v97 = vld [vmem:[%s1 + $0xa8] sm:$0xff]
  %v98 = vld [vmem:[%s1 + $0xb0] sm:$0xff]
  %v99 = vld [vmem:[%s1 + $0xb8] sm:$0xff]
  %v100 = vld [vmem:[%s1 + $0xc0] sm:$0xff]
  %v101 = vld [vmem:[%s1 + $0xc8] sm:$0xff]
  %v102 = vld [vmem:[%s1 + $0xd0] sm:$0xff]
  %v103 = vld [vmem:[%s1 + $0xd8] sm:$0xff]
  %v104 = vld [vmem:[%s1 + $0xe0] sm:$0xff]
  %v105 = vld [vmem:[%s1 + $0xe8] sm:$0xff]
  %v106 = vld [vmem:[%s1 + $0xf0] sm:$0xff]
  %v107 = vld [vmem:[%s1 + $0xf8] sm:$0xff]
  %v108 = vld [vmem:[%s2] sm:$0x1]
  %v109 = vld [vmem:[%s3] sm:$0x1]
  %vm110 = vcmask 64512
  %v111 = vsel %vm110, %v74, 0.0
  %112 = vadd.xlane.f32.xlu0 %v111
  %v113 = vpop.xlane.xlu0 %112
  %v114 = vsel %vm110, %v75, 0.0
  %115 = vadd.xlane.f32.xlu0 %v114
  %v116 = vpop.xlane.xlu0 %115
  %v117 = vrcp.pop 8.0
  %v118 = vmul.f32 8.0, %v117
  %v119 = vsub.f32 1.0, %v118
  %v120 = vmul.f32 %v117, %v119
  %v121 = vadd.f32 %v117, %v120
  %vm122 = vweird.f32 %v117
  %v123 = vsel %vm122, %v117, %v121
  %v124 = vmul.f32 %v113, %v123
  %v125 = vmul.f32 %v116, %v123
  %v126 = vsub.f32 %v74, %v124
  %v127 = vsub.f32 %v75, %v125
  %v128 = vmul.f32 %v126, %v126
  %v129 = vmul.f32 %v127, %v127
  %v130 = vsel %vm110, %v128, 0.0
  %131 = vadd.xlane.f32.xlu0 %v130
  %v132 = vpop.xlane.xlu0 %131
  %v133 = vsel %vm110, %v129, 0.0
  %134 = vadd.xlane.f32.xlu0 %v133
  %v135 = vpop.xlane.xlu0 %134
  %v136 = vmul.f32 %v132, %v123
  %v137 = vmul.f32 %v135, %v123
  %v138 = vadd.f32 %v136, 1e-05
  %v139 = vadd.f32 %v137, 1e-05
  %v140 = vrsqrt.pop %v138
  %v141 = vmul.f32 %v140, %v138
  %v142 = vmul.f32 %v141, %v140
  %v143 = vmul.f32 0.5, %v142
  %v144 = vsub.f32 1.5, %v143
  %v145 = vmul.f32 %v140, %v144
  %vm146 = vweird.f32 %v138
  %vm147 = vweird.f32 %v140
  %vm148 = vmor %vm146, %vm147
  %v149 = vsel %vm148, %v140, %v145
  %v150 = vrsqrt.pop %v139
  %v151 = vmul.f32 %v150, %v139
  %v152 = vmul.f32 %v151, %v150
  %v153 = vmul.f32 0.5, %v152
  %v154 = vsub.f32 1.5, %v153
  %v155 = vmul.f32 %v150, %v154
  %vm156 = vweird.f32 %v139
  %vm157 = vweird.f32 %v150
  %vm158 = vmor %vm156, %vm157
  %v159 = vsel %vm158, %v150, %v155
  %v160 = vmul.f32 %v126, %v149
  %v161 = vmul.f32 %v127, %v159
  %v163 = vperm.slane %v108, 0
  %v165 = vmul.f32 %v160, %v163
  %v166 = vmul.f32 %v161, %v163
  %v168 = vperm.slane %v109, 0
  %v170 = vadd.f32 %v165, %v168
  %v171 = vadd.f32 %v166, %v168
  %v172 = vld [vmem:[%s4] sm:$0xff]
  %v174 = vsel %vm110, %v170, 0
  %v177 = vsel %vm110, %v171, 0
  %179 = vmatpush.msra.mxu0 0.0
  %180 = vmatpush.msra.mxu0 0.0
  %181 = vmatpush.msra.mxu0 0.0
  %182 = vmatpush.msra.mxu0 0.0
  %183 = vmatpush.msra.mxu0 0.0
  %184 = vmatpush.msra.mxu0 0.0
  %185 = vmatpush.msra.mxu0 0.0
  %186 = vmatpush.msra.mxu0 0.0
  %187 = vmatpush.msra.mxu0 0.0
  %188 = vmatpush.msra.mxu0 0.0
  %189 = vmatpush.msra.mxu0 0.0
  %190 = vmatpush.msra.mxu0 0.0
  %191 = vmatpush.msra.mxu0 0.0
  %192 = vmatpush.msra.mxu0 0.0
  %193 = vmatpush.msra.mxu0 0.0
  %194 = vmatpush.msra.mxu0 %v172
  %195 = vmatmul.f32.gmra.mxu0 %v174
  %v196 = vpop.f32.mrf.mxu0
  %v197 = vadd.f32 0.0, %v196
  %198 = vmatmul.f32.gmra.mxu0 %v177
  %v199 = vpop.f32.mrf.mxu0
  %v200 = vadd.f32 0.0, %v199
  %201 = vdwg.mxu0
  %v204 = vrot.slane %v197, 1
  %v205 = vrot.slane %v197, 2
  %v206 = vrot.slane %v197, 3
  %v207 = vrot.slane %v197, 4
  %v208 = vrot.slane %v197, 5
  %v209 = vrot.slane %v197, 6
  %v210 = vrot.slane %v197, 7
  %v211 = vrot.slane %v200, 1
  %v212 = vrot.slane %v200, 2
  %v213 = vrot.slane %v200, 3
  %v214 = vrot.slane %v200, 4
  %v215 = vrot.slane %v200, 5
  %v216 = vrot.slane %v200, 6
  %v217 = vrot.slane %v200, 7
  %v218 = vperm.slane %v197, 0
  %v219 = vperm.slane %v204, 0
  %v220 = vperm.slane %v205, 0
  %v221 = vperm.slane %v206, 0
  %v222 = vperm.slane %v207, 0
  %v223 = vperm.slane %v208, 0
  %v224 = vperm.slane %v209, 0
  %v225 = vperm.slane %v210, 0
  %v226 = vperm.slane %v200, 0
  %v227 = vperm.slane %v211, 0
  %v228 = vperm.slane %v212, 0
  %v229 = vperm.slane %v213, 0
  %v230 = vperm.slane %v214, 0
  %v231 = vperm.slane %v215, 0
  %v232 = vperm.slane %v216, 0
  %v233 = vperm.slane %v217, 0
  %250 = vrot.lane.b32.xlu0 %v197, 32
  %v251 = vpop.permute.xlu0 %250
  %252 = vrot.lane.b32.xlu0 %v200, 32
  %v253 = vpop.permute.xlu0 %252
  %v256 = vadd.f32 %v218, %v251
  %v257 = vadd.f32 %v218, %v253
  %v258 = vadd.f32 %v219, %v251
  %v259 = vadd.f32 %v219, %v253
  %v260 = vadd.f32 %v220, %v251
  %v261 = vadd.f32 %v220, %v253
  %v262 = vadd.f32 %v221, %v251
  %v263 = vadd.f32 %v221, %v253
  %v264 = vadd.f32 %v222, %v251
  %v265 = vadd.f32 %v222, %v253
  %v266 = vadd.f32 %v223, %v251
  %v267 = vadd.f32 %v223, %v253
  %v268 = vadd.f32 %v224, %v251
  %v269 = vadd.f32 %v224, %v253
  %v270 = vadd.f32 %v225, %v251
  %v271 = vadd.f32 %v225, %v253
  %v272 = vadd.f32 %v226, %v251
  %v273 = vadd.f32 %v226, %v253
  %v274 = vadd.f32 %v227, %v251
  %v275 = vadd.f32 %v227, %v253
  %v276 = vadd.f32 %v228, %v251
  %v277 = vadd.f32 %v228, %v253
  %v278 = vadd.f32 %v229, %v251
  %v279 = vadd.f32 %v229, %v253
  %v280 = vadd.f32 %v230, %v251
  %v281 = vadd.f32 %v230, %v253
  %v282 = vadd.f32 %v231, %v251
  %v283 = vadd.f32 %v231, %v253
  %v284 = vadd.f32 %v232, %v251
  %v285 = vadd.f32 %v232, %v253
  %v286 = vadd.f32 %v233, %v251
  %v287 = vadd.f32 %v233, %v253
  %vm288 = vcmp.gt.f32.partialorder %v256, 0.0
  %vm289 = vcmp.gt.f32.partialorder %v257, 0.0
  %vm290 = vcmp.gt.f32.partialorder %v258, 0.0
  %vm291 = vcmp.gt.f32.partialorder %v259, 0.0
  %vm292 = vcmp.gt.f32.partialorder %v260, 0.0
  %vm293 = vcmp.gt.f32.partialorder %v261, 0.0
  %vm294 = vcmp.gt.f32.partialorder %v262, 0.0
  %vm295 = vcmp.gt.f32.partialorder %v263, 0.0
  %vm296 = vcmp.gt.f32.partialorder %v264, 0.0
  %vm297 = vcmp.gt.f32.partialorder %v265, 0.0
  %vm298 = vcmp.gt.f32.partialorder %v266, 0.0
  %vm299 = vcmp.gt.f32.partialorder %v267, 0.0
  %vm300 = vcmp.gt.f32.partialorder %v268, 0.0
  %vm301 = vcmp.gt.f32.partialorder %v269, 0.0
  %vm302 = vcmp.gt.f32.partialorder %v270, 0.0
  %vm303 = vcmp.gt.f32.partialorder %v271, 0.0
  %vm304 = vcmp.gt.f32.partialorder %v272, 0.0
  %vm305 = vcmp.gt.f32.partialorder %v273, 0.0
  %vm306 = vcmp.gt.f32.partialorder %v274, 0.0
  %vm307 = vcmp.gt.f32.partialorder %v275, 0.0
  %vm308 = vcmp.gt.f32.partialorder %v276, 0.0
  %vm309 = vcmp.gt.f32.partialorder %v277, 0.0
  %vm310 = vcmp.gt.f32.partialorder %v278, 0.0
  %vm311 = vcmp.gt.f32.partialorder %v279, 0.0
  %vm312 = vcmp.gt.f32.partialorder %v280, 0.0
  %vm313 = vcmp.gt.f32.partialorder %v281, 0.0
  %vm314 = vcmp.gt.f32.partialorder %v282, 0.0
  %vm315 = vcmp.gt.f32.partialorder %v283, 0.0
  %vm316 = vcmp.gt.f32.partialorder %v284, 0.0
  %vm317 = vcmp.gt.f32.partialorder %v285, 0.0
  %vm318 = vcmp.gt.f32.partialorder %v286, 0.0
  %vm319 = vcmp.gt.f32.partialorder %v287, 0.0
  %v320 = vmul.f32 %v256, 0.2
  %v321 = vmul.f32 %v257, 0.2
  %v322 = vmul.f32 %v258, 0.2
  %v323 = vmul.f32 %v259, 0.2
  %v324 = vmul.f32 %v260, 0.2
  %v325 = vmul.f32 %v261, 0.2
  %v326 = vmul.f32 %v262, 0.2
  %v327 = vmul.f32 %v263, 0.2
  %v328 = vmul.f32 %v264, 0.2
  %v329 = vmul.f32 %v265, 0.2
  %v330 = vmul.f32 %v266, 0.2
  %v331 = vmul.f32 %v267, 0.2
  %v332 = vmul.f32 %v268, 0.2
  %v333 = vmul.f32 %v269, 0.2
  %v334 = vmul.f32 %v270, 0.2
  %v335 = vmul.f32 %v271, 0.2
  %v336 = vmul.f32 %v272, 0.2
  %v337 = vmul.f32 %v273, 0.2
  %v338 = vmul.f32 %v274, 0.2
  %v339 = vmul.f32 %v275, 0.2
  %v340 = vmul.f32 %v276, 0.2
  %v341 = vmul.f32 %v277, 0.2
  %v342 = vmul.f32 %v278, 0.2
  %v343 = vmul.f32 %v279, 0.2
  %v344 = vmul.f32 %v280, 0.2
  %v345 = vmul.f32 %v281, 0.2
  %v346 = vmul.f32 %v282, 0.2
  %v347 = vmul.f32 %v283, 0.2
  %v348 = vmul.f32 %v284, 0.2
  %v349 = vmul.f32 %v285, 0.2
  %v350 = vmul.f32 %v286, 0.2
  %v351 = vmul.f32 %v287, 0.2
  %v352 = vsel %vm288, %v256, %v320
  %v353 = vsel %vm289, %v257, %v321
  %v354 = vsel %vm290, %v258, %v322
  %v355 = vsel %vm291, %v259, %v323
  %v356 = vsel %vm292, %v260, %v324
  %v357 = vsel %vm293, %v261, %v325
  %v358 = vsel %vm294, %v262, %v326
  %v359 = vsel %vm295, %v263, %v327
  %v360 = vsel %vm296, %v264, %v328
  %v361 = vsel %vm297, %v265, %v329
  %v362 = vsel %vm298, %v266, %v330
  %v363 = vsel %vm299, %v267, %v331
  %v364 = vsel %vm300, %v268, %v332
  %v365 = vsel %vm301, %v269, %v333
  %v366 = vsel %vm302, %v270, %v334
  %v367 = vsel %vm303, %v271, %v335
  %v368 = vsel %vm304, %v272, %v336
  %v369 = vsel %vm305, %v273, %v337
  %v370 = vsel %vm306, %v274, %v338
  %v371 = vsel %vm307, %v275, %v339
  %v372 = vsel %vm308, %v276, %v340
  %v373 = vsel %vm309, %v277, %v341
  %v374 = vsel %vm310, %v278, %v342
  %v375 = vsel %vm311, %v279, %v343
  %v376 = vsel %vm312, %v280, %v344
  %v377 = vsel %vm313, %v281, %v345
  %v378 = vsel %vm314, %v282, %v346
  %v379 = vsel %vm315, %v283, %v347
  %v380 = vsel %vm316, %v284, %v348
  %v381 = vsel %vm317, %v285, %v349
  %v382 = vsel %vm318, %v286, %v350
  %v383 = vsel %vm319, %v287, %v351
  %v384 = vld [vmem:[%s5] sm:$0xff]
  %v385 = vld [vmem:[%s5 + $0x8] sm:$0xff]
  %v386 = vld [vmem:[%s5 + $0x10] sm:$0xff]
  %v387 = vld [vmem:[%s5 + $0x18] sm:$0xff]
  %389 = vset.pattern.permute.xlu0 0
  %390 = vperm.xlu0 %389, %v76
  %v391 = vpop.permute.xlu0 %390
  %394 = vset.pattern.permute.xlu0 0
  %395 = vperm.xlu0 %394, %v77
  %v396 = vpop.permute.xlu0 %395
  %399 = vset.pattern.permute.xlu0 0
  %400 = vperm.xlu0 %399, %v78
  %v401 = vpop.permute.xlu0 %400
  %404 = vset.pattern.permute.xlu0 0
  %405 = vperm.xlu0 %404, %v79
  %v406 = vpop.permute.xlu0 %405
  %409 = vset.pattern.permute.xlu0 0
  %410 = vperm.xlu0 %409, %v80
  %v411 = vpop.permute.xlu0 %410
  %414 = vset.pattern.permute.xlu0 0
  %415 = vperm.xlu0 %414, %v81
  %v416 = vpop.permute.xlu0 %415
  %419 = vset.pattern.permute.xlu0 0
  %420 = vperm.xlu0 %419, %v82
  %v421 = vpop.permute.xlu0 %420
  %424 = vset.pattern.permute.xlu0 0
  %425 = vperm.xlu0 %424, %v83
  %v426 = vpop.permute.xlu0 %425
  %429 = vset.pattern.permute.xlu0 0
  %430 = vperm.xlu0 %429, %v84
  %v431 = vpop.permute.xlu0 %430
  %434 = vset.pattern.permute.xlu0 0
  %435 = vperm.xlu0 %434, %v85
  %v436 = vpop.permute.xlu0 %435
  %439 = vset.pattern.permute.xlu0 0
  %440 = vperm.xlu0 %439, %v86
  %v441 = vpop.permute.xlu0 %440
  %444 = vset.pattern.permute.xlu0 0
  %445 = vperm.xlu0 %444, %v87
  %v446 = vpop.permute.xlu0 %445
  %449 = vset.pattern.permute.xlu0 0
  %450 = vperm.xlu0 %449, %v88
  %v451 = vpop.permute.xlu0 %450
  %454 = vset.pattern.permute.xlu0 0
  %455 = vperm.xlu0 %454, %v89
  %v456 = vpop.permute.xlu0 %455
  %459 = vset.pattern.permute.xlu0 0
  %460 = vperm.xlu0 %459, %v90
  %v461 = vpop.permute.xlu0 %460
  %464 = vset.pattern.permute.xlu0 0
  %465 = vperm.xlu0 %464, %v91
  %v466 = vpop.permute.xlu0 %465
  %469 = vset.pattern.permute.xlu0 0
  %470 = vperm.xlu0 %469, %v92
  %v471 = vpop.permute.xlu0 %470
  %474 = vset.pattern.permute.xlu0 0
  %475 = vperm.xlu0 %474, %v93
  %v476 = vpop.permute.xlu0 %475
  %479 = vset.pattern.permute.xlu0 0
  %480 = vperm.xlu0 %479, %v94
  %v481 = vpop.permute.xlu0 %480
  %484 = vset.pattern.permute.xlu0 0
  %485 = vperm.xlu0 %484, %v95
  %v486 = vpop.permute.xlu0 %485
  %489 = vset.pattern.permute.xlu0 0
  %490 = vperm.xlu0 %489, %v96
  %v491 = vpop.permute.xlu0 %490
  %494 = vset.pattern.permute.xlu0 0
  %495 = vperm.xlu0 %494, %v97
  %v496 = vpop.permute.xlu0 %495
  %499 = vset.pattern.permute.xlu0 0
  %500 = vperm.xlu0 %499, %v98
  %v501 = vpop.permute.xlu0 %500
  %504 = vset.pattern.permute.xlu0 0
  %505 = vperm.xlu0 %504, %v99
  %v506 = vpop.permute.xlu0 %505
  %509 = vset.pattern.permute.xlu0 0
  %510 = vperm.xlu0 %509, %v100
  %v511 = vpop.permute.xlu0 %510
  %514 = vset.pattern.permute.xlu0 0
  %515 = vperm.xlu0 %514, %v101
  %v516 = vpop.permute.xlu0 %515
  %519 = vset.pattern.permute.xlu0 0
  %520 = vperm.xlu0 %519, %v102
  %v521 = vpop.permute.xlu0 %520
  %524 = vset.pattern.permute.xlu0 0
  %525 = vperm.xlu0 %524, %v103
  %v526 = vpop.permute.xlu0 %525
  %529 = vset.pattern.permute.xlu0 0
  %530 = vperm.xlu0 %529, %v104
  %v531 = vpop.permute.xlu0 %530
  %534 = vset.pattern.permute.xlu0 0
  %535 = vperm.xlu0 %534, %v105
  %v536 = vpop.permute.xlu0 %535
  %539 = vset.pattern.permute.xlu0 0
  %540 = vperm.xlu0 %539, %v106
  %v541 = vpop.permute.xlu0 %540
  %544 = vset.pattern.permute.xlu0 0
  %545 = vperm.xlu0 %544, %v107
  %v546 = vpop.permute.xlu0 %545
  %580 = vrot.lane.b32.xlu0 %v352, 96
  %v581 = vpop.permute.xlu0 %580
  %582 = vrot.lane.b32.xlu0 %v353, 96
  %v583 = vpop.permute.xlu0 %582
  %584 = vrot.lane.b32.xlu0 %v354, 96
  %v585 = vpop.permute.xlu0 %584
  %586 = vrot.lane.b32.xlu0 %v355, 96
  %v587 = vpop.permute.xlu0 %586
  %588 = vrot.lane.b32.xlu0 %v356, 96
  %v589 = vpop.permute.xlu0 %588
  %590 = vrot.lane.b32.xlu0 %v357, 96
  %v591 = vpop.permute.xlu0 %590
  %592 = vrot.lane.b32.xlu0 %v358, 96
  %v593 = vpop.permute.xlu0 %592
  %594 = vrot.lane.b32.xlu0 %v359, 96
  %v595 = vpop.permute.xlu0 %594
  %596 = vrot.lane.b32.xlu0 %v360, 96
  %v597 = vpop.permute.xlu0 %596
  %598 = vrot.lane.b32.xlu0 %v361, 96
  %v599 = vpop.permute.xlu0 %598
  %600 = vrot.lane.b32.xlu0 %v362, 96
  %v601 = vpop.permute.xlu0 %600
  %602 = vrot.lane.b32.xlu0 %v363, 96
  %v603 = vpop.permute.xlu0 %602
  %604 = vrot.lane.b32.xlu0 %v364, 96
  %v605 = vpop.permute.xlu0 %604
  %606 = vrot.lane.b32.xlu0 %v365, 96
  %v607 = vpop.permute.xlu0 %606
  %608 = vrot.lane.b32.xlu0 %v366, 96
  %v609 = vpop.permute.xlu0 %608
  %610 = vrot.lane.b32.xlu0 %v367, 96
  %v611 = vpop.permute.xlu0 %610
  %612 = vrot.lane.b32.xlu0 %v368, 96
  %v613 = vpop.permute.xlu0 %612
  %614 = vrot.lane.b32.xlu0 %v369, 96
  %v615 = vpop.permute.xlu0 %614
  %616 = vrot.lane.b32.xlu0 %v370, 96
  %v617 = vpop.permute.xlu0 %616
  %618 = vrot.lane.b32.xlu0 %v371, 96
  %v619 = vpop.permute.xlu0 %618
  %620 = vrot.lane.b32.xlu0 %v372, 96
  %v621 = vpop.permute.xlu0 %620
  %622 = vrot.lane.b32.xlu0 %v373, 96
  %v623 = vpop.permute.xlu0 %622
  %624 = vrot.lane.b32.xlu0 %v374, 96
  %v625 = vpop.permute.xlu0 %624
  %626 = vrot.lane.b32.xlu0 %v375, 96
  %v627 = vpop.permute.xlu0 %626
  %628 = vrot.lane.b32.xlu0 %v376, 96
  %v629 = vpop.permute.xlu0 %628
  %630 = vrot.lane.b32.xlu0 %v377, 96
  %v631 = vpop.permute.xlu0 %630
  %632 = vrot.lane.b32.xlu0 %v378, 96
  %v633 = vpop.permute.xlu0 %632
  %634 = vrot.lane.b32.xlu0 %v379, 96
  %v635 = vpop.permute.xlu0 %634
  %636 = vrot.lane.b32.xlu0 %v380, 96
  %v637 = vpop.permute.xlu0 %636
  %638 = vrot.lane.b32.xlu0 %v381, 96
  %v639 = vpop.permute.xlu0 %638
  %640 = vrot.lane.b32.xlu0 %v382, 96
  %v641 = vpop.permute.xlu0 %640
  %642 = vrot.lane.b32.xlu0 %v383, 96
  %v643 = vpop.permute.xlu0 %642
  %vm644 = vcmask 261120
  %v645 = vsel %vm644, %v581, 0
  %v647 = vsel %vm644, %v583, 0
  %v649 = vsel %vm644, %v585, 0
  %v651 = vsel %vm644, %v587, 0
  %v653 = vsel %vm644, %v589, 0
  %v655 = vsel %vm644, %v591, 0
  %v657 = vsel %vm644, %v593, 0
  %v659 = vsel %vm644, %v595, 0
  %v661 = vsel %vm644, %v597, 0
  %v663 = vsel %vm644, %v599, 0
  %v665 = vsel %vm644, %v601, 0
  %v667 = vsel %vm644, %v603, 0
  %v669 = vsel %vm644, %v605, 0
  %v671 = vsel %vm644, %v607, 0
  %v673 = vsel %vm644, %v609, 0
  %v675 = vsel %vm644, %v611, 0
  %v677 = vsel %vm644, %v613, 0
  %v679 = vsel %vm644, %v615, 0
  %v681 = vsel %vm644, %v617, 0
  %v683 = vsel %vm644, %v619, 0
  %v685 = vsel %vm644, %v621, 0
  %v687 = vsel %vm644, %v623, 0
  %v689 = vsel %vm644, %v625, 0
  %v691 = vsel %vm644, %v627, 0
  %v693 = vsel %vm644, %v629, 0
  %v695 = vsel %vm644, %v631, 0
  %v697 = vsel %vm644, %v633, 0
  %v699 = vsel %vm644, %v635, 0
  %v701 = vsel %vm644, %v637, 0
  %v703 = vsel %vm644, %v639, 0
  %v705 = vsel %vm644, %v641, 0
  %v707 = vsel %vm644, %v643, 0
  %709 = vmatpush.msra.mxu0 0.0
  %710 = vmatpush.msra.mxu0 0.0
  %711 = vmatpush.msra.mxu0 0.0
  %712 = vmatpush.msra.mxu0 0.0
  %713 = vmatpush.msra.mxu0 0.0
  %714 = vmatpush.msra.mxu0 0.0
  %715 = vmatpush.msra.mxu0 0.0
  %716 = vmatpush.msra.mxu0 0.0
  %717 = vmatpush.msra.mxu0 0.0
  %718 = vmatpush.msra.mxu0 0.0
  %719 = vmatpush.msra.mxu0 0.0
  %720 = vmatpush.msra.mxu0 0.0
  %721 = vmatpush.msra.mxu0 %v387
  %722 = vmatpush.msra.mxu0 %v386
  %723 = vmatpush.msra.mxu0 %v385
  %724 = vmatpush.msra.mxu0 %v384
  %725 = vmatmul.f32.gmra.mxu0 %v645
  %v726 = vpop.f32.mrf.mxu0
  %v727 = vadd.f32 %v391, %v726
  %728 = vmatmul.f32.gmra.mxu0 %v647
  %v729 = vpop.f32.mrf.mxu0
  %v730 = vadd.f32 %v396, %v729
  %731 = vmatmul.f32.gmra.mxu0 %v649
  %v732 = vpop.f32.mrf.mxu0
  %v733 = vadd.f32 %v401, %v732
  %734 = vmatmul.f32.gmra.mxu0 %v651
  %v735 = vpop.f32.mrf.mxu0
  %v736 = vadd.f32 %v406, %v735
  %737 = vmatmul.f32.gmra.mxu0 %v653
  %v738 = vpop.f32.mrf.mxu0
  %v739 = vadd.f32 %v411, %v738
  %740 = vmatmul.f32.gmra.mxu0 %v655
  %v741 = vpop.f32.mrf.mxu0
  %v742 = vadd.f32 %v416, %v741
  %743 = vmatmul.f32.gmra.mxu0 %v657
  %v744 = vpop.f32.mrf.mxu0
  %v745 = vadd.f32 %v421, %v744
  %746 = vmatmul.f32.gmra.mxu0 %v659
  %v747 = vpop.f32.mrf.mxu0
  %v748 = vadd.f32 %v426, %v747
  %749 = vmatmul.f32.gmra.mxu0 %v661
  %v750 = vpop.f32.mrf.mxu0
  %v751 = vadd.f32 %v431, %v750
  %752 = vmatmul.f32.gmra.mxu0 %v663
  %v753 = vpop.f32.mrf.mxu0
  %v754 = vadd.f32 %v436, %v753
  %755 = vmatmul.f32.gmra.mxu0 %v665
  %v756 = vpop.f32.mrf.mxu0
  %v757 = vadd.f32 %v441, %v756
  %758 = vmatmul.f32.gmra.mxu0 %v667
  %v759 = vpop.f32.mrf.mxu0
  %v760 = vadd.f32 %v446, %v759
  %761 = vmatmul.f32.gmra.mxu0 %v669
  %v762 = vpop.f32.mrf.mxu0
  %v763 = vadd.f32 %v451, %v762
  %764 = vmatmul.f32.gmra.mxu0 %v671
  %v765 = vpop.f32.mrf.mxu0
  %v766 = vadd.f32 %v456, %v765
  %767 = vmatmul.f32.gmra.mxu0 %v673
  %v768 = vpop.f32.mrf.mxu0
  %v769 = vadd.f32 %v461, %v768
  %770 = vmatmul.f32.gmra.mxu0 %v675
  %v771 = vpop.f32.mrf.mxu0
  %v772 = vadd.f32 %v466, %v771
  %773 = vmatmul.f32.gmra.mxu0 %v677
  %v774 = vpop.f32.mrf.mxu0
  %v775 = vadd.f32 %v471, %v774
  %776 = vmatmul.f32.gmra.mxu0 %v679
  %v777 = vpop.f32.mrf.mxu0
  %v778 = vadd.f32 %v476, %v777
  %779 = vmatmul.f32.gmra.mxu0 %v681
  %v780 = vpop.f32.mrf.mxu0
  %v781 = vadd.f32 %v481, %v780
  %782 = vmatmul.f32.gmra.mxu0 %v683
  %v783 = vpop.f32.mrf.mxu0
  %v784 = vadd.f32 %v486, %v783
  %785 = vmatmul.f32.gmra.mxu0 %v685
  %v786 = vpop.f32.mrf.mxu0
  %v787 = vadd.f32 %v491, %v786
  %788 = vmatmul.f32.gmra.mxu0 %v687
  %v789 = vpop.f32.mrf.mxu0
  %v790 = vadd.f32 %v496, %v789
  %791 = vmatmul.f32.gmra.mxu0 %v689
  %v792 = vpop.f32.mrf.mxu0
  %v793 = vadd.f32 %v501, %v792
  %794 = vmatmul.f32.gmra.mxu0 %v691
  %v795 = vpop.f32.mrf.mxu0
  %v796 = vadd.f32 %v506, %v795
  %797 = vmatmul.f32.gmra.mxu0 %v693
  %v798 = vpop.f32.mrf.mxu0
  %v799 = vadd.f32 %v511, %v798
  %800 = vmatmul.f32.gmra.mxu0 %v695
  %v801 = vpop.f32.mrf.mxu0
  %v802 = vadd.f32 %v516, %v801
  %803 = vmatmul.f32.gmra.mxu0 %v697
  %v804 = vpop.f32.mrf.mxu0
  %v805 = vadd.f32 %v521, %v804
  %806 = vmatmul.f32.gmra.mxu0 %v699
  %v807 = vpop.f32.mrf.mxu0
  %v808 = vadd.f32 %v526, %v807
  %809 = vmatmul.f32.gmra.mxu0 %v701
  %v810 = vpop.f32.mrf.mxu0
  %v811 = vadd.f32 %v531, %v810
  %812 = vmatmul.f32.gmra.mxu0 %v703
  %v813 = vpop.f32.mrf.mxu0
  %v814 = vadd.f32 %v536, %v813
  %815 = vmatmul.f32.gmra.mxu0 %v705
  %v816 = vpop.f32.mrf.mxu0
  %v817 = vadd.f32 %v541, %v816
  %818 = vmatmul.f32.gmra.mxu0 %v707
  %v819 = vpop.f32.mrf.mxu0
  %v820 = vadd.f32 %v546, %v819
  %821 = vdwg.mxu0
  %vm822 = vcmask 31744
  %v823 = vsel %vm822, %v727, -inf
  %v824 = vsel %vm822, %v730, -inf
  %v825 = vmax.f32 %v823, %v824
  %v826 = vrot.slane %v825, 4
  %v827 = vmax.f32 %v825, %v826
  %v828 = vrot.slane %v827, 2
  %v829 = vmax.f32 %v827, %v828
  %v830 = vrot.slane %v829, 1
  %v831 = vmax.f32 %v829, %v830
  %v832 = vsel %vm822, %v733, -inf
  %v833 = vsel %vm822, %v736, -inf
  %v834 = vmax.f32 %v832, %v833
  %v835 = vrot.slane %v834, 4
  %v836 = vmax.f32 %v834, %v835
  %v837 = vrot.slane %v836, 2
  %v838 = vmax.f32 %v836, %v837
  %v839 = vrot.slane %v838, 1
  %v840 = vmax.f32 %v838, %v839
  %v841 = vsel %vm822, %v739, -inf
  %v842 = vsel %vm822, %v742, -inf
  %v843 = vmax.f32 %v841, %v842
  %v844 = vrot.slane %v843, 4
  %v845 = vmax.f32 %v843, %v844
  %v846 = vrot.slane %v845, 2
  %v847 = vmax.f32 %v845, %v846
  %v848 = vrot.slane %v847, 1
  %v849 = vmax.f32 %v847, %v848
  %v850 = vsel %vm822, %v745, -inf
  %v851 = vsel %vm822, %v748, -inf
  %v852 = vmax.f32 %v850, %v851
  %v853 = vrot.slane %v852, 4
  %v854 = vmax.f32 %v852, %v853
  %v855 = vrot.slane %v854, 2
  %v856 = vmax.f32 %v854, %v855
  %v857 = vrot.slane %v856, 1
  %v858 = vmax.f32 %v856, %v857
  %v859 = vsel %vm822, %v751, -inf
  %v860 = vsel %vm822, %v754, -inf
  %v861 = vmax.f32 %v859, %v860
  %v862 = vrot.slane %v861, 4
  %v863 = vmax.f32 %v861, %v862
  %v864 = vrot.slane %v863, 2
  %v865 = vmax.f32 %v863, %v864
  %v866 = vrot.slane %v865, 1
  %v867 = vmax.f32 %v865, %v866
  %v868 = vsel %vm822, %v757, -inf
  %v869 = vsel %vm822, %v760, -inf
  %v870 = vmax.f32 %v868, %v869
  %v871 = vrot.slane %v870, 4
  %v872 = vmax.f32 %v870, %v871
  %v873 = vrot.slane %v872, 2
  %v874 = vmax.f32 %v872, %v873
  %v875 = vrot.slane %v874, 1
  %v876 = vmax.f32 %v874, %v875
  %v877 = vsel %vm822, %v763, -inf
  %v878 = vsel %vm822, %v766, -inf
  %v879 = vmax.f32 %v877, %v878
  %v880 = vrot.slane %v879, 4
  %v881 = vmax.f32 %v879, %v880
  %v882 = vrot.slane %v881, 2
  %v883 = vmax.f32 %v881, %v882
  %v884 = vrot.slane %v883, 1
  %v885 = vmax.f32 %v883, %v884
  %v886 = vsel %vm822, %v769, -inf
  %v887 = vsel %vm822, %v772, -inf
  %v888 = vmax.f32 %v886, %v887
  %v889 = vrot.slane %v888, 4
  %v890 = vmax.f32 %v888, %v889
  %v891 = vrot.slane %v890, 2
  %v892 = vmax.f32 %v890, %v891
  %v893 = vrot.slane %v892, 1
  %v894 = vmax.f32 %v892, %v893
  %v895 = vsel %vm822, %v775, -inf
  %v896 = vsel %vm822, %v778, -inf
  %v897 = vmax.f32 %v895, %v896
  %v898 = vrot.slane %v897, 4
  %v899 = vmax.f32 %v897, %v898
  %v900 = vrot.slane %v899, 2
  %v901 = vmax.f32 %v899, %v900
  %v902 = vrot.slane %v901, 1
  %v903 = vmax.f32 %v901, %v902
  %v904 = vsel %vm822, %v781, -inf
  %v905 = vsel %vm822, %v784, -inf
  %v906 = vmax.f32 %v904, %v905
  %v907 = vrot.slane %v906, 4
  %v908 = vmax.f32 %v906, %v907
  %v909 = vrot.slane %v908, 2
  %v910 = vmax.f32 %v908, %v909
  %v911 = vrot.slane %v910, 1
  %v912 = vmax.f32 %v910, %v911
  %v913 = vsel %vm822, %v787, -inf
  %v914 = vsel %vm822, %v790, -inf
  %v915 = vmax.f32 %v913, %v914
  %v916 = vrot.slane %v915, 4
  %v917 = vmax.f32 %v915, %v916
  %v918 = vrot.slane %v917, 2
  %v919 = vmax.f32 %v917, %v918
  %v920 = vrot.slane %v919, 1
  %v921 = vmax.f32 %v919, %v920
  %v922 = vsel %vm822, %v793, -inf
  %v923 = vsel %vm822, %v796, -inf
  %v924 = vmax.f32 %v922, %v923
  %v925 = vrot.slane %v924, 4
  %v926 = vmax.f32 %v924, %v925
  %v927 = vrot.slane %v926, 2
  %v928 = vmax.f32 %v926, %v927
  %v929 = vrot.slane %v928, 1
  %v930 = vmax.f32 %v928, %v929
  %v931 = vsel %vm822, %v799, -inf
  %v932 = vsel %vm822, %v802, -inf
  %v933 = vmax.f32 %v931, %v932
  %v934 = vrot.slane %v933, 4
  %v935 = vmax.f32 %v933, %v934
  %v936 = vrot.slane %v935, 2
  %v937 = vmax.f32 %v935, %v936
  %v938 = vrot.slane %v937, 1
  %v939 = vmax.f32 %v937, %v938
  %v940 = vsel %vm822, %v805, -inf
  %v941 = vsel %vm822, %v808, -inf
  %v942 = vmax.f32 %v940, %v941
  %v943 = vrot.slane %v942, 4
  %v944 = vmax.f32 %v942, %v943
  %v945 = vrot.slane %v944, 2
  %v946 = vmax.f32 %v944, %v945
  %v947 = vrot.slane %v946, 1
  %v948 = vmax.f32 %v946, %v947
  %v949 = vsel %vm822, %v811, -inf
  %v950 = vsel %vm822, %v814, -inf
  %v951 = vmax.f32 %v949, %v950
  %v952 = vrot.slane %v951, 4
  %v953 = vmax.f32 %v951, %v952
  %v954 = vrot.slane %v953, 2
  %v955 = vmax.f32 %v953, %v954
  %v956 = vrot.slane %v955, 1
  %v957 = vmax.f32 %v955, %v956
  %v958 = vsel %vm822, %v817, -inf
  %v959 = vsel %vm822, %v820, -inf
  %v960 = vmax.f32 %v958, %v959
  %v961 = vrot.slane %v960, 4
  %v962 = vmax.f32 %v960, %v961
  %v963 = vrot.slane %v962, 2
  %v964 = vmax.f32 %v962, %v963
  %v965 = vrot.slane %v964, 1
  %v966 = vmax.f32 %v964, %v965
  %v967 = vsub.f32 %v727, %v831
  %v968 = vsub.f32 %v730, %v831
  %v969 = vsub.f32 %v733, %v840
  %v970 = vsub.f32 %v736, %v840
  %v971 = vsub.f32 %v739, %v849
  %v972 = vsub.f32 %v742, %v849
  %v973 = vsub.f32 %v745, %v858
  %v974 = vsub.f32 %v748, %v858
  %v975 = vsub.f32 %v751, %v867
  %v976 = vsub.f32 %v754, %v867
  %v977 = vsub.f32 %v757, %v876
  %v978 = vsub.f32 %v760, %v876
  %v979 = vsub.f32 %v763, %v885
  %v980 = vsub.f32 %v766, %v885
  %v981 = vsub.f32 %v769, %v894
  %v982 = vsub.f32 %v772, %v894
  %v983 = vsub.f32 %v775, %v903
  %v984 = vsub.f32 %v778, %v903
  %v985 = vsub.f32 %v781, %v912
  %v986 = vsub.f32 %v784, %v912
  %v987 = vsub.f32 %v787, %v921
  %v988 = vsub.f32 %v790, %v921
  %v989 = vsub.f32 %v793, %v930
  %v990 = vsub.f32 %v796, %v930
  %v991 = vsub.f32 %v799, %v939
  %v992 = vsub.f32 %v802, %v939
  %v993 = vsub.f32 %v805, %v948
  %v994 = vsub.f32 %v808, %v948
  %v995 = vsub.f32 %v811, %v957
  %v996 = vsub.f32 %v814, %v957
  %v997 = vsub.f32 %v817, %v966
  %v998 = vsub.f32 %v820, %v966
  %v999 = vmul.f32 %v967, 1.442695
  %v1000 = vpow.pop %v999
  %v1001 = vmul.f32 %v968, 1.442695
  %v1002 = vpow.pop %v1001
  %v1003 = vmul.f32 %v969, 1.442695
  %v1004 = vpow.pop %v1003
  %v1005 = vmul.f32 %v970, 1.442695
  %v1006 = vpow.pop %v1005
  %v1007 = vmul.f32 %v971, 1.442695
  %v1008 = vpow.pop %v1007
  %v1009 = vmul.f32 %v972, 1.442695
  %v1010 = vpow.pop %v1009
  %v1011 = vmul.f32 %v973, 1.442695
  %v1012 = vpow.pop %v1011
  %v1013 = vmul.f32 %v974, 1.442695
  %v1014 = vpow.pop %v1013
  %v1015 = vmul.f32 %v975, 1.442695
  %v1016 = vpow.pop %v1015
  %v1017 = vmul.f32 %v976, 1.442695
  %v1018 = vpow.pop %v1017
  %v1019 = vmul.f32 %v977, 1.442695
  %v1020 = vpow.pop %v1019
  %v1021 = vmul.f32 %v978, 1.442695
  %v1022 = vpow.pop %v1021
  %v1023 = vmul.f32 %v979, 1.442695
  %v1024 = vpow.pop %v1023
  %v1025 = vmul.f32 %v980, 1.442695
  %v1026 = vpow.pop %v1025
  %v1027 = vmul.f32 %v981, 1.442695
  %v1028 = vpow.pop %v1027
  %v1029 = vmul.f32 %v982, 1.442695
  %v1030 = vpow.pop %v1029
  %v1031 = vmul.f32 %v983, 1.442695
  %v1032 = vpow.pop %v1031
  %v1033 = vmul.f32 %v984, 1.442695
  %v1034 = vpow.pop %v1033
  %v1035 = vmul.f32 %v985, 1.442695
  %v1036 = vpow.pop %v1035
  %v1037 = vmul.f32 %v986, 1.442695
  %v1038 = vpow.pop %v1037
  %v1039 = vmul.f32 %v987, 1.442695
  %v1040 = vpow.pop %v1039
  %v1041 = vmul.f32 %v988, 1.442695
  %v1042 = vpow.pop %v1041
  %v1043 = vmul.f32 %v989, 1.442695
  %v1044 = vpow.pop %v1043
  %v1045 = vmul.f32 %v990, 1.442695
  %v1046 = vpow.pop %v1045
  %v1047 = vmul.f32 %v991, 1.442695
  %v1048 = vpow.pop %v1047
  %v1049 = vmul.f32 %v992, 1.442695
  %v1050 = vpow.pop %v1049
  %v1051 = vmul.f32 %v993, 1.442695
  %v1052 = vpow.pop %v1051
  %v1053 = vmul.f32 %v994, 1.442695
  %v1054 = vpow.pop %v1053
  %v1055 = vmul.f32 %v995, 1.442695
  %v1056 = vpow.pop %v1055
  %v1057 = vmul.f32 %v996, 1.442695
  %v1058 = vpow.pop %v1057
  %v1059 = vmul.f32 %v997, 1.442695
  %v1060 = vpow.pop %v1059
  %v1061 = vmul.f32 %v998, 1.442695
  %v1062 = vpow.pop %v1061
  %v1063 = vsel %vm822, %v1000, 0.0
  %v1064 = vsel %vm822, %v1002, 0.0
  %v1065 = vadd.f32 %v1063, %v1064
  %v1066 = vrot.slane %v1065, 4
  %v1067 = vadd.f32 %v1065, %v1066
  %v1068 = vrot.slane %v1067, 2
  %v1069 = vadd.f32 %v1067, %v1068
  %v1070 = vrot.slane %v1069, 1
  %v1071 = vadd.f32 %v1069, %v1070
  %v1072 = vsel %vm822, %v1004, 0.0
  %v1073 = vsel %vm822, %v1006, 0.0
  %v1074 = vadd.f32 %v1072, %v1073
  %v1075 = vrot.slane %v1074, 4
  %v1076 = vadd.f32 %v1074, %v1075
  %v1077 = vrot.slane %v1076, 2
  %v1078 = vadd.f32 %v1076, %v1077
  %v1079 = vrot.slane %v1078, 1
  %v1080 = vadd.f32 %v1078, %v1079
  %v1081 = vsel %vm822, %v1008, 0.0
  %v1082 = vsel %vm822, %v1010, 0.0
  %v1083 = vadd.f32 %v1081, %v1082
  %v1084 = vrot.slane %v1083, 4
  %v1085 = vadd.f32 %v1083, %v1084
  %v1086 = vrot.slane %v1085, 2
  %v1087 = vadd.f32 %v1085, %v1086
  %v1088 = vrot.slane %v1087, 1
  %v1089 = vadd.f32 %v1087, %v1088
  %v1090 = vsel %vm822, %v1012, 0.0
  %v1091 = vsel %vm822, %v1014, 0.0
  %v1092 = vadd.f32 %v1090, %v1091
  %v1093 = vrot.slane %v1092, 4
  %v1094 = vadd.f32 %v1092, %v1093
  %v1095 = vrot.slane %v1094, 2
  %v1096 = vadd.f32 %v1094, %v1095
  %v1097 = vrot.slane %v1096, 1
  %v1098 = vadd.f32 %v1096, %v1097
  %v1099 = vsel %vm822, %v1016, 0.0
  %v1100 = vsel %vm822, %v1018, 0.0
  %v1101 = vadd.f32 %v1099, %v1100
  %v1102 = vrot.slane %v1101, 4
  %v1103 = vadd.f32 %v1101, %v1102
  %v1104 = vrot.slane %v1103, 2
  %v1105 = vadd.f32 %v1103, %v1104
  %v1106 = vrot.slane %v1105, 1
  %v1107 = vadd.f32 %v1105, %v1106
  %v1108 = vsel %vm822, %v1020, 0.0
  %v1109 = vsel %vm822, %v1022, 0.0
  %v1110 = vadd.f32 %v1108, %v1109
  %v1111 = vrot.slane %v1110, 4
  %v1112 = vadd.f32 %v1110, %v1111
  %v1113 = vrot.slane %v1112, 2
  %v1114 = vadd.f32 %v1112, %v1113
  %v1115 = vrot.slane %v1114, 1
  %v1116 = vadd.f32 %v1114, %v1115
  %v1117 = vsel %vm822, %v1024, 0.0
  %v1118 = vsel %vm822, %v1026, 0.0
  %v1119 = vadd.f32 %v1117, %v1118
  %v1120 = vrot.slane %v1119, 4
  %v1121 = vadd.f32 %v1119, %v1120
  %v1122 = vrot.slane %v1121, 2
  %v1123 = vadd.f32 %v1121, %v1122
  %v1124 = vrot.slane %v1123, 1
  %v1125 = vadd.f32 %v1123, %v1124
  %v1126 = vsel %vm822, %v1028, 0.0
  %v1127 = vsel %vm822, %v1030, 0.0
  %v1128 = vadd.f32 %v1126, %v1127
  %v1129 = vrot.slane %v1128, 4
  %v1130 = vadd.f32 %v1128, %v1129
  %v1131 = vrot.slane %v1130, 2
  %v1132 = vadd.f32 %v1130, %v1131
  %v1133 = vrot.slane %v1132, 1
  %v1134 = vadd.f32 %v1132, %v1133
  %v1135 = vsel %vm822, %v1032, 0.0
  %v1136 = vsel %vm822, %v1034, 0.0
  %v1137 = vadd.f32 %v1135, %v1136
  %v1138 = vrot.slane %v1137, 4
  %v1139 = vadd.f32 %v1137, %v1138
  %v1140 = vrot.slane %v1139, 2
  %v1141 = vadd.f32 %v1139, %v1140
  %v1142 = vrot.slane %v1141, 1
  %v1143 = vadd.f32 %v1141, %v1142
  %v1144 = vsel %vm822, %v1036, 0.0
  %v1145 = vsel %vm822, %v1038, 0.0
  %v1146 = vadd.f32 %v1144, %v1145
  %v1147 = vrot.slane %v1146, 4
  %v1148 = vadd.f32 %v1146, %v1147
  %v1149 = vrot.slane %v1148, 2
  %v1150 = vadd.f32 %v1148, %v1149
  %v1151 = vrot.slane %v1150, 1
  %v1152 = vadd.f32 %v1150, %v1151
  %v1153 = vsel %vm822, %v1040, 0.0
  %v1154 = vsel %vm822, %v1042, 0.0
  %v1155 = vadd.f32 %v1153, %v1154
  %v1156 = vrot.slane %v1155, 4
  %v1157 = vadd.f32 %v1155, %v1156
  %v1158 = vrot.slane %v1157, 2
  %v1159 = vadd.f32 %v1157, %v1158
  %v1160 = vrot.slane %v1159, 1
  %v1161 = vadd.f32 %v1159, %v1160
  %v1162 = vsel %vm822, %v1044, 0.0
  %v1163 = vsel %vm822, %v1046, 0.0
  %v1164 = vadd.f32 %v1162, %v1163
  %v1165 = vrot.slane %v1164, 4
  %v1166 = vadd.f32 %v1164, %v1165
  %v1167 = vrot.slane %v1166, 2
  %v1168 = vadd.f32 %v1166, %v1167
  %v1169 = vrot.slane %v1168, 1
  %v1170 = vadd.f32 %v1168, %v1169
  %v1171 = vsel %vm822, %v1048, 0.0
  %v1172 = vsel %vm822, %v1050, 0.0
  %v1173 = vadd.f32 %v1171, %v1172
  %v1174 = vrot.slane %v1173, 4
  %v1175 = vadd.f32 %v1173, %v1174
  %v1176 = vrot.slane %v1175, 2
  %v1177 = vadd.f32 %v1175, %v1176
  %v1178 = vrot.slane %v1177, 1
  %v1179 = vadd.f32 %v1177, %v1178
  %v1180 = vsel %vm822, %v1052, 0.0
  %v1181 = vsel %vm822, %v1054, 0.0
  %v1182 = vadd.f32 %v1180, %v1181
  %v1183 = vrot.slane %v1182, 4
  %v1184 = vadd.f32 %v1182, %v1183
  %v1185 = vrot.slane %v1184, 2
  %v1186 = vadd.f32 %v1184, %v1185
  %v1187 = vrot.slane %v1186, 1
  %v1188 = vadd.f32 %v1186, %v1187
  %v1189 = vsel %vm822, %v1056, 0.0
  %v1190 = vsel %vm822, %v1058, 0.0
  %v1191 = vadd.f32 %v1189, %v1190
  %v1192 = vrot.slane %v1191, 4
  %v1193 = vadd.f32 %v1191, %v1192
  %v1194 = vrot.slane %v1193, 2
  %v1195 = vadd.f32 %v1193, %v1194
  %v1196 = vrot.slane %v1195, 1
  %v1197 = vadd.f32 %v1195, %v1196
  %v1198 = vsel %vm822, %v1060, 0.0
  %v1199 = vsel %vm822, %v1062, 0.0
  %v1200 = vadd.f32 %v1198, %v1199
  %v1201 = vrot.slane %v1200, 4
  %v1202 = vadd.f32 %v1200, %v1201
  %v1203 = vrot.slane %v1202, 2
  %v1204 = vadd.f32 %v1202, %v1203
  %v1205 = vrot.slane %v1204, 1
  %v1206 = vadd.f32 %v1204, %v1205
  %v1207 = vrcp.pop %v1071
  %v1208 = vmul.f32 %v1071, %v1207
  %v1209 = vsub.f32 1.0, %v1208
  %v1210 = vmul.f32 %v1207, %v1209
  %v1211 = vadd.f32 %v1207, %v1210
  %vm1212 = vweird.f32 %v1071
  %vm1213 = vweird.f32 %v1207
  %vm1214 = vmor %vm1212, %vm1213
  %v1215 = vsel %vm1214, %v1207, %v1211
  %v1216 = vand.u32 2147483647, %v1071
  %vm1217 = vcmp.eq.f32.partialorder %v1216, 8.507059e+37
  %v1218 = vand.u32 %v1071, 2147483648
  %v1219 = vor.u32 1.1754944e-38, %v1218
  %v1220 = vsel %vm1217, %v1219, %v1215
  %v1221 = vmul.f32 %v1000, %v1220
  %v1222 = vmul.f32 %v1002, %v1220
  %v1223 = vrcp.pop %v1080
  %v1224 = vmul.f32 %v1080, %v1223
  %v1225 = vsub.f32 1.0, %v1224
  %v1226 = vmul.f32 %v1223, %v1225
  %v1227 = vadd.f32 %v1223, %v1226
  %vm1228 = vweird.f32 %v1080
  %vm1229 = vweird.f32 %v1223
  %vm1230 = vmor %vm1228, %vm1229
  %v1231 = vsel %vm1230, %v1223, %v1227
  %v1232 = vand.u32 2147483647, %v1080
  %vm1233 = vcmp.eq.f32.partialorder %v1232, 8.507059e+37
  %v1234 = vand.u32 %v1080, 2147483648
  %v1235 = vor.u32 1.1754944e-38, %v1234
  %v1236 = vsel %vm1233, %v1235, %v1231
  %v1237 = vmul.f32 %v1004, %v1236
  %v1238 = vmul.f32 %v1006, %v1236
  %v1239 = vrcp.pop %v1089
  %v1240 = vmul.f32 %v1089, %v1239
  %v1241 = vsub.f32 1.0, %v1240
  %v1242 = vmul.f32 %v1239, %v1241
  %v1243 = vadd.f32 %v1239, %v1242
  %vm1244 = vweird.f32 %v1089
  %vm1245 = vweird.f32 %v1239
  %vm1246 = vmor %vm1244, %vm1245
  %v1247 = vsel %vm1246, %v1239, %v1243
  %v1248 = vand.u32 2147483647, %v1089
  %vm1249 = vcmp.eq.f32.partialorder %v1248, 8.507059e+37
  %v1250 = vand.u32 %v1089, 2147483648
  %v1251 = vor.u32 1.1754944e-38, %v1250
  %v1252 = vsel %vm1249, %v1251, %v1247
  %v1253 = vmul.f32 %v1008, %v1252
  %v1254 = vmul.f32 %v1010, %v1252
  %v1255 = vrcp.pop %v1098
  %v1256 = vmul.f32 %v1098, %v1255
  %v1257 = vsub.f32 1.0, %v1256
  %v1258 = vmul.f32 %v1255, %v1257
  %v1259 = vadd.f32 %v1255, %v1258
  %vm1260 = vweird.f32 %v1098
  %vm1261 = vweird.f32 %v1255
  %vm1262 = vmor %vm1260, %vm1261
  %v1263 = vsel %vm1262, %v1255, %v1259
  %v1264 = vand.u32 2147483647, %v1098
  %vm1265 = vcmp.eq.f32.partialorder %v1264, 8.507059e+37
  %v1266 = vand.u32 %v1098, 2147483648
  %v1267 = vor.u32 1.1754944e-38, %v1266
  %v1268 = vsel %vm1265, %v1267, %v1263
  %v1269 = vmul.f32 %v1012, %v1268
  %v1270 = vmul.f32 %v1014, %v1268
  %v1271 = vrcp.pop %v1107
  %v1272 = vmul.f32 %v1107, %v1271
  %v1273 = vsub.f32 1.0, %v1272
  %v1274 = vmul.f32 %v1271, %v1273
  %v1275 = vadd.f32 %v1271, %v1274
  %vm1276 = vweird.f32 %v1107
  %vm1277 = vweird.f32 %v1271
  %vm1278 = vmor %vm1276, %vm1277
  %v1279 = vsel %vm1278, %v1271, %v1275
  %v1280 = vand.u32 2147483647, %v1107
  %vm1281 = vcmp.eq.f32.partialorder %v1280, 8.507059e+37
  %v1282 = vand.u32 %v1107, 2147483648
  %v1283 = vor.u32 1.1754944e-38, %v1282
  %v1284 = vsel %vm1281, %v1283, %v1279
  %v1285 = vmul.f32 %v1016, %v1284
  %v1286 = vmul.f32 %v1018, %v1284
  %v1287 = vrcp.pop %v1116
  %v1288 = vmul.f32 %v1116, %v1287
  %v1289 = vsub.f32 1.0, %v1288
  %v1290 = vmul.f32 %v1287, %v1289
  %v1291 = vadd.f32 %v1287, %v1290
  %vm1292 = vweird.f32 %v1116
  %vm1293 = vweird.f32 %v1287
  %vm1294 = vmor %vm1292, %vm1293
  %v1295 = vsel %vm1294, %v1287, %v1291
  %v1296 = vand.u32 2147483647, %v1116
  %vm1297 = vcmp.eq.f32.partialorder %v1296, 8.507059e+37
  %v1298 = vand.u32 %v1116, 2147483648
  %v1299 = vor.u32 1.1754944e-38, %v1298
  %v1300 = vsel %vm1297, %v1299, %v1295
  %v1301 = vmul.f32 %v1020, %v1300
  %v1302 = vmul.f32 %v1022, %v1300
  %v1303 = vrcp.pop %v1125
  %v1304 = vmul.f32 %v1125, %v1303
  %v1305 = vsub.f32 1.0, %v1304
  %v1306 = vmul.f32 %v1303, %v1305
  %v1307 = vadd.f32 %v1303, %v1306
  %vm1308 = vweird.f32 %v1125
  %vm1309 = vweird.f32 %v1303
  %vm1310 = vmor %vm1308, %vm1309
  %v1311 = vsel %vm1310, %v1303, %v1307
  %v1312 = vand.u32 2147483647, %v1125
  %vm1313 = vcmp.eq.f32.partialorder %v1312, 8.507059e+37
  %v1314 = vand.u32 %v1125, 2147483648
  %v1315 = vor.u32 1.1754944e-38, %v1314
  %v1316 = vsel %vm1313, %v1315, %v1311
  %v1317 = vmul.f32 %v1024, %v1316
  %v1318 = vmul.f32 %v1026, %v1316
  %v1319 = vrcp.pop %v1134
  %v1320 = vmul.f32 %v1134, %v1319
  %v1321 = vsub.f32 1.0, %v1320
  %v1322 = vmul.f32 %v1319, %v1321
  %v1323 = vadd.f32 %v1319, %v1322
  %vm1324 = vweird.f32 %v1134
  %vm1325 = vweird.f32 %v1319
  %vm1326 = vmor %vm1324, %vm1325
  %v1327 = vsel %vm1326, %v1319, %v1323
  %v1328 = vand.u32 2147483647, %v1134
  %vm1329 = vcmp.eq.f32.partialorder %v1328, 8.507059e+37
  %v1330 = vand.u32 %v1134, 2147483648
  %v1331 = vor.u32 1.1754944e-38, %v1330
  %v1332 = vsel %vm1329, %v1331, %v1327
  %v1333 = vmul.f32 %v1028, %v1332
  %v1334 = vmul.f32 %v1030, %v1332
  %v1335 = vrcp.pop %v1143
  %v1336 = vmul.f32 %v1143, %v1335
  %v1337 = vsub.f32 1.0, %v1336
  %v1338 = vmul.f32 %v1335, %v1337
  %v1339 = vadd.f32 %v1335, %v1338
  %vm1340 = vweird.f32 %v1143
  %vm1341 = vweird.f32 %v1335
  %vm1342 = vmor %vm1340, %vm1341
  %v1343 = vsel %vm1342, %v1335, %v1339
  %v1344 = vand.u32 2147483647, %v1143
  %vm1345 = vcmp.eq.f32.partialorder %v1344, 8.507059e+37
  %v1346 = vand.u32 %v1143, 2147483648
  %v1347 = vor.u32 1.1754944e-38, %v1346
  %v1348 = vsel %vm1345, %v1347, %v1343
  %v1349 = vmul.f32 %v1032, %v1348
  %v1350 = vmul.f32 %v1034, %v1348
  %v1351 = vrcp.pop %v1152
  %v1352 = vmul.f32 %v1152, %v1351
  %v1353 = vsub.f32 1.0, %v1352
  %v1354 = vmul.f32 %v1351, %v1353
  %v1355 = vadd.f32 %v1351, %v1354
  %vm1356 = vweird.f32 %v1152
  %vm1357 = vweird.f32 %v1351
  %vm1358 = vmor %vm1356, %vm1357
  %v1359 = vsel %vm1358, %v1351, %v1355
  %v1360 = vand.u32 2147483647, %v1152
  %vm1361 = vcmp.eq.f32.partialorder %v1360, 8.507059e+37
  %v1362 = vand.u32 %v1152, 2147483648
  %v1363 = vor.u32 1.1754944e-38, %v1362
  %v1364 = vsel %vm1361, %v1363, %v1359
  %v1365 = vmul.f32 %v1036, %v1364
  %v1366 = vmul.f32 %v1038, %v1364
  %v1367 = vrcp.pop %v1161
  %v1368 = vmul.f32 %v1161, %v1367
  %v1369 = vsub.f32 1.0, %v1368
  %v1370 = vmul.f32 %v1367, %v1369
  %v1371 = vadd.f32 %v1367, %v1370
  %vm1372 = vweird.f32 %v1161
  %vm1373 = vweird.f32 %v1367
  %vm1374 = vmor %vm1372, %vm1373
  %v1375 = vsel %vm1374, %v1367, %v1371
  %v1376 = vand.u32 2147483647, %v1161
  %vm1377 = vcmp.eq.f32.partialorder %v1376, 8.507059e+37
  %v1378 = vand.u32 %v1161, 2147483648
  %v1379 = vor.u32 1.1754944e-38, %v1378
  %v1380 = vsel %vm1377, %v1379, %v1375
  %v1381 = vmul.f32 %v1040, %v1380
  %v1382 = vmul.f32 %v1042, %v1380
  %v1383 = vrcp.pop %v1170
  %v1384 = vmul.f32 %v1170, %v1383
  %v1385 = vsub.f32 1.0, %v1384
  %v1386 = vmul.f32 %v1383, %v1385
  %v1387 = vadd.f32 %v1383, %v1386
  %vm1388 = vweird.f32 %v1170
  %vm1389 = vweird.f32 %v1383
  %vm1390 = vmor %vm1388, %vm1389
  %v1391 = vsel %vm1390, %v1383, %v1387
  %v1392 = vand.u32 2147483647, %v1170
  %vm1393 = vcmp.eq.f32.partialorder %v1392, 8.507059e+37
  %v1394 = vand.u32 %v1170, 2147483648
  %v1395 = vor.u32 1.1754944e-38, %v1394
  %v1396 = vsel %vm1393, %v1395, %v1391
  %v1397 = vmul.f32 %v1044, %v1396
  %v1398 = vmul.f32 %v1046, %v1396
  %v1399 = vrcp.pop %v1179
  %v1400 = vmul.f32 %v1179, %v1399
  %v1401 = vsub.f32 1.0, %v1400
  %v1402 = vmul.f32 %v1399, %v1401
  %v1403 = vadd.f32 %v1399, %v1402
  %vm1404 = vweird.f32 %v1179
  %vm1405 = vweird.f32 %v1399
  %vm1406 = vmor %vm1404, %vm1405
  %v1407 = vsel %vm1406, %v1399, %v1403
  %v1408 = vand.u32 2147483647, %v1179
  %vm1409 = vcmp.eq.f32.partialorder %v1408, 8.507059e+37
  %v1410 = vand.u32 %v1179, 2147483648
  %v1411 = vor.u32 1.1754944e-38, %v1410
  %v1412 = vsel %vm1409, %v1411, %v1407
  %v1413 = vmul.f32 %v1048, %v1412
  %v1414 = vmul.f32 %v1050, %v1412
  %v1415 = vrcp.pop %v1188
  %v1416 = vmul.f32 %v1188, %v1415
  %v1417 = vsub.f32 1.0, %v1416
  %v1418 = vmul.f32 %v1415, %v1417
  %v1419 = vadd.f32 %v1415, %v1418
  %vm1420 = vweird.f32 %v1188
  %vm1421 = vweird.f32 %v1415
  %vm1422 = vmor %vm1420, %vm1421
  %v1423 = vsel %vm1422, %v1415, %v1419
  %v1424 = vand.u32 2147483647, %v1188
  %vm1425 = vcmp.eq.f32.partialorder %v1424, 8.507059e+37
  %v1426 = vand.u32 %v1188, 2147483648
  %v1427 = vor.u32 1.1754944e-38, %v1426
  %v1428 = vsel %vm1425, %v1427, %v1423
  %v1429 = vmul.f32 %v1052, %v1428
  %v1430 = vmul.f32 %v1054, %v1428
  %v1431 = vrcp.pop %v1197
  %v1432 = vmul.f32 %v1197, %v1431
  %v1433 = vsub.f32 1.0, %v1432
  %v1434 = vmul.f32 %v1431, %v1433
  %v1435 = vadd.f32 %v1431, %v1434
  %vm1436 = vweird.f32 %v1197
  %vm1437 = vweird.f32 %v1431
  %vm1438 = vmor %vm1436, %vm1437
  %v1439 = vsel %vm1438, %v1431, %v1435
  %v1440 = vand.u32 2147483647, %v1197
  %vm1441 = vcmp.eq.f32.partialorder %v1440, 8.507059e+37
  %v1442 = vand.u32 %v1197, 2147483648
  %v1443 = vor.u32 1.1754944e-38, %v1442
  %v1444 = vsel %vm1441, %v1443, %v1439
  %v1445 = vmul.f32 %v1056, %v1444
  %v1446 = vmul.f32 %v1058, %v1444
  %v1447 = vrcp.pop %v1206
  %v1448 = vmul.f32 %v1206, %v1447
  %v1449 = vsub.f32 1.0, %v1448
  %v1450 = vmul.f32 %v1447, %v1449
  %v1451 = vadd.f32 %v1447, %v1450
  %vm1452 = vweird.f32 %v1206
  %vm1453 = vweird.f32 %v1447
  %vm1454 = vmor %vm1452, %vm1453
  %v1455 = vsel %vm1454, %v1447, %v1451
  %v1456 = vand.u32 2147483647, %v1206
  %vm1457 = vcmp.eq.f32.partialorder %v1456, 8.507059e+37
  %v1458 = vand.u32 %v1206, 2147483648
  %v1459 = vor.u32 1.1754944e-38, %v1458
  %v1460 = vsel %vm1457, %v1459, %v1455
  %v1461 = vmul.f32 %v1060, %v1460
  %v1462 = vmul.f32 %v1062, %v1460
  %v1463 = vld [vmem:[%s6] sm:$0xf]
  %v1465 = vsel %vm822, %v1221, 0
  %v1468 = vsel %vm822, %v1222, 0
  %v1471 = vsel %vm822, %v1237, 0
  %v1474 = vsel %vm822, %v1238, 0
  %v1477 = vsel %vm822, %v1253, 0
  %v1480 = vsel %vm822, %v1254, 0
  %v1483 = vsel %vm822, %v1269, 0
  %v1486 = vsel %vm822, %v1270, 0
  %v1489 = vsel %vm822, %v1285, 0
  %v1492 = vsel %vm822, %v1286, 0
  %v1495 = vsel %vm822, %v1301, 0
  %v1498 = vsel %vm822, %v1302, 0
  %v1501 = vsel %vm822, %v1317, 0
  %v1504 = vsel %vm822, %v1318, 0
  %v1507 = vsel %vm822, %v1333, 0
  %v1510 = vsel %vm822, %v1334, 0
  %v1513 = vsel %vm822, %v1349, 0
  %v1516 = vsel %vm822, %v1350, 0
  %v1519 = vsel %vm822, %v1365, 0
  %v1522 = vsel %vm822, %v1366, 0
  %v1525 = vsel %vm822, %v1381, 0
  %v1528 = vsel %vm822, %v1382, 0
  %v1531 = vsel %vm822, %v1397, 0
  %v1534 = vsel %vm822, %v1398, 0
  %v1537 = vsel %vm822, %v1413, 0
  %v1540 = vsel %vm822, %v1414, 0
  %v1543 = vsel %vm822, %v1429, 0
  %v1546 = vsel %vm822, %v1430, 0
  %v1549 = vsel %vm822, %v1445, 0
  %v1552 = vsel %vm822, %v1446, 0
  %v1555 = vsel %vm822, %v1461, 0
  %v1558 = vsel %vm822, %v1462, 0
  %vm1560 = vcmask 1043456
  %v1562 = vsel %vm1560, %v1463, 0
  %1564 = vmatpush.msra.mxu0 0.0
  %1565 = vmatpush.msra.mxu0 0.0
  %1566 = vmatpush.msra.mxu0 0.0
  %1567 = vmatpush.msra.mxu0 0.0
  %1568 = vmatpush.msra.mxu0 0.0
  %1569 = vmatpush.msra.mxu0 0.0
  %1570 = vmatpush.msra.mxu0 0.0
  %1571 = vmatpush.msra.mxu0 0.0
  %1572 = vmatpush.msra.mxu0 0.0
  %1573 = vmatpush.msra.mxu0 0.0
  %1574 = vmatpush.msra.mxu0 0.0
  %1575 = vmatpush.msra.mxu0 0.0
  %1576 = vmatpush.msra.mxu0 0.0
  %1577 = vmatpush.msra.mxu0 0.0
  %1578 = vmatpush.msra.mxu0 0.0
  %1579 = vmatpush.msra.mxu0 %v1562
  %1580 = vmatmul.f32.gmra.mxu0 %v1465
  %v1581 = vpop.f32.mrf.mxu0
  %v1582 = vadd.f32 0.0, %v1581
  %1583 = vmatmul.f32.gmra.mxu0 %v1468
  %v1584 = vpop.f32.mrf.mxu0
  %v1585 = vadd.f32 0.0, %v1584
  %1586 = vmatmul.f32.gmra.mxu0 %v1471
  %v1587 = vpop.f32.mrf.mxu0
  %v1588 = vadd.f32 0.0, %v1587
  %1589 = vmatmul.f32.gmra.mxu0 %v1474
  %v1590 = vpop.f32.mrf.mxu0
  %v1591 = vadd.f32 0.0, %v1590
  %1592 = vmatmul.f32.gmra.mxu0 %v1477
  %v1593 = vpop.f32.mrf.mxu0
  %v1594 = vadd.f32 0.0, %v1593
  %1595 = vmatmul.f32.gmra.mxu0 %v1480
  %v1596 = vpop.f32.mrf.mxu0
  %v1597 = vadd.f32 0.0, %v1596
  %1598 = vmatmul.f32.gmra.mxu0 %v1483
  %v1599 = vpop.f32.mrf.mxu0
  %v1600 = vadd.f32 0.0, %v1599
  %1601 = vmatmul.f32.gmra.mxu0 %v1486
  %v1602 = vpop.f32.mrf.mxu0
  %v1603 = vadd.f32 0.0, %v1602
  %1604 = vmatmul.f32.gmra.mxu0 %v1489
  %v1605 = vpop.f32.mrf.mxu0
  %v1606 = vadd.f32 0.0, %v1605
  %1607 = vmatmul.f32.gmra.mxu0 %v1492
  %v1608 = vpop.f32.mrf.mxu0
  %v1609 = vadd.f32 0.0, %v1608
  %1610 = vmatmul.f32.gmra.mxu0 %v1495
  %v1611 = vpop.f32.mrf.mxu0
  %v1612 = vadd.f32 0.0, %v1611
  %1613 = vmatmul.f32.gmra.mxu0 %v1498
  %v1614 = vpop.f32.mrf.mxu0
  %v1615 = vadd.f32 0.0, %v1614
  %1616 = vmatmul.f32.gmra.mxu0 %v1501
  %v1617 = vpop.f32.mrf.mxu0
  %v1618 = vadd.f32 0.0, %v1617
  %1619 = vmatmul.f32.gmra.mxu0 %v1504
  %v1620 = vpop.f32.mrf.mxu0
  %v1621 = vadd.f32 0.0, %v1620
  %1622 = vmatmul.f32.gmra.mxu0 %v1507
  %v1623 = vpop.f32.mrf.mxu0
  %v1624 = vadd.f32 0.0, %v1623
  %1625 = vmatmul.f32.gmra.mxu0 %v1510
  %v1626 = vpop.f32.mrf.mxu0
  %v1627 = vadd.f32 0.0, %v1626
  %1628 = vmatmul.f32.gmra.mxu0 %v1513
  %v1629 = vpop.f32.mrf.mxu0
  %v1630 = vadd.f32 0.0, %v1629
  %1631 = vmatmul.f32.gmra.mxu0 %v1516
  %v1632 = vpop.f32.mrf.mxu0
  %v1633 = vadd.f32 0.0, %v1632
  %1634 = vmatmul.f32.gmra.mxu0 %v1519
  %v1635 = vpop.f32.mrf.mxu0
  %v1636 = vadd.f32 0.0, %v1635
  %1637 = vmatmul.f32.gmra.mxu0 %v1522
  %v1638 = vpop.f32.mrf.mxu0
  %v1639 = vadd.f32 0.0, %v1638
  %1640 = vmatmul.f32.gmra.mxu0 %v1525
  %v1641 = vpop.f32.mrf.mxu0
  %v1642 = vadd.f32 0.0, %v1641
  %1643 = vmatmul.f32.gmra.mxu0 %v1528
  %v1644 = vpop.f32.mrf.mxu0
  %v1645 = vadd.f32 0.0, %v1644
  %1646 = vmatmul.f32.gmra.mxu0 %v1531
  %v1647 = vpop.f32.mrf.mxu0
  %v1648 = vadd.f32 0.0, %v1647
  %1649 = vmatmul.f32.gmra.mxu0 %v1534
  %v1650 = vpop.f32.mrf.mxu0
  %v1651 = vadd.f32 0.0, %v1650
  %1652 = vmatmul.f32.gmra.mxu0 %v1537
  %v1653 = vpop.f32.mrf.mxu0
  %v1654 = vadd.f32 0.0, %v1653
  %1655 = vmatmul.f32.gmra.mxu0 %v1540
  %v1656 = vpop.f32.mrf.mxu0
  %v1657 = vadd.f32 0.0, %v1656
  %1658 = vmatmul.f32.gmra.mxu0 %v1543
  %v1659 = vpop.f32.mrf.mxu0
  %v1660 = vadd.f32 0.0, %v1659
  %1661 = vmatmul.f32.gmra.mxu0 %v1546
  %v1662 = vpop.f32.mrf.mxu0
  %v1663 = vadd.f32 0.0, %v1662
  %1664 = vmatmul.f32.gmra.mxu0 %v1549
  %v1665 = vpop.f32.mrf.mxu0
  %v1666 = vadd.f32 0.0, %v1665
  %1667 = vmatmul.f32.gmra.mxu0 %v1552
  %v1668 = vpop.f32.mrf.mxu0
  %v1669 = vadd.f32 0.0, %v1668
  %1670 = vmatmul.f32.gmra.mxu0 %v1555
  %v1671 = vpop.f32.mrf.mxu0
  %v1672 = vadd.f32 0.0, %v1671
  %1673 = vmatmul.f32.gmra.mxu0 %v1558
  %v1674 = vpop.f32.mrf.mxu0
  %v1675 = vadd.f32 0.0, %v1674
  %1676 = vdwg.mxu0
  %v1677 = vmul.f32 %v1582, %v197
  %v1678 = vmul.f32 %v1585, %v200
  %v1679 = vmul.f32 %v1588, %v197
  %v1680 = vmul.f32 %v1591, %v200
  %v1681 = vmul.f32 %v1594, %v197
  %v1682 = vmul.f32 %v1597, %v200
  %v1683 = vmul.f32 %v1600, %v197
  %v1684 = vmul.f32 %v1603, %v200
  %v1685 = vmul.f32 %v1606, %v197
  %v1686 = vmul.f32 %v1609, %v200
  %v1687 = vmul.f32 %v1612, %v197
  %v1688 = vmul.f32 %v1615, %v200
  %v1689 = vmul.f32 %v1618, %v197
  %v1690 = vmul.f32 %v1621, %v200
  %v1691 = vmul.f32 %v1624, %v197
  %v1692 = vmul.f32 %v1627, %v200
  %v1693 = vmul.f32 %v1630, %v197
  %v1694 = vmul.f32 %v1633, %v200
  %v1695 = vmul.f32 %v1636, %v197
  %v1696 = vmul.f32 %v1639, %v200
  %v1697 = vmul.f32 %v1642, %v197
  %v1698 = vmul.f32 %v1645, %v200
  %v1699 = vmul.f32 %v1648, %v197
  %v1700 = vmul.f32 %v1651, %v200
  %v1701 = vmul.f32 %v1654, %v197
  %v1702 = vmul.f32 %v1657, %v200
  %v1703 = vmul.f32 %v1660, %v197
  %v1704 = vmul.f32 %v1663, %v200
  %v1705 = vmul.f32 %v1666, %v197
  %v1706 = vmul.f32 %v1669, %v200
  %v1707 = vmul.f32 %v1672, %v197
  %v1708 = vmul.f32 %v1675, %v200
  %v1709 = vsel %vm644, %v1677, 0.0
  %v1710 = vsel %vm644, %v1678, 0.0
  %v1711 = vadd.f32 %v1709, %v1710
  %v1712 = vrot.slane %v1711, 4
  %v1713 = vadd.f32 %v1711, %v1712
  %v1714 = vrot.slane %v1713, 2
  %v1715 = vadd.f32 %v1713, %v1714
  %v1716 = vrot.slane %v1715, 1
  %v1717 = vadd.f32 %v1715, %v1716
  %v1718 = vsel %vm644, %v1679, 0.0
  %v1719 = vsel %vm644, %v1680, 0.0
  %v1720 = vadd.f32 %v1718, %v1719
  %v1721 = vrot.slane %v1720, 4
  %v1722 = vadd.f32 %v1720, %v1721
  %v1723 = vrot.slane %v1722, 2
  %v1724 = vadd.f32 %v1722, %v1723
  %v1725 = vrot.slane %v1724, 1
  %v1726 = vadd.f32 %v1724, %v1725
  %v1727 = vsel %vm644, %v1681, 0.0
  %v1728 = vsel %vm644, %v1682, 0.0
  %v1729 = vadd.f32 %v1727, %v1728
  %v1730 = vrot.slane %v1729, 4
  %v1731 = vadd.f32 %v1729, %v1730
  %v1732 = vrot.slane %v1731, 2
  %v1733 = vadd.f32 %v1731, %v1732
  %v1734 = vrot.slane %v1733, 1
  %v1735 = vadd.f32 %v1733, %v1734
  %v1736 = vsel %vm644, %v1683, 0.0
  %v1737 = vsel %vm644, %v1684, 0.0
  %v1738 = vadd.f32 %v1736, %v1737
  %v1739 = vrot.slane %v1738, 4
  %v1740 = vadd.f32 %v1738, %v1739
  %v1741 = vrot.slane %v1740, 2
  %v1742 = vadd.f32 %v1740, %v1741
  %v1743 = vrot.slane %v1742, 1
  %v1744 = vadd.f32 %v1742, %v1743
  %v1745 = vsel %vm644, %v1685, 0.0
  %v1746 = vsel %vm644, %v1686, 0.0
  %v1747 = vadd.f32 %v1745, %v1746
  %v1748 = vrot.slane %v1747, 4
  %v1749 = vadd.f32 %v1747, %v1748
  %v1750 = vrot.slane %v1749, 2
  %v1751 = vadd.f32 %v1749, %v1750
  %v1752 = vrot.slane %v1751, 1
  %v1753 = vadd.f32 %v1751, %v1752
  %v1754 = vsel %vm644, %v1687, 0.0
  %v1755 = vsel %vm644, %v1688, 0.0
  %v1756 = vadd.f32 %v1754, %v1755
  %v1757 = vrot.slane %v1756, 4
  %v1758 = vadd.f32 %v1756, %v1757
  %v1759 = vrot.slane %v1758, 2
  %v1760 = vadd.f32 %v1758, %v1759
  %v1761 = vrot.slane %v1760, 1
  %v1762 = vadd.f32 %v1760, %v1761
  %v1763 = vsel %vm644, %v1689, 0.0
  %v1764 = vsel %vm644, %v1690, 0.0
  %v1765 = vadd.f32 %v1763, %v1764
  %v1766 = vrot.slane %v1765, 4
  %v1767 = vadd.f32 %v1765, %v1766
  %v1768 = vrot.slane %v1767, 2
  %v1769 = vadd.f32 %v1767, %v1768
  %v1770 = vrot.slane %v1769, 1
  %v1771 = vadd.f32 %v1769, %v1770
  %v1772 = vsel %vm644, %v1691, 0.0
  %v1773 = vsel %vm644, %v1692, 0.0
  %v1774 = vadd.f32 %v1772, %v1773
  %v1775 = vrot.slane %v1774, 4
  %v1776 = vadd.f32 %v1774, %v1775
  %v1777 = vrot.slane %v1776, 2
  %v1778 = vadd.f32 %v1776, %v1777
  %v1779 = vrot.slane %v1778, 1
  %v1780 = vadd.f32 %v1778, %v1779
  %v1781 = vsel %vm644, %v1693, 0.0
  %v1782 = vsel %vm644, %v1694, 0.0
  %v1783 = vadd.f32 %v1781, %v1782
  %v1784 = vrot.slane %v1783, 4
  %v1785 = vadd.f32 %v1783, %v1784
  %v1786 = vrot.slane %v1785, 2
  %v1787 = vadd.f32 %v1785, %v1786
  %v1788 = vrot.slane %v1787, 1
  %v1789 = vadd.f32 %v1787, %v1788
  %v1790 = vsel %vm644, %v1695, 0.0
  %v1791 = vsel %vm644, %v1696, 0.0
  %v1792 = vadd.f32 %v1790, %v1791
  %v1793 = vrot.slane %v1792, 4
  %v1794 = vadd.f32 %v1792, %v1793
  %v1795 = vrot.slane %v1794, 2
  %v1796 = vadd.f32 %v1794, %v1795
  %v1797 = vrot.slane %v1796, 1
  %v1798 = vadd.f32 %v1796, %v1797
  %v1799 = vsel %vm644, %v1697, 0.0
  %v1800 = vsel %vm644, %v1698, 0.0
  %v1801 = vadd.f32 %v1799, %v1800
  %v1802 = vrot.slane %v1801, 4
  %v1803 = vadd.f32 %v1801, %v1802
  %v1804 = vrot.slane %v1803, 2
  %v1805 = vadd.f32 %v1803, %v1804
  %v1806 = vrot.slane %v1805, 1
  %v1807 = vadd.f32 %v1805, %v1806
  %v1808 = vsel %vm644, %v1699, 0.0
  %v1809 = vsel %vm644, %v1700, 0.0
  %v1810 = vadd.f32 %v1808, %v1809
  %v1811 = vrot.slane %v1810, 4
  %v1812 = vadd.f32 %v1810, %v1811
  %v1813 = vrot.slane %v1812, 2
  %v1814 = vadd.f32 %v1812, %v1813
  %v1815 = vrot.slane %v1814, 1
  %v1816 = vadd.f32 %v1814, %v1815
  %v1817 = vsel %vm644, %v1701, 0.0
  %v1818 = vsel %vm644, %v1702, 0.0
  %v1819 = vadd.f32 %v1817, %v1818
  %v1820 = vrot.slane %v1819, 4
  %v1821 = vadd.f32 %v1819, %v1820
  %v1822 = vrot.slane %v1821, 2
  %v1823 = vadd.f32 %v1821, %v1822
  %v1824 = vrot.slane %v1823, 1
  %v1825 = vadd.f32 %v1823, %v1824
  %v1826 = vsel %vm644, %v1703, 0.0
  %v1827 = vsel %vm644, %v1704, 0.0
  %v1828 = vadd.f32 %v1826, %v1827
  %v1829 = vrot.slane %v1828, 4
  %v1830 = vadd.f32 %v1828, %v1829
  %v1831 = vrot.slane %v1830, 2
  %v1832 = vadd.f32 %v1830, %v1831
  %v1833 = vrot.slane %v1832, 1
  %v1834 = vadd.f32 %v1832, %v1833
  %v1835 = vsel %vm644, %v1705, 0.0
  %v1836 = vsel %vm644, %v1706, 0.0
  %v1837 = vadd.f32 %v1835, %v1836
  %v1838 = vrot.slane %v1837, 4
  %v1839 = vadd.f32 %v1837, %v1838
  %v1840 = vrot.slane %v1839, 2
  %v1841 = vadd.f32 %v1839, %v1840
  %v1842 = vrot.slane %v1841, 1
  %v1843 = vadd.f32 %v1841, %v1842
  %v1844 = vsel %vm644, %v1707, 0.0
  %v1845 = vsel %vm644, %v1708, 0.0
  %v1846 = vadd.f32 %v1844, %v1845
  %v1847 = vrot.slane %v1846, 4
  %v1848 = vadd.f32 %v1846, %v1847
  %v1849 = vrot.slane %v1848, 2
  %v1850 = vadd.f32 %v1848, %v1849
  %v1851 = vrot.slane %v1850, 1
  %v1852 = vadd.f32 %v1850, %v1851
  %v1853 = vld [vmem:[%s7] sm:$0x1]
  %v1854 = vld [vmem:[%s8] sm:$0x1]
  %vm1871 = vcmask 1041409
  %v1872 = vsel %vm1871, %v1726, %v1717
  %vm1873 = vcmask 1042434
  %v1874 = vsel %vm1873, %v1735, %v1872
  %vm1875 = vcmask 1043459
  %v1876 = vsel %vm1875, %v1744, %v1874
  %vm1877 = vcmask 1044484
  %v1878 = vsel %vm1877, %v1753, %v1876
  %vm1879 = vcmask 1045509
  %v1880 = vsel %vm1879, %v1762, %v1878
  %vm1881 = vcmask 1046534
  %v1882 = vsel %vm1881, %v1771, %v1880
  %vm1883 = vcmask 1047559
  %v1884 = vsel %vm1883, %v1780, %v1882
  %v1885 = vsel %vm1871, %v1798, %v1789
  %v1886 = vsel %vm1873, %v1807, %v1885
  %v1887 = vsel %vm1875, %v1816, %v1886
  %v1888 = vsel %vm1877, %v1825, %v1887
  %v1889 = vsel %vm1879, %v1834, %v1888
  %v1890 = vsel %vm1881, %v1843, %v1889
  %v1891 = vsel %vm1883, %v1852, %v1890
  %v1894 = vsel %vm644, %v1884, 0.0
  %1895 = vadd.xlane.f32.xlu0 %v1894
  %v1896 = vpop.xlane.xlu0 %1895
  %v1897 = vsel %vm644, %v1891, 0.0
  %1898 = vadd.xlane.f32.xlu0 %v1897
  %v1899 = vpop.xlane.xlu0 %1898
  %v1900 = vrcp.pop 32.0
  %v1901 = vmul.f32 32.0, %v1900
  %v1902 = vsub.f32 1.0, %v1901
  %v1903 = vmul.f32 %v1900, %v1902
  %v1904 = vadd.f32 %v1900, %v1903
  %vm1905 = vweird.f32 %v1900
  %v1906 = vsel %vm1905, %v1900, %v1904
  %v1907 = vmul.f32 %v1896, %v1906
  %v1908 = vmul.f32 %v1899, %v1906
  %v1911 = vrot.slane %v1907, 1
  %v1912 = vrot.slane %v1907, 2
  %v1913 = vrot.slane %v1907, 3
  %v1914 = vrot.slane %v1907, 4
  %v1915 = vrot.slane %v1907, 5
  %v1916 = vrot.slane %v1907, 6
  %v1917 = vrot.slane %v1907, 7
  %v1918 = vrot.slane %v1908, 1
  %v1919 = vrot.slane %v1908, 2
  %v1920 = vrot.slane %v1908, 3
  %v1921 = vrot.slane %v1908, 4
  %v1922 = vrot.slane %v1908, 5
  %v1923 = vrot.slane %v1908, 6
  %v1924 = vrot.slane %v1908, 7
  %v1941 = vsub.f32 %v1717, %v1907
  %v1942 = vsub.f32 %v1726, %v1911
  %v1943 = vsub.f32 %v1735, %v1912
  %v1944 = vsub.f32 %v1744, %v1913
  %v1945 = vsub.f32 %v1753, %v1914
  %v1946 = vsub.f32 %v1762, %v1915
  %v1947 = vsub.f32 %v1771, %v1916
  %v1948 = vsub.f32 %v1780, %v1917
  %v1949 = vsub.f32 %v1789, %v1908
  %v1950 = vsub.f32 %v1798, %v1918
  %v1951 = vsub.f32 %v1807, %v1919
  %v1952 = vsub.f32 %v1816, %v1920
  %v1953 = vsub.f32 %v1825, %v1921
  %v1954 = vsub.f32 %v1834, %v1922
  %v1955 = vsub.f32 %v1843, %v1923
  %v1956 = vsub.f32 %v1852, %v1924
  %v1957 = vmul.f32 %v1941, %v1941
  %v1958 = vmul.f32 %v1942, %v1942
  %v1959 = vmul.f32 %v1943, %v1943
  %v1960 = vmul.f32 %v1944, %v1944
  %v1961 = vmul.f32 %v1945, %v1945
  %v1962 = vmul.f32 %v1946, %v1946
  %v1963 = vmul.f32 %v1947, %v1947
  %v1964 = vmul.f32 %v1948, %v1948
  %v1965 = vmul.f32 %v1949, %v1949
  %v1966 = vmul.f32 %v1950, %v1950
  %v1967 = vmul.f32 %v1951, %v1951
  %v1968 = vmul.f32 %v1952, %v1952
  %v1969 = vmul.f32 %v1953, %v1953
  %v1970 = vmul.f32 %v1954, %v1954
  %v1971 = vmul.f32 %v1955, %v1955
  %v1972 = vmul.f32 %v1956, %v1956
  %v1989 = vrot.slane %v1958, 7
  %v1990 = vsel %vm1871, %v1989, %v1957
  %v1991 = vrot.slane %v1959, 6
  %v1992 = vsel %vm1873, %v1991, %v1990
  %v1993 = vrot.slane %v1960, 5
  %v1994 = vsel %vm1875, %v1993, %v1992
  %v1995 = vrot.slane %v1961, 4
  %v1996 = vsel %vm1877, %v1995, %v1994
  %v1997 = vrot.slane %v1962, 3
  %v1998 = vsel %vm1879, %v1997, %v1996
  %v1999 = vrot.slane %v1963, 2
  %v2000 = vsel %vm1881, %v1999, %v1998
  %v2001 = vrot.slane %v1964, 1
  %v2002 = vsel %vm1883, %v2001, %v2000
  %v2003 = vrot.slane %v1966, 7
  %v2004 = vsel %vm1871, %v2003, %v1965
  %v2005 = vrot.slane %v1967, 6
  %v2006 = vsel %vm1873, %v2005, %v2004
  %v2007 = vrot.slane %v1968, 5
  %v2008 = vsel %vm1875, %v2007, %v2006
  %v2009 = vrot.slane %v1969, 4
  %v2010 = vsel %vm1877, %v2009, %v2008
  %v2011 = vrot.slane %v1970, 3
  %v2012 = vsel %vm1879, %v2011, %v2010
  %v2013 = vrot.slane %v1971, 2
  %v2014 = vsel %vm1881, %v2013, %v2012
  %v2015 = vrot.slane %v1972, 1
  %v2016 = vsel %vm1883, %v2015, %v2014
  %v2019 = vsel %vm644, %v2002, 0.0
  %2020 = vadd.xlane.f32.xlu0 %v2019
  %v2021 = vpop.xlane.xlu0 %2020
  %v2022 = vsel %vm644, %v2016, 0.0
  %2023 = vadd.xlane.f32.xlu0 %v2022
  %v2024 = vpop.xlane.xlu0 %2023
  %v2025 = vmul.f32 %v2021, %v1906
  %v2026 = vmul.f32 %v2024, %v1906
  %v2027 = vadd.f32 %v2025, 1e-05
  %v2028 = vadd.f32 %v2026, 1e-05
  %v2029 = vrsqrt.pop %v2027
  %v2030 = vmul.f32 %v2029, %v2027
  %v2031 = vmul.f32 %v2030, %v2029
  %v2032 = vmul.f32 0.5, %v2031
  %v2033 = vsub.f32 1.5, %v2032
  %v2034 = vmul.f32 %v2029, %v2033
  %vm2035 = vweird.f32 %v2027
  %vm2036 = vweird.f32 %v2029
  %vm2037 = vmor %vm2035, %vm2036
  %v2038 = vsel %vm2037, %v2029, %v2034
  %v2039 = vrsqrt.pop %v2028
  %v2040 = vmul.f32 %v2039, %v2028
  %v2041 = vmul.f32 %v2040, %v2039
  %v2042 = vmul.f32 0.5, %v2041
  %v2043 = vsub.f32 1.5, %v2042
  %v2044 = vmul.f32 %v2039, %v2043
  %vm2045 = vweird.f32 %v2028
  %vm2046 = vweird.f32 %v2039
  %vm2047 = vmor %vm2045, %vm2046
  %v2048 = vsel %vm2047, %v2039, %v2044
  %v2051 = vrot.slane %v2038, 1
  %v2052 = vrot.slane %v2038, 2
  %v2053 = vrot.slane %v2038, 3
  %v2054 = vrot.slane %v2038, 4
  %v2055 = vrot.slane %v2038, 5
  %v2056 = vrot.slane %v2038, 6
  %v2057 = vrot.slane %v2038, 7
  %v2058 = vrot.slane %v2048, 1
  %v2059 = vrot.slane %v2048, 2
  %v2060 = vrot.slane %v2048, 3
  %v2061 = vrot.slane %v2048, 4
  %v2062 = vrot.slane %v2048, 5
  %v2063 = vrot.slane %v2048, 6
  %v2064 = vrot.slane %v2048, 7
  %v2081 = vmul.f32 %v1941, %v2038
  %v2082 = vmul.f32 %v1942, %v2051
  %v2083 = vmul.f32 %v1943, %v2052
  %v2084 = vmul.f32 %v1944, %v2053
  %v2085 = vmul.f32 %v1945, %v2054
  %v2086 = vmul.f32 %v1946, %v2055
  %v2087 = vmul.f32 %v1947, %v2056
  %v2088 = vmul.f32 %v1948, %v2057
  %v2089 = vmul.f32 %v1949, %v2048
  %v2090 = vmul.f32 %v1950, %v2058
  %v2091 = vmul.f32 %v1951, %v2059
  %v2092 = vmul.f32 %v1952, %v2060
  %v2093 = vmul.f32 %v1953, %v2061
  %v2094 = vmul.f32 %v1954, %v2062
  %v2095 = vmul.f32 %v1955, %v2063
  %v2096 = vmul.f32 %v1956, %v2064
  %v2098 = vperm.slane %v1853, 0
  %v2100 = vmul.f32 %v2081, %v2098
  %v2101 = vmul.f32 %v2082, %v2098
  %v2102 = vmul.f32 %v2083, %v2098
  %v2103 = vmul.f32 %v2084, %v2098
  %v2104 = vmul.f32 %v2085, %v2098
  %v2105 = vmul.f32 %v2086, %v2098
  %v2106 = vmul.f32 %v2087, %v2098
  %v2107 = vmul.f32 %v2088, %v2098
  %v2108 = vmul.f32 %v2089, %v2098
  %v2109 = vmul.f32 %v2090, %v2098
  %v2110 = vmul.f32 %v2091, %v2098
  %v2111 = vmul.f32 %v2092, %v2098
  %v2112 = vmul.f32 %v2093, %v2098
  %v2113 = vmul.f32 %v2094, %v2098
  %v2114 = vmul.f32 %v2095, %v2098
  %v2115 = vmul.f32 %v2096, %v2098
  %v2117 = vperm.slane %v1854, 0
  %v2119 = vadd.f32 %v2100, %v2117
  %v2120 = vadd.f32 %v2101, %v2117
  %v2121 = vadd.f32 %v2102, %v2117
  %v2122 = vadd.f32 %v2103, %v2117
  %v2123 = vadd.f32 %v2104, %v2117
  %v2124 = vadd.f32 %v2105, %v2117
  %v2125 = vadd.f32 %v2106, %v2117
  %v2126 = vadd.f32 %v2107, %v2117
  %v2127 = vadd.f32 %v2108, %v2117
  %v2128 = vadd.f32 %v2109, %v2117
  %v2129 = vadd.f32 %v2110, %v2117
  %v2130 = vadd.f32 %v2111, %v2117
  %v2131 = vadd.f32 %v2112, %v2117
  %v2132 = vadd.f32 %v2113, %v2117
  %v2133 = vadd.f32 %v2114, %v2117
  %v2134 = vadd.f32 %v2115, %v2117
  %v2135 = vmax.f32 %v2119, 0.0
  %v2136 = vmax.f32 %v2120, 0.0
  %v2137 = vmax.f32 %v2121, 0.0
  %v2138 = vmax.f32 %v2122, 0.0
  %v2139 = vmax.f32 %v2123, 0.0
  %v2140 = vmax.f32 %v2124, 0.0
  %v2141 = vmax.f32 %v2125, 0.0
  %v2142 = vmax.f32 %v2126, 0.0
  %v2143 = vmax.f32 %v2127, 0.0
  %v2144 = vmax.f32 %v2128, 0.0
  %v2145 = vmax.f32 %v2129, 0.0
  %v2146 = vmax.f32 %v2130, 0.0
  %v2147 = vmax.f32 %v2131, 0.0
  %v2148 = vmax.f32 %v2132, 0.0
  %v2149 = vmax.f32 %v2133, 0.0
  %v2150 = vmax.f32 %v2134, 0.0
  %v2151 = vld [vmem:[%s9] sm:$0xff]
  %v2152 = vld [vmem:[%s9 + $0x8] sm:$0xff]
  %v2153 = vld [vmem:[%s9 + $0x10] sm:$0xff]
  %v2154 = vld [vmem:[%s9 + $0x18] sm:$0xff]
  %v2171 = vrot.slane %v2136, 7
  %v2172 = vsel %vm1871, %v2171, %v2135
  %v2173 = vrot.slane %v2137, 6
  %v2174 = vsel %vm1873, %v2173, %v2172
  %v2175 = vrot.slane %v2138, 5
  %v2176 = vsel %vm1875, %v2175, %v2174
  %v2177 = vrot.slane %v2139, 4
  %v2178 = vsel %vm1877, %v2177, %v2176
  %v2179 = vrot.slane %v2140, 3
  %v2180 = vsel %vm1879, %v2179, %v2178
  %v2181 = vrot.slane %v2141, 2
  %v2182 = vsel %vm1881, %v2181, %v2180
  %v2183 = vrot.slane %v2142, 1
  %v2184 = vsel %vm1883, %v2183, %v2182
  %v2185 = vrot.slane %v2144, 7
  %v2186 = vsel %vm1871, %v2185, %v2143
  %v2187 = vrot.slane %v2145, 6
  %v2188 = vsel %vm1873, %v2187, %v2186
  %v2189 = vrot.slane %v2146, 5
  %v2190 = vsel %vm1875, %v2189, %v2188
  %v2191 = vrot.slane %v2147, 4
  %v2192 = vsel %vm1877, %v2191, %v2190
  %v2193 = vrot.slane %v2148, 3
  %v2194 = vsel %vm1879, %v2193, %v2192
  %v2195 = vrot.slane %v2149, 2
  %v2196 = vsel %vm1881, %v2195, %v2194
  %v2197 = vrot.slane %v2150, 1
  %v2198 = vsel %vm1883, %v2197, %v2196
  %v2199 = vsel %vm644, %v2184, 0
  %v2201 = vsel %vm644, %v2198, 0
  %2203 = vmatpush.msra.mxu0 0.0
  %2204 = vmatpush.msra.mxu0 0.0
  %2205 = vmatpush.msra.mxu0 0.0
  %2206 = vmatpush.msra.mxu0 0.0
  %2207 = vmatpush.msra.mxu0 0.0
  %2208 = vmatpush.msra.mxu0 0.0
  %2209 = vmatpush.msra.mxu0 0.0
  %2210 = vmatpush.msra.mxu0 0.0
  %2211 = vmatpush.msra.mxu0 0.0
  %2212 = vmatpush.msra.mxu0 0.0
  %2213 = vmatpush.msra.mxu0 0.0
  %2214 = vmatpush.msra.mxu0 0.0
  %2215 = vmatpush.msra.mxu0 %v2154
  %2216 = vmatpush.msra.mxu0 %v2153
  %2217 = vmatpush.msra.mxu0 %v2152
  %2218 = vmatpush.msra.mxu0 %v2151
  %2219 = vmatmul.f32.gmra.mxu0 %v2199
  %v2220 = vpop.f32.mrf.mxu0
  %v2221 = vadd.f32 0.0, %v2220
  %2222 = vmatmul.f32.gmra.mxu0 %v2201
  %v2223 = vpop.f32.mrf.mxu0
  %v2224 = vadd.f32 0.0, %v2223
  %2225 = vdwg.mxu0
  %v2228 = vrot.slane %v2221, 1
  %v2229 = vrot.slane %v2221, 2
  %v2230 = vrot.slane %v2221, 3
  %v2231 = vrot.slane %v2221, 4
  %v2232 = vrot.slane %v2221, 5
  %v2233 = vrot.slane %v2221, 6
  %v2234 = vrot.slane %v2221, 7
  %v2235 = vrot.slane %v2224, 1
  %v2236 = vrot.slane %v2224, 2
  %v2237 = vrot.slane %v2224, 3
  %v2238 = vrot.slane %v2224, 4
  %v2239 = vrot.slane %v2224, 5
  %v2240 = vrot.slane %v2224, 6
  %v2241 = vrot.slane %v2224, 7
  %v2242 = vperm.slane %v2221, 0
  %v2243 = vperm.slane %v2228, 0
  %v2244 = vperm.slane %v2229, 0
  %v2245 = vperm.slane %v2230, 0
  %v2246 = vperm.slane %v2231, 0
  %v2247 = vperm.slane %v2232, 0
  %v2248 = vperm.slane %v2233, 0
  %v2249 = vperm.slane %v2234, 0
  %v2250 = vperm.slane %v2224, 0
  %v2251 = vperm.slane %v2235, 0
  %v2252 = vperm.slane %v2236, 0
  %v2253 = vperm.slane %v2237, 0
  %v2254 = vperm.slane %v2238, 0
  %v2255 = vperm.slane %v2239, 0
  %v2256 = vperm.slane %v2240, 0
  %v2257 = vperm.slane %v2241, 0
  %2274 = vrot.lane.b32.xlu0 %v2221, 32
  %v2275 = vpop.permute.xlu0 %2274
  %2276 = vrot.lane.b32.xlu0 %v2224, 32
  %v2277 = vpop.permute.xlu0 %2276
  %v2280 = vadd.f32 %v2242, %v2275
  %v2281 = vadd.f32 %v2242, %v2277
  %v2282 = vadd.f32 %v2243, %v2275
  %v2283 = vadd.f32 %v2243, %v2277
  %v2284 = vadd.f32 %v2244, %v2275
  %v2285 = vadd.f32 %v2244, %v2277
  %v2286 = vadd.f32 %v2245, %v2275
  %v2287 = vadd.f32 %v2245, %v2277
  %v2288 = vadd.f32 %v2246, %v2275
  %v2289 = vadd.f32 %v2246, %v2277
  %v2290 = vadd.f32 %v2247, %v2275
  %v2291 = vadd.f32 %v2247, %v2277
  %v2292 = vadd.f32 %v2248, %v2275
  %v2293 = vadd.f32 %v2248, %v2277
  %v2294 = vadd.f32 %v2249, %v2275
  %v2295 = vadd.f32 %v2249, %v2277
  %v2296 = vadd.f32 %v2250, %v2275
  %v2297 = vadd.f32 %v2250, %v2277
  %v2298 = vadd.f32 %v2251, %v2275
  %v2299 = vadd.f32 %v2251, %v2277
  %v2300 = vadd.f32 %v2252, %v2275
  %v2301 = vadd.f32 %v2252, %v2277
  %v2302 = vadd.f32 %v2253, %v2275
  %v2303 = vadd.f32 %v2253, %v2277
  %v2304 = vadd.f32 %v2254, %v2275
  %v2305 = vadd.f32 %v2254, %v2277
  %v2306 = vadd.f32 %v2255, %v2275
  %v2307 = vadd.f32 %v2255, %v2277
  %v2308 = vadd.f32 %v2256, %v2275
  %v2309 = vadd.f32 %v2256, %v2277
  %v2310 = vadd.f32 %v2257, %v2275
  %v2311 = vadd.f32 %v2257, %v2277
  %vm2312 = vcmp.gt.f32.partialorder %v2280, 0.0
  %vm2313 = vcmp.gt.f32.partialorder %v2281, 0.0
  %vm2314 = vcmp.gt.f32.partialorder %v2282, 0.0
  %vm2315 = vcmp.gt.f32.partialorder %v2283, 0.0
  %vm2316 = vcmp.gt.f32.partialorder %v2284, 0.0
  %vm2317 = vcmp.gt.f32.partialorder %v2285, 0.0
  %vm2318 = vcmp.gt.f32.partialorder %v2286, 0.0
  %vm2319 = vcmp.gt.f32.partialorder %v2287, 0.0
  %vm2320 = vcmp.gt.f32.partialorder %v2288, 0.0
  %vm2321 = vcmp.gt.f32.partialorder %v2289, 0.0
  %vm2322 = vcmp.gt.f32.partialorder %v2290, 0.0
  %vm2323 = vcmp.gt.f32.partialorder %v2291, 0.0
  %vm2324 = vcmp.gt.f32.partialorder %v2292, 0.0
  %vm2325 = vcmp.gt.f32.partialorder %v2293, 0.0
  %vm2326 = vcmp.gt.f32.partialorder %v2294, 0.0
  %vm2327 = vcmp.gt.f32.partialorder %v2295, 0.0
  %vm2328 = vcmp.gt.f32.partialorder %v2296, 0.0
  %vm2329 = vcmp.gt.f32.partialorder %v2297, 0.0
  %vm2330 = vcmp.gt.f32.partialorder %v2298, 0.0
  %vm2331 = vcmp.gt.f32.partialorder %v2299, 0.0
  %vm2332 = vcmp.gt.f32.partialorder %v2300, 0.0
  %vm2333 = vcmp.gt.f32.partialorder %v2301, 0.0
  %vm2334 = vcmp.gt.f32.partialorder %v2302, 0.0
  %vm2335 = vcmp.gt.f32.partialorder %v2303, 0.0
  %vm2336 = vcmp.gt.f32.partialorder %v2304, 0.0
  %vm2337 = vcmp.gt.f32.partialorder %v2305, 0.0
  %vm2338 = vcmp.gt.f32.partialorder %v2306, 0.0
  %vm2339 = vcmp.gt.f32.partialorder %v2307, 0.0
  %vm2340 = vcmp.gt.f32.partialorder %v2308, 0.0
  %vm2341 = vcmp.gt.f32.partialorder %v2309, 0.0
  %vm2342 = vcmp.gt.f32.partialorder %v2310, 0.0
  %vm2343 = vcmp.gt.f32.partialorder %v2311, 0.0
  %v2344 = vmul.f32 %v2280, 0.2
  %v2345 = vmul.f32 %v2281, 0.2
  %v2346 = vmul.f32 %v2282, 0.2
  %v2347 = vmul.f32 %v2283, 0.2
  %v2348 = vmul.f32 %v2284, 0.2
  %v2349 = vmul.f32 %v2285, 0.2
  %v2350 = vmul.f32 %v2286, 0.2
  %v2351 = vmul.f32 %v2287, 0.2
  %v2352 = vmul.f32 %v2288, 0.2
  %v2353 = vmul.f32 %v2289, 0.2
  %v2354 = vmul.f32 %v2290, 0.2
  %v2355 = vmul.f32 %v2291, 0.2
  %v2356 = vmul.f32 %v2292, 0.2
  %v2357 = vmul.f32 %v2293, 0.2
  %v2358 = vmul.f32 %v2294, 0.2
  %v2359 = vmul.f32 %v2295, 0.2
  %v2360 = vmul.f32 %v2296, 0.2
  %v2361 = vmul.f32 %v2297, 0.2
  %v2362 = vmul.f32 %v2298, 0.2
  %v2363 = vmul.f32 %v2299, 0.2
  %v2364 = vmul.f32 %v2300, 0.2
  %v2365 = vmul.f32 %v2301, 0.2
  %v2366 = vmul.f32 %v2302, 0.2
  %v2367 = vmul.f32 %v2303, 0.2
  %v2368 = vmul.f32 %v2304, 0.2
  %v2369 = vmul.f32 %v2305, 0.2
  %v2370 = vmul.f32 %v2306, 0.2
  %v2371 = vmul.f32 %v2307, 0.2
  %v2372 = vmul.f32 %v2308, 0.2
  %v2373 = vmul.f32 %v2309, 0.2
  %v2374 = vmul.f32 %v2310, 0.2
  %v2375 = vmul.f32 %v2311, 0.2
  %v2376 = vsel %vm2312, %v2280, %v2344
  %v2377 = vsel %vm2313, %v2281, %v2345
  %v2378 = vsel %vm2314, %v2282, %v2346
  %v2379 = vsel %vm2315, %v2283, %v2347
  %v2380 = vsel %vm2316, %v2284, %v2348
  %v2381 = vsel %vm2317, %v2285, %v2349
  %v2382 = vsel %vm2318, %v2286, %v2350
  %v2383 = vsel %vm2319, %v2287, %v2351
  %v2384 = vsel %vm2320, %v2288, %v2352
  %v2385 = vsel %vm2321, %v2289, %v2353
  %v2386 = vsel %vm2322, %v2290, %v2354
  %v2387 = vsel %vm2323, %v2291, %v2355
  %v2388 = vsel %vm2324, %v2292, %v2356
  %v2389 = vsel %vm2325, %v2293, %v2357
  %v2390 = vsel %vm2326, %v2294, %v2358
  %v2391 = vsel %vm2327, %v2295, %v2359
  %v2392 = vsel %vm2328, %v2296, %v2360
  %v2393 = vsel %vm2329, %v2297, %v2361
  %v2394 = vsel %vm2330, %v2298, %v2362
  %v2395 = vsel %vm2331, %v2299, %v2363
  %v2396 = vsel %vm2332, %v2300, %v2364
  %v2397 = vsel %vm2333, %v2301, %v2365
  %v2398 = vsel %vm2334, %v2302, %v2366
  %v2399 = vsel %vm2335, %v2303, %v2367
  %v2400 = vsel %vm2336, %v2304, %v2368
  %v2401 = vsel %vm2337, %v2305, %v2369
  %v2402 = vsel %vm2338, %v2306, %v2370
  %v2403 = vsel %vm2339, %v2307, %v2371
  %v2404 = vsel %vm2340, %v2308, %v2372
  %v2405 = vsel %vm2341, %v2309, %v2373
  %v2406 = vsel %vm2342, %v2310, %v2374
  %v2407 = vsel %vm2343, %v2311, %v2375
  %v2408 = vld [vmem:[%s10] sm:$0xff]
  %v2409 = vld [vmem:[%s10 + $0x8] sm:$0xff]
  %v2410 = vld [vmem:[%s10 + $0x10] sm:$0xff]
  %v2411 = vld [vmem:[%s10 + $0x18] sm:$0xff]
  %2444 = vrot.lane.b32.xlu0 %v2376, 96
  %v2445 = vpop.permute.xlu0 %2444
  %2446 = vrot.lane.b32.xlu0 %v2377, 96
  %v2447 = vpop.permute.xlu0 %2446
  %2448 = vrot.lane.b32.xlu0 %v2378, 96
  %v2449 = vpop.permute.xlu0 %2448
  %2450 = vrot.lane.b32.xlu0 %v2379, 96
  %v2451 = vpop.permute.xlu0 %2450
  %2452 = vrot.lane.b32.xlu0 %v2380, 96
  %v2453 = vpop.permute.xlu0 %2452
  %2454 = vrot.lane.b32.xlu0 %v2381, 96
  %v2455 = vpop.permute.xlu0 %2454
  %2456 = vrot.lane.b32.xlu0 %v2382, 96
  %v2457 = vpop.permute.xlu0 %2456
  %2458 = vrot.lane.b32.xlu0 %v2383, 96
  %v2459 = vpop.permute.xlu0 %2458
  %2460 = vrot.lane.b32.xlu0 %v2384, 96
  %v2461 = vpop.permute.xlu0 %2460
  %2462 = vrot.lane.b32.xlu0 %v2385, 96
  %v2463 = vpop.permute.xlu0 %2462
  %2464 = vrot.lane.b32.xlu0 %v2386, 96
  %v2465 = vpop.permute.xlu0 %2464
  %2466 = vrot.lane.b32.xlu0 %v2387, 96
  %v2467 = vpop.permute.xlu0 %2466
  %2468 = vrot.lane.b32.xlu0 %v2388, 96
  %v2469 = vpop.permute.xlu0 %2468
  %2470 = vrot.lane.b32.xlu0 %v2389, 96
  %v2471 = vpop.permute.xlu0 %2470
  %2472 = vrot.lane.b32.xlu0 %v2390, 96
  %v2473 = vpop.permute.xlu0 %2472
  %2474 = vrot.lane.b32.xlu0 %v2391, 96
  %v2475 = vpop.permute.xlu0 %2474
  %2476 = vrot.lane.b32.xlu0 %v2392, 96
  %v2477 = vpop.permute.xlu0 %2476
  %2478 = vrot.lane.b32.xlu0 %v2393, 96
  %v2479 = vpop.permute.xlu0 %2478
  %2480 = vrot.lane.b32.xlu0 %v2394, 96
  %v2481 = vpop.permute.xlu0 %2480
  %2482 = vrot.lane.b32.xlu0 %v2395, 96
  %v2483 = vpop.permute.xlu0 %2482
  %2484 = vrot.lane.b32.xlu0 %v2396, 96
  %v2485 = vpop.permute.xlu0 %2484
  %2486 = vrot.lane.b32.xlu0 %v2397, 96
  %v2487 = vpop.permute.xlu0 %2486
  %2488 = vrot.lane.b32.xlu0 %v2398, 96
  %v2489 = vpop.permute.xlu0 %2488
  %2490 = vrot.lane.b32.xlu0 %v2399, 96
  %v2491 = vpop.permute.xlu0 %2490
  %2492 = vrot.lane.b32.xlu0 %v2400, 96
  %v2493 = vpop.permute.xlu0 %2492
  %2494 = vrot.lane.b32.xlu0 %v2401, 96
  %v2495 = vpop.permute.xlu0 %2494
  %2496 = vrot.lane.b32.xlu0 %v2402, 96
  %v2497 = vpop.permute.xlu0 %2496
  %2498 = vrot.lane.b32.xlu0 %v2403, 96
  %v2499 = vpop.permute.xlu0 %2498
  %2500 = vrot.lane.b32.xlu0 %v2404, 96
  %v2501 = vpop.permute.xlu0 %2500
  %2502 = vrot.lane.b32.xlu0 %v2405, 96
  %v2503 = vpop.permute.xlu0 %2502
  %2504 = vrot.lane.b32.xlu0 %v2406, 96
  %v2505 = vpop.permute.xlu0 %2504
  %2506 = vrot.lane.b32.xlu0 %v2407, 96
  %v2507 = vpop.permute.xlu0 %2506
  %v2508 = vsel %vm644, %v2445, 0
  %v2510 = vsel %vm644, %v2447, 0
  %v2512 = vsel %vm644, %v2449, 0
  %v2514 = vsel %vm644, %v2451, 0
  %v2516 = vsel %vm644, %v2453, 0
  %v2518 = vsel %vm644, %v2455, 0
  %v2520 = vsel %vm644, %v2457, 0
  %v2522 = vsel %vm644, %v2459, 0
  %v2524 = vsel %vm644, %v2461, 0
  %v2526 = vsel %vm644, %v2463, 0
  %v2528 = vsel %vm644, %v2465, 0
  %v2530 = vsel %vm644, %v2467, 0
  %v2532 = vsel %vm644, %v2469, 0
  %v2534 = vsel %vm644, %v2471, 0
  %v2536 = vsel %vm644, %v2473, 0
  %v2538 = vsel %vm644, %v2475, 0
  %v2540 = vsel %vm644, %v2477, 0
  %v2542 = vsel %vm644, %v2479, 0
  %v2544 = vsel %vm644, %v2481, 0
  %v2546 = vsel %vm644, %v2483, 0
  %v2548 = vsel %vm644, %v2485, 0
  %v2550 = vsel %vm644, %v2487, 0
  %v2552 = vsel %vm644, %v2489, 0
  %v2554 = vsel %vm644, %v2491, 0
  %v2556 = vsel %vm644, %v2493, 0
  %v2558 = vsel %vm644, %v2495, 0
  %v2560 = vsel %vm644, %v2497, 0
  %v2562 = vsel %vm644, %v2499, 0
  %v2564 = vsel %vm644, %v2501, 0
  %v2566 = vsel %vm644, %v2503, 0
  %v2568 = vsel %vm644, %v2505, 0
  %v2570 = vsel %vm644, %v2507, 0
  %2572 = vmatpush.msra.mxu0 0.0
  %2573 = vmatpush.msra.mxu0 0.0
  %2574 = vmatpush.msra.mxu0 0.0
  %2575 = vmatpush.msra.mxu0 0.0
  %2576 = vmatpush.msra.mxu0 0.0
  %2577 = vmatpush.msra.mxu0 0.0
  %2578 = vmatpush.msra.mxu0 0.0
  %2579 = vmatpush.msra.mxu0 0.0
  %2580 = vmatpush.msra.mxu0 0.0
  %2581 = vmatpush.msra.mxu0 0.0
  %2582 = vmatpush.msra.mxu0 0.0
  %2583 = vmatpush.msra.mxu0 0.0
  %2584 = vmatpush.msra.mxu0 %v2411
  %2585 = vmatpush.msra.mxu0 %v2410
  %2586 = vmatpush.msra.mxu0 %v2409
  %2587 = vmatpush.msra.mxu0 %v2408
  %2588 = vmatmul.f32.gmra.mxu0 %v2508
  %v2589 = vpop.f32.mrf.mxu0
  %v2590 = vadd.f32 %v391, %v2589
  %2591 = vmatmul.f32.gmra.mxu0 %v2510
  %v2592 = vpop.f32.mrf.mxu0
  %v2593 = vadd.f32 %v396, %v2592
  %2594 = vmatmul.f32.gmra.mxu0 %v2512
  %v2595 = vpop.f32.mrf.mxu0
  %v2596 = vadd.f32 %v401, %v2595
  %2597 = vmatmul.f32.gmra.mxu0 %v2514
  %v2598 = vpop.f32.mrf.mxu0
  %v2599 = vadd.f32 %v406, %v2598
  %2600 = vmatmul.f32.gmra.mxu0 %v2516
  %v2601 = vpop.f32.mrf.mxu0
  %v2602 = vadd.f32 %v411, %v2601
  %2603 = vmatmul.f32.gmra.mxu0 %v2518
  %v2604 = vpop.f32.mrf.mxu0
  %v2605 = vadd.f32 %v416, %v2604
  %2606 = vmatmul.f32.gmra.mxu0 %v2520
  %v2607 = vpop.f32.mrf.mxu0
  %v2608 = vadd.f32 %v421, %v2607
  %2609 = vmatmul.f32.gmra.mxu0 %v2522
  %v2610 = vpop.f32.mrf.mxu0
  %v2611 = vadd.f32 %v426, %v2610
  %2612 = vmatmul.f32.gmra.mxu0 %v2524
  %v2613 = vpop.f32.mrf.mxu0
  %v2614 = vadd.f32 %v431, %v2613
  %2615 = vmatmul.f32.gmra.mxu0 %v2526
  %v2616 = vpop.f32.mrf.mxu0
  %v2617 = vadd.f32 %v436, %v2616
  %2618 = vmatmul.f32.gmra.mxu0 %v2528
  %v2619 = vpop.f32.mrf.mxu0
  %v2620 = vadd.f32 %v441, %v2619
  %2621 = vmatmul.f32.gmra.mxu0 %v2530
  %v2622 = vpop.f32.mrf.mxu0
  %v2623 = vadd.f32 %v446, %v2622
  %2624 = vmatmul.f32.gmra.mxu0 %v2532
  %v2625 = vpop.f32.mrf.mxu0
  %v2626 = vadd.f32 %v451, %v2625
  %2627 = vmatmul.f32.gmra.mxu0 %v2534
  %v2628 = vpop.f32.mrf.mxu0
  %v2629 = vadd.f32 %v456, %v2628
  %2630 = vmatmul.f32.gmra.mxu0 %v2536
  %v2631 = vpop.f32.mrf.mxu0
  %v2632 = vadd.f32 %v461, %v2631
  %2633 = vmatmul.f32.gmra.mxu0 %v2538
  %v2634 = vpop.f32.mrf.mxu0
  %v2635 = vadd.f32 %v466, %v2634
  %2636 = vmatmul.f32.gmra.mxu0 %v2540
  %v2637 = vpop.f32.mrf.mxu0
  %v2638 = vadd.f32 %v471, %v2637
  %2639 = vmatmul.f32.gmra.mxu0 %v2542
  %v2640 = vpop.f32.mrf.mxu0
  %v2641 = vadd.f32 %v476, %v2640
  %2642 = vmatmul.f32.gmra.mxu0 %v2544
  %v2643 = vpop.f32.mrf.mxu0
  %v2644 = vadd.f32 %v481, %v2643
  %2645 = vmatmul.f32.gmra.mxu0 %v2546
  %v2646 = vpop.f32.mrf.mxu0
  %v2647 = vadd.f32 %v486, %v2646
  %2648 = vmatmul.f32.gmra.mxu0 %v2548
  %v2649 = vpop.f32.mrf.mxu0
  %v2650 = vadd.f32 %v491, %v2649
  %2651 = vmatmul.f32.gmra.mxu0 %v2550
  %v2652 = vpop.f32.mrf.mxu0
  %v2653 = vadd.f32 %v496, %v2652
  %2654 = vmatmul.f32.gmra.mxu0 %v2552
  %v2655 = vpop.f32.mrf.mxu0
  %v2656 = vadd.f32 %v501, %v2655
  %2657 = vmatmul.f32.gmra.mxu0 %v2554
  %v2658 = vpop.f32.mrf.mxu0
  %v2659 = vadd.f32 %v506, %v2658
  %2660 = vmatmul.f32.gmra.mxu0 %v2556
  %v2661 = vpop.f32.mrf.mxu0
  %v2662 = vadd.f32 %v511, %v2661
  %2663 = vmatmul.f32.gmra.mxu0 %v2558
  %v2664 = vpop.f32.mrf.mxu0
  %v2665 = vadd.f32 %v516, %v2664
  %2666 = vmatmul.f32.gmra.mxu0 %v2560
  %v2667 = vpop.f32.mrf.mxu0
  %v2668 = vadd.f32 %v521, %v2667
  %2669 = vmatmul.f32.gmra.mxu0 %v2562
  %v2670 = vpop.f32.mrf.mxu0
  %v2671 = vadd.f32 %v526, %v2670
  %2672 = vmatmul.f32.gmra.mxu0 %v2564
  %v2673 = vpop.f32.mrf.mxu0
  %v2674 = vadd.f32 %v531, %v2673
  %2675 = vmatmul.f32.gmra.mxu0 %v2566
  %v2676 = vpop.f32.mrf.mxu0
  %v2677 = vadd.f32 %v536, %v2676
  %2678 = vmatmul.f32.gmra.mxu0 %v2568
  %v2679 = vpop.f32.mrf.mxu0
  %v2680 = vadd.f32 %v541, %v2679
  %2681 = vmatmul.f32.gmra.mxu0 %v2570
  %v2682 = vpop.f32.mrf.mxu0
  %v2683 = vadd.f32 %v546, %v2682
  %2684 = vdwg.mxu0
  %v2685 = vsel %vm822, %v2590, -inf
  %v2686 = vsel %vm822, %v2593, -inf
  %v2687 = vmax.f32 %v2685, %v2686
  %v2688 = vrot.slane %v2687, 4
  %v2689 = vmax.f32 %v2687, %v2688
  %v2690 = vrot.slane %v2689, 2
  %v2691 = vmax.f32 %v2689, %v2690
  %v2692 = vrot.slane %v2691, 1
  %v2693 = vmax.f32 %v2691, %v2692
  %v2694 = vsel %vm822, %v2596, -inf
  %v2695 = vsel %vm822, %v2599, -inf
  %v2696 = vmax.f32 %v2694, %v2695
  %v2697 = vrot.slane %v2696, 4
  %v2698 = vmax.f32 %v2696, %v2697
  %v2699 = vrot.slane %v2698, 2
  %v2700 = vmax.f32 %v2698, %v2699
  %v2701 = vrot.slane %v2700, 1
  %v2702 = vmax.f32 %v2700, %v2701
  %v2703 = vsel %vm822, %v2602, -inf
  %v2704 = vsel %vm822, %v2605, -inf
  %v2705 = vmax.f32 %v2703, %v2704
  %v2706 = vrot.slane %v2705, 4
  %v2707 = vmax.f32 %v2705, %v2706
  %v2708 = vrot.slane %v2707, 2
  %v2709 = vmax.f32 %v2707, %v2708
  %v2710 = vrot.slane %v2709, 1
  %v2711 = vmax.f32 %v2709, %v2710
  %v2712 = vsel %vm822, %v2608, -inf
  %v2713 = vsel %vm822, %v2611, -inf
  %v2714 = vmax.f32 %v2712, %v2713
  %v2715 = vrot.slane %v2714, 4
  %v2716 = vmax.f32 %v2714, %v2715
  %v2717 = vrot.slane %v2716, 2
  %v2718 = vmax.f32 %v2716, %v2717
  %v2719 = vrot.slane %v2718, 1
  %v2720 = vmax.f32 %v2718, %v2719
  %v2721 = vsel %vm822, %v2614, -inf
  %v2722 = vsel %vm822, %v2617, -inf
  %v2723 = vmax.f32 %v2721, %v2722
  %v2724 = vrot.slane %v2723, 4
  %v2725 = vmax.f32 %v2723, %v2724
  %v2726 = vrot.slane %v2725, 2
  %v2727 = vmax.f32 %v2725, %v2726
  %v2728 = vrot.slane %v2727, 1
  %v2729 = vmax.f32 %v2727, %v2728
  %v2730 = vsel %vm822, %v2620, -inf
  %v2731 = vsel %vm822, %v2623, -inf
  %v2732 = vmax.f32 %v2730, %v2731
  %v2733 = vrot.slane %v2732, 4
  %v2734 = vmax.f32 %v2732, %v2733
  %v2735 = vrot.slane %v2734, 2
  %v2736 = vmax.f32 %v2734, %v2735
  %v2737 = vrot.slane %v2736, 1
  %v2738 = vmax.f32 %v2736, %v2737
  %v2739 = vsel %vm822, %v2626, -inf
  %v2740 = vsel %vm822, %v2629, -inf
  %v2741 = vmax.f32 %v2739, %v2740
  %v2742 = vrot.slane %v2741, 4
  %v2743 = vmax.f32 %v2741, %v2742
  %v2744 = vrot.slane %v2743, 2
  %v2745 = vmax.f32 %v2743, %v2744
  %v2746 = vrot.slane %v2745, 1
  %v2747 = vmax.f32 %v2745, %v2746
  %v2748 = vsel %vm822, %v2632, -inf
  %v2749 = vsel %vm822, %v2635, -inf
  %v2750 = vmax.f32 %v2748, %v2749
  %v2751 = vrot.slane %v2750, 4
  %v2752 = vmax.f32 %v2750, %v2751
  %v2753 = vrot.slane %v2752, 2
  %v2754 = vmax.f32 %v2752, %v2753
  %v2755 = vrot.slane %v2754, 1
  %v2756 = vmax.f32 %v2754, %v2755
  %v2757 = vsel %vm822, %v2638, -inf
  %v2758 = vsel %vm822, %v2641, -inf
  %v2759 = vmax.f32 %v2757, %v2758
  %v2760 = vrot.slane %v2759, 4
  %v2761 = vmax.f32 %v2759, %v2760
  %v2762 = vrot.slane %v2761, 2
  %v2763 = vmax.f32 %v2761, %v2762
  %v2764 = vrot.slane %v2763, 1
  %v2765 = vmax.f32 %v2763, %v2764
  %v2766 = vsel %vm822, %v2644, -inf
  %v2767 = vsel %vm822, %v2647, -inf
  %v2768 = vmax.f32 %v2766, %v2767
  %v2769 = vrot.slane %v2768, 4
  %v2770 = vmax.f32 %v2768, %v2769
  %v2771 = vrot.slane %v2770, 2
  %v2772 = vmax.f32 %v2770, %v2771
  %v2773 = vrot.slane %v2772, 1
  %v2774 = vmax.f32 %v2772, %v2773
  %v2775 = vsel %vm822, %v2650, -inf
  %v2776 = vsel %vm822, %v2653, -inf
  %v2777 = vmax.f32 %v2775, %v2776
  %v2778 = vrot.slane %v2777, 4
  %v2779 = vmax.f32 %v2777, %v2778
  %v2780 = vrot.slane %v2779, 2
  %v2781 = vmax.f32 %v2779, %v2780
  %v2782 = vrot.slane %v2781, 1
  %v2783 = vmax.f32 %v2781, %v2782
  %v2784 = vsel %vm822, %v2656, -inf
  %v2785 = vsel %vm822, %v2659, -inf
  %v2786 = vmax.f32 %v2784, %v2785
  %v2787 = vrot.slane %v2786, 4
  %v2788 = vmax.f32 %v2786, %v2787
  %v2789 = vrot.slane %v2788, 2
  %v2790 = vmax.f32 %v2788, %v2789
  %v2791 = vrot.slane %v2790, 1
  %v2792 = vmax.f32 %v2790, %v2791
  %v2793 = vsel %vm822, %v2662, -inf
  %v2794 = vsel %vm822, %v2665, -inf
  %v2795 = vmax.f32 %v2793, %v2794
  %v2796 = vrot.slane %v2795, 4
  %v2797 = vmax.f32 %v2795, %v2796
  %v2798 = vrot.slane %v2797, 2
  %v2799 = vmax.f32 %v2797, %v2798
  %v2800 = vrot.slane %v2799, 1
  %v2801 = vmax.f32 %v2799, %v2800
  %v2802 = vsel %vm822, %v2668, -inf
  %v2803 = vsel %vm822, %v2671, -inf
  %v2804 = vmax.f32 %v2802, %v2803
  %v2805 = vrot.slane %v2804, 4
  %v2806 = vmax.f32 %v2804, %v2805
  %v2807 = vrot.slane %v2806, 2
  %v2808 = vmax.f32 %v2806, %v2807
  %v2809 = vrot.slane %v2808, 1
  %v2810 = vmax.f32 %v2808, %v2809
  %v2811 = vsel %vm822, %v2674, -inf
  %v2812 = vsel %vm822, %v2677, -inf
  %v2813 = vmax.f32 %v2811, %v2812
  %v2814 = vrot.slane %v2813, 4
  %v2815 = vmax.f32 %v2813, %v2814
  %v2816 = vrot.slane %v2815, 2
  %v2817 = vmax.f32 %v2815, %v2816
  %v2818 = vrot.slane %v2817, 1
  %v2819 = vmax.f32 %v2817, %v2818
  %v2820 = vsel %vm822, %v2680, -inf
  %v2821 = vsel %vm822, %v2683, -inf
  %v2822 = vmax.f32 %v2820, %v2821
  %v2823 = vrot.slane %v2822, 4
  %v2824 = vmax.f32 %v2822, %v2823
  %v2825 = vrot.slane %v2824, 2
  %v2826 = vmax.f32 %v2824, %v2825
  %v2827 = vrot.slane %v2826, 1
  %v2828 = vmax.f32 %v2826, %v2827
  %v2829 = vsub.f32 %v2590, %v2693
  %v2830 = vsub.f32 %v2593, %v2693
  %v2831 = vsub.f32 %v2596, %v2702
  %v2832 = vsub.f32 %v2599, %v2702
  %v2833 = vsub.f32 %v2602, %v2711
  %v2834 = vsub.f32 %v2605, %v2711
  %v2835 = vsub.f32 %v2608, %v2720
  %v2836 = vsub.f32 %v2611, %v2720
  %v2837 = vsub.f32 %v2614, %v2729
  %v2838 = vsub.f32 %v2617, %v2729
  %v2839 = vsub.f32 %v2620, %v2738
  %v2840 = vsub.f32 %v2623, %v2738
  %v2841 = vsub.f32 %v2626, %v2747
  %v2842 = vsub.f32 %v2629, %v2747
  %v2843 = vsub.f32 %v2632, %v2756
  %v2844 = vsub.f32 %v2635, %v2756
  %v2845 = vsub.f32 %v2638, %v2765
  %v2846 = vsub.f32 %v2641, %v2765
  %v2847 = vsub.f32 %v2644, %v2774
  %v2848 = vsub.f32 %v2647, %v2774
  %v2849 = vsub.f32 %v2650, %v2783
  %v2850 = vsub.f32 %v2653, %v2783
  %v2851 = vsub.f32 %v2656, %v2792
  %v2852 = vsub.f32 %v2659, %v2792
  %v2853 = vsub.f32 %v2662, %v2801
  %v2854 = vsub.f32 %v2665, %v2801
  %v2855 = vsub.f32 %v2668, %v2810
  %v2856 = vsub.f32 %v2671, %v2810
  %v2857 = vsub.f32 %v2674, %v2819
  %v2858 = vsub.f32 %v2677, %v2819
  %v2859 = vsub.f32 %v2680, %v2828
  %v2860 = vsub.f32 %v2683, %v2828
  %v2861 = vmul.f32 %v2829, 1.442695
  %v2862 = vpow.pop %v2861
  %v2863 = vmul.f32 %v2830, 1.442695
  %v2864 = vpow.pop %v2863
  %v2865 = vmul.f32 %v2831, 1.442695
  %v2866 = vpow.pop %v2865
  %v2867 = vmul.f32 %v2832, 1.442695
  %v2868 = vpow.pop %v2867
  %v2869 = vmul.f32 %v2833, 1.442695
  %v2870 = vpow.pop %v2869
  %v2871 = vmul.f32 %v2834, 1.442695
  %v2872 = vpow.pop %v2871
  %v2873 = vmul.f32 %v2835, 1.442695
  %v2874 = vpow.pop %v2873
  %v2875 = vmul.f32 %v2836, 1.442695
  %v2876 = vpow.pop %v2875
  %v2877 = vmul.f32 %v2837, 1.442695
  %v2878 = vpow.pop %v2877
  %v2879 = vmul.f32 %v2838, 1.442695
  %v2880 = vpow.pop %v2879
  %v2881 = vmul.f32 %v2839, 1.442695
  %v2882 = vpow.pop %v2881
  %v2883 = vmul.f32 %v2840, 1.442695
  %v2884 = vpow.pop %v2883
  %v2885 = vmul.f32 %v2841, 1.442695
  %v2886 = vpow.pop %v2885
  %v2887 = vmul.f32 %v2842, 1.442695
  %v2888 = vpow.pop %v2887
  %v2889 = vmul.f32 %v2843, 1.442695
  %v2890 = vpow.pop %v2889
  %v2891 = vmul.f32 %v2844, 1.442695
  %v2892 = vpow.pop %v2891
  %v2893 = vmul.f32 %v2845, 1.442695
  %v2894 = vpow.pop %v2893
  %v2895 = vmul.f32 %v2846, 1.442695
  %v2896 = vpow.pop %v2895
  %v2897 = vmul.f32 %v2847, 1.442695
  %v2898 = vpow.pop %v2897
  %v2899 = vmul.f32 %v2848, 1.442695
  %v2900 = vpow.pop %v2899
  %v2901 = vmul.f32 %v2849, 1.442695
  %v2902 = vpow.pop %v2901
  %v2903 = vmul.f32 %v2850, 1.442695
  %v2904 = vpow.pop %v2903
  %v2905 = vmul.f32 %v2851, 1.442695
  %v2906 = vpow.pop %v2905
  %v2907 = vmul.f32 %v2852, 1.442695
  %v2908 = vpow.pop %v2907
  %v2909 = vmul.f32 %v2853, 1.442695
  %v2910 = vpow.pop %v2909
  %v2911 = vmul.f32 %v2854, 1.442695
  %v2912 = vpow.pop %v2911
  %v2913 = vmul.f32 %v2855, 1.442695
  %v2914 = vpow.pop %v2913
  %v2915 = vmul.f32 %v2856, 1.442695
  %v2916 = vpow.pop %v2915
  %v2917 = vmul.f32 %v2857, 1.442695
  %v2918 = vpow.pop %v2917
  %v2919 = vmul.f32 %v2858, 1.442695
  %v2920 = vpow.pop %v2919
  %v2921 = vmul.f32 %v2859, 1.442695
  %v2922 = vpow.pop %v2921
  %v2923 = vmul.f32 %v2860, 1.442695
  %v2924 = vpow.pop %v2923
  %v2925 = vsel %vm822, %v2862, 0.0
  %v2926 = vsel %vm822, %v2864, 0.0
  %v2927 = vadd.f32 %v2925, %v2926
  %v2928 = vrot.slane %v2927, 4
  %v2929 = vadd.f32 %v2927, %v2928
  %v2930 = vrot.slane %v2929, 2
  %v2931 = vadd.f32 %v2929, %v2930
  %v2932 = vrot.slane %v2931, 1
  %v2933 = vadd.f32 %v2931, %v2932
  %v2934 = vsel %vm822, %v2866, 0.0
  %v2935 = vsel %vm822, %v2868, 0.0
  %v2936 = vadd.f32 %v2934, %v2935
  %v2937 = vrot.slane %v2936, 4
  %v2938 = vadd.f32 %v2936, %v2937
  %v2939 = vrot.slane %v2938, 2
  %v2940 = vadd.f32 %v2938, %v2939
  %v2941 = vrot.slane %v2940, 1
  %v2942 = vadd.f32 %v2940, %v2941
  %v2943 = vsel %vm822, %v2870, 0.0
  %v2944 = vsel %vm822, %v2872, 0.0
  %v2945 = vadd.f32 %v2943, %v2944
  %v2946 = vrot.slane %v2945, 4
  %v2947 = vadd.f32 %v2945, %v2946
  %v2948 = vrot.slane %v2947, 2
  %v2949 = vadd.f32 %v2947, %v2948
  %v2950 = vrot.slane %v2949, 1
  %v2951 = vadd.f32 %v2949, %v2950
  %v2952 = vsel %vm822, %v2874, 0.0
  %v2953 = vsel %vm822, %v2876, 0.0
  %v2954 = vadd.f32 %v2952, %v2953
  %v2955 = vrot.slane %v2954, 4
  %v2956 = vadd.f32 %v2954, %v2955
  %v2957 = vrot.slane %v2956, 2
  %v2958 = vadd.f32 %v2956, %v2957
  %v2959 = vrot.slane %v2958, 1
  %v2960 = vadd.f32 %v2958, %v2959
  %v2961 = vsel %vm822, %v2878, 0.0
  %v2962 = vsel %vm822, %v2880, 0.0
  %v2963 = vadd.f32 %v2961, %v2962
  %v2964 = vrot.slane %v2963, 4
  %v2965 = vadd.f32 %v2963, %v2964
  %v2966 = vrot.slane %v2965, 2
  %v2967 = vadd.f32 %v2965, %v2966
  %v2968 = vrot.slane %v2967, 1
  %v2969 = vadd.f32 %v2967, %v2968
  %v2970 = vsel %vm822, %v2882, 0.0
  %v2971 = vsel %vm822, %v2884, 0.0
  %v2972 = vadd.f32 %v2970, %v2971
  %v2973 = vrot.slane %v2972, 4
  %v2974 = vadd.f32 %v2972, %v2973
  %v2975 = vrot.slane %v2974, 2
  %v2976 = vadd.f32 %v2974, %v2975
  %v2977 = vrot.slane %v2976, 1
  %v2978 = vadd.f32 %v2976, %v2977
  %v2979 = vsel %vm822, %v2886, 0.0
  %v2980 = vsel %vm822, %v2888, 0.0
  %v2981 = vadd.f32 %v2979, %v2980
  %v2982 = vrot.slane %v2981, 4
  %v2983 = vadd.f32 %v2981, %v2982
  %v2984 = vrot.slane %v2983, 2
  %v2985 = vadd.f32 %v2983, %v2984
  %v2986 = vrot.slane %v2985, 1
  %v2987 = vadd.f32 %v2985, %v2986
  %v2988 = vsel %vm822, %v2890, 0.0
  %v2989 = vsel %vm822, %v2892, 0.0
  %v2990 = vadd.f32 %v2988, %v2989
  %v2991 = vrot.slane %v2990, 4
  %v2992 = vadd.f32 %v2990, %v2991
  %v2993 = vrot.slane %v2992, 2
  %v2994 = vadd.f32 %v2992, %v2993
  %v2995 = vrot.slane %v2994, 1
  %v2996 = vadd.f32 %v2994, %v2995
  %v2997 = vsel %vm822, %v2894, 0.0
  %v2998 = vsel %vm822, %v2896, 0.0
  %v2999 = vadd.f32 %v2997, %v2998
  %v3000 = vrot.slane %v2999, 4
  %v3001 = vadd.f32 %v2999, %v3000
  %v3002 = vrot.slane %v3001, 2
  %v3003 = vadd.f32 %v3001, %v3002
  %v3004 = vrot.slane %v3003, 1
  %v3005 = vadd.f32 %v3003, %v3004
  %v3006 = vsel %vm822, %v2898, 0.0
  %v3007 = vsel %vm822, %v2900, 0.0
  %v3008 = vadd.f32 %v3006, %v3007
  %v3009 = vrot.slane %v3008, 4
  %v3010 = vadd.f32 %v3008, %v3009
  %v3011 = vrot.slane %v3010, 2
  %v3012 = vadd.f32 %v3010, %v3011
  %v3013 = vrot.slane %v3012, 1
  %v3014 = vadd.f32 %v3012, %v3013
  %v3015 = vsel %vm822, %v2902, 0.0
  %v3016 = vsel %vm822, %v2904, 0.0
  %v3017 = vadd.f32 %v3015, %v3016
  %v3018 = vrot.slane %v3017, 4
  %v3019 = vadd.f32 %v3017, %v3018
  %v3020 = vrot.slane %v3019, 2
  %v3021 = vadd.f32 %v3019, %v3020
  %v3022 = vrot.slane %v3021, 1
  %v3023 = vadd.f32 %v3021, %v3022
  %v3024 = vsel %vm822, %v2906, 0.0
  %v3025 = vsel %vm822, %v2908, 0.0
  %v3026 = vadd.f32 %v3024, %v3025
  %v3027 = vrot.slane %v3026, 4
  %v3028 = vadd.f32 %v3026, %v3027
  %v3029 = vrot.slane %v3028, 2
  %v3030 = vadd.f32 %v3028, %v3029
  %v3031 = vrot.slane %v3030, 1
  %v3032 = vadd.f32 %v3030, %v3031
  %v3033 = vsel %vm822, %v2910, 0.0
  %v3034 = vsel %vm822, %v2912, 0.0
  %v3035 = vadd.f32 %v3033, %v3034
  %v3036 = vrot.slane %v3035, 4
  %v3037 = vadd.f32 %v3035, %v3036
  %v3038 = vrot.slane %v3037, 2
  %v3039 = vadd.f32 %v3037, %v3038
  %v3040 = vrot.slane %v3039, 1
  %v3041 = vadd.f32 %v3039, %v3040
  %v3042 = vsel %vm822, %v2914, 0.0
  %v3043 = vsel %vm822, %v2916, 0.0
  %v3044 = vadd.f32 %v3042, %v3043
  %v3045 = vrot.slane %v3044, 4
  %v3046 = vadd.f32 %v3044, %v3045
  %v3047 = vrot.slane %v3046, 2
  %v3048 = vadd.f32 %v3046, %v3047
  %v3049 = vrot.slane %v3048, 1
  %v3050 = vadd.f32 %v3048, %v3049
  %v3051 = vsel %vm822, %v2918, 0.0
  %v3052 = vsel %vm822, %v2920, 0.0
  %v3053 = vadd.f32 %v3051, %v3052
  %v3054 = vrot.slane %v3053, 4
  %v3055 = vadd.f32 %v3053, %v3054
  %v3056 = vrot.slane %v3055, 2
  %v3057 = vadd.f32 %v3055, %v3056
  %v3058 = vrot.slane %v3057, 1
  %v3059 = vadd.f32 %v3057, %v3058
  %v3060 = vsel %vm822, %v2922, 0.0
  %v3061 = vsel %vm822, %v2924, 0.0
  %v3062 = vadd.f32 %v3060, %v3061
  %v3063 = vrot.slane %v3062, 4
  %v3064 = vadd.f32 %v3062, %v3063
  %v3065 = vrot.slane %v3064, 2
  %v3066 = vadd.f32 %v3064, %v3065
  %v3067 = vrot.slane %v3066, 1
  %v3068 = vadd.f32 %v3066, %v3067
  %v3069 = vrcp.pop %v2933
  %v3070 = vmul.f32 %v2933, %v3069
  %v3071 = vsub.f32 1.0, %v3070
  %v3072 = vmul.f32 %v3069, %v3071
  %v3073 = vadd.f32 %v3069, %v3072
  %vm3074 = vweird.f32 %v2933
  %vm3075 = vweird.f32 %v3069
  %vm3076 = vmor %vm3074, %vm3075
  %v3077 = vsel %vm3076, %v3069, %v3073
  %v3078 = vand.u32 2147483647, %v2933
  %vm3079 = vcmp.eq.f32.partialorder %v3078, 8.507059e+37
  %v3080 = vand.u32 %v2933, 2147483648
  %v3081 = vor.u32 1.1754944e-38, %v3080
  %v3082 = vsel %vm3079, %v3081, %v3077
  %v3083 = vmul.f32 %v2862, %v3082
  %v3084 = vmul.f32 %v2864, %v3082
  %v3085 = vrcp.pop %v2942
  %v3086 = vmul.f32 %v2942, %v3085
  %v3087 = vsub.f32 1.0, %v3086
  %v3088 = vmul.f32 %v3085, %v3087
  %v3089 = vadd.f32 %v3085, %v3088
  %vm3090 = vweird.f32 %v2942
  %vm3091 = vweird.f32 %v3085
  %vm3092 = vmor %vm3090, %vm3091
  %v3093 = vsel %vm3092, %v3085, %v3089
  %v3094 = vand.u32 2147483647, %v2942
  %vm3095 = vcmp.eq.f32.partialorder %v3094, 8.507059e+37
  %v3096 = vand.u32 %v2942, 2147483648
  %v3097 = vor.u32 1.1754944e-38, %v3096
  %v3098 = vsel %vm3095, %v3097, %v3093
  %v3099 = vmul.f32 %v2866, %v3098
  %v3100 = vmul.f32 %v2868, %v3098
  %v3101 = vrcp.pop %v2951
  %v3102 = vmul.f32 %v2951, %v3101
  %v3103 = vsub.f32 1.0, %v3102
  %v3104 = vmul.f32 %v3101, %v3103
  %v3105 = vadd.f32 %v3101, %v3104
  %vm3106 = vweird.f32 %v2951
  %vm3107 = vweird.f32 %v3101
  %vm3108 = vmor %vm3106, %vm3107
  %v3109 = vsel %vm3108, %v3101, %v3105
  %v3110 = vand.u32 2147483647, %v2951
  %vm3111 = vcmp.eq.f32.partialorder %v3110, 8.507059e+37
  %v3112 = vand.u32 %v2951, 2147483648
  %v3113 = vor.u32 1.1754944e-38, %v3112
  %v3114 = vsel %vm3111, %v3113, %v3109
  %v3115 = vmul.f32 %v2870, %v3114
  %v3116 = vmul.f32 %v2872, %v3114
  %v3117 = vrcp.pop %v2960
  %v3118 = vmul.f32 %v2960, %v3117
  %v3119 = vsub.f32 1.0, %v3118
  %v3120 = vmul.f32 %v3117, %v3119
  %v3121 = vadd.f32 %v3117, %v3120
  %vm3122 = vweird.f32 %v2960
  %vm3123 = vweird.f32 %v3117
  %vm3124 = vmor %vm3122, %vm3123
  %v3125 = vsel %vm3124, %v3117, %v3121
  %v3126 = vand.u32 2147483647, %v2960
  %vm3127 = vcmp.eq.f32.partialorder %v3126, 8.507059e+37
  %v3128 = vand.u32 %v2960, 2147483648
  %v3129 = vor.u32 1.1754944e-38, %v3128
  %v3130 = vsel %vm3127, %v3129, %v3125
  %v3131 = vmul.f32 %v2874, %v3130
  %v3132 = vmul.f32 %v2876, %v3130
  %v3133 = vrcp.pop %v2969
  %v3134 = vmul.f32 %v2969, %v3133
  %v3135 = vsub.f32 1.0, %v3134
  %v3136 = vmul.f32 %v3133, %v3135
  %v3137 = vadd.f32 %v3133, %v3136
  %vm3138 = vweird.f32 %v2969
  %vm3139 = vweird.f32 %v3133
  %vm3140 = vmor %vm3138, %vm3139
  %v3141 = vsel %vm3140, %v3133, %v3137
  %v3142 = vand.u32 2147483647, %v2969
  %vm3143 = vcmp.eq.f32.partialorder %v3142, 8.507059e+37
  %v3144 = vand.u32 %v2969, 2147483648
  %v3145 = vor.u32 1.1754944e-38, %v3144
  %v3146 = vsel %vm3143, %v3145, %v3141
  %v3147 = vmul.f32 %v2878, %v3146
  %v3148 = vmul.f32 %v2880, %v3146
  %v3149 = vrcp.pop %v2978
  %v3150 = vmul.f32 %v2978, %v3149
  %v3151 = vsub.f32 1.0, %v3150
  %v3152 = vmul.f32 %v3149, %v3151
  %v3153 = vadd.f32 %v3149, %v3152
  %vm3154 = vweird.f32 %v2978
  %vm3155 = vweird.f32 %v3149
  %vm3156 = vmor %vm3154, %vm3155
  %v3157 = vsel %vm3156, %v3149, %v3153
  %v3158 = vand.u32 2147483647, %v2978
  %vm3159 = vcmp.eq.f32.partialorder %v3158, 8.507059e+37
  %v3160 = vand.u32 %v2978, 2147483648
  %v3161 = vor.u32 1.1754944e-38, %v3160
  %v3162 = vsel %vm3159, %v3161, %v3157
  %v3163 = vmul.f32 %v2882, %v3162
  %v3164 = vmul.f32 %v2884, %v3162
  %v3165 = vrcp.pop %v2987
  %v3166 = vmul.f32 %v2987, %v3165
  %v3167 = vsub.f32 1.0, %v3166
  %v3168 = vmul.f32 %v3165, %v3167
  %v3169 = vadd.f32 %v3165, %v3168
  %vm3170 = vweird.f32 %v2987
  %vm3171 = vweird.f32 %v3165
  %vm3172 = vmor %vm3170, %vm3171
  %v3173 = vsel %vm3172, %v3165, %v3169
  %v3174 = vand.u32 2147483647, %v2987
  %vm3175 = vcmp.eq.f32.partialorder %v3174, 8.507059e+37
  %v3176 = vand.u32 %v2987, 2147483648
  %v3177 = vor.u32 1.1754944e-38, %v3176
  %v3178 = vsel %vm3175, %v3177, %v3173
  %v3179 = vmul.f32 %v2886, %v3178
  %v3180 = vmul.f32 %v2888, %v3178
  %v3181 = vrcp.pop %v2996
  %v3182 = vmul.f32 %v2996, %v3181
  %v3183 = vsub.f32 1.0, %v3182
  %v3184 = vmul.f32 %v3181, %v3183
  %v3185 = vadd.f32 %v3181, %v3184
  %vm3186 = vweird.f32 %v2996
  %vm3187 = vweird.f32 %v3181
  %vm3188 = vmor %vm3186, %vm3187
  %v3189 = vsel %vm3188, %v3181, %v3185
  %v3190 = vand.u32 2147483647, %v2996
  %vm3191 = vcmp.eq.f32.partialorder %v3190, 8.507059e+37
  %v3192 = vand.u32 %v2996, 2147483648
  %v3193 = vor.u32 1.1754944e-38, %v3192
  %v3194 = vsel %vm3191, %v3193, %v3189
  %v3195 = vmul.f32 %v2890, %v3194
  %v3196 = vmul.f32 %v2892, %v3194
  %v3197 = vrcp.pop %v3005
  %v3198 = vmul.f32 %v3005, %v3197
  %v3199 = vsub.f32 1.0, %v3198
  %v3200 = vmul.f32 %v3197, %v3199
  %v3201 = vadd.f32 %v3197, %v3200
  %vm3202 = vweird.f32 %v3005
  %vm3203 = vweird.f32 %v3197
  %vm3204 = vmor %vm3202, %vm3203
  %v3205 = vsel %vm3204, %v3197, %v3201
  %v3206 = vand.u32 2147483647, %v3005
  %vm3207 = vcmp.eq.f32.partialorder %v3206, 8.507059e+37
  %v3208 = vand.u32 %v3005, 2147483648
  %v3209 = vor.u32 1.1754944e-38, %v3208
  %v3210 = vsel %vm3207, %v3209, %v3205
  %v3211 = vmul.f32 %v2894, %v3210
  %v3212 = vmul.f32 %v2896, %v3210
  %v3213 = vrcp.pop %v3014
  %v3214 = vmul.f32 %v3014, %v3213
  %v3215 = vsub.f32 1.0, %v3214
  %v3216 = vmul.f32 %v3213, %v3215
  %v3217 = vadd.f32 %v3213, %v3216
  %vm3218 = vweird.f32 %v3014
  %vm3219 = vweird.f32 %v3213
  %vm3220 = vmor %vm3218, %vm3219
  %v3221 = vsel %vm3220, %v3213, %v3217
  %v3222 = vand.u32 2147483647, %v3014
  %vm3223 = vcmp.eq.f32.partialorder %v3222, 8.507059e+37
  %v3224 = vand.u32 %v3014, 2147483648
  %v3225 = vor.u32 1.1754944e-38, %v3224
  %v3226 = vsel %vm3223, %v3225, %v3221
  %v3227 = vmul.f32 %v2898, %v3226
  %v3228 = vmul.f32 %v2900, %v3226
  %v3229 = vrcp.pop %v3023
  %v3230 = vmul.f32 %v3023, %v3229
  %v3231 = vsub.f32 1.0, %v3230
  %v3232 = vmul.f32 %v3229, %v3231
  %v3233 = vadd.f32 %v3229, %v3232
  %vm3234 = vweird.f32 %v3023
  %vm3235 = vweird.f32 %v3229
  %vm3236 = vmor %vm3234, %vm3235
  %v3237 = vsel %vm3236, %v3229, %v3233
  %v3238 = vand.u32 2147483647, %v3023
  %vm3239 = vcmp.eq.f32.partialorder %v3238, 8.507059e+37
  %v3240 = vand.u32 %v3023, 2147483648
  %v3241 = vor.u32 1.1754944e-38, %v3240
  %v3242 = vsel %vm3239, %v3241, %v3237
  %v3243 = vmul.f32 %v2902, %v3242
  %v3244 = vmul.f32 %v2904, %v3242
  %v3245 = vrcp.pop %v3032
  %v3246 = vmul.f32 %v3032, %v3245
  %v3247 = vsub.f32 1.0, %v3246
  %v3248 = vmul.f32 %v3245, %v3247
  %v3249 = vadd.f32 %v3245, %v3248
  %vm3250 = vweird.f32 %v3032
  %vm3251 = vweird.f32 %v3245
  %vm3252 = vmor %vm3250, %vm3251
  %v3253 = vsel %vm3252, %v3245, %v3249
  %v3254 = vand.u32 2147483647, %v3032
  %vm3255 = vcmp.eq.f32.partialorder %v3254, 8.507059e+37
  %v3256 = vand.u32 %v3032, 2147483648
  %v3257 = vor.u32 1.1754944e-38, %v3256
  %v3258 = vsel %vm3255, %v3257, %v3253
  %v3259 = vmul.f32 %v2906, %v3258
  %v3260 = vmul.f32 %v2908, %v3258
  %v3261 = vrcp.pop %v3041
  %v3262 = vmul.f32 %v3041, %v3261
  %v3263 = vsub.f32 1.0, %v3262
  %v3264 = vmul.f32 %v3261, %v3263
  %v3265 = vadd.f32 %v3261, %v3264
  %vm3266 = vweird.f32 %v3041
  %vm3267 = vweird.f32 %v3261
  %vm3268 = vmor %vm3266, %vm3267
  %v3269 = vsel %vm3268, %v3261, %v3265
  %v3270 = vand.u32 2147483647, %v3041
  %vm3271 = vcmp.eq.f32.partialorder %v3270, 8.507059e+37
  %v3272 = vand.u32 %v3041, 2147483648
  %v3273 = vor.u32 1.1754944e-38, %v3272
  %v3274 = vsel %vm3271, %v3273, %v3269
  %v3275 = vmul.f32 %v2910, %v3274
  %v3276 = vmul.f32 %v2912, %v3274
  %v3277 = vrcp.pop %v3050
  %v3278 = vmul.f32 %v3050, %v3277
  %v3279 = vsub.f32 1.0, %v3278
  %v3280 = vmul.f32 %v3277, %v3279
  %v3281 = vadd.f32 %v3277, %v3280
  %vm3282 = vweird.f32 %v3050
  %vm3283 = vweird.f32 %v3277
  %vm3284 = vmor %vm3282, %vm3283
  %v3285 = vsel %vm3284, %v3277, %v3281
  %v3286 = vand.u32 2147483647, %v3050
  %vm3287 = vcmp.eq.f32.partialorder %v3286, 8.507059e+37
  %v3288 = vand.u32 %v3050, 2147483648
  %v3289 = vor.u32 1.1754944e-38, %v3288
  %v3290 = vsel %vm3287, %v3289, %v3285
  %v3291 = vmul.f32 %v2914, %v3290
  %v3292 = vmul.f32 %v2916, %v3290
  %v3293 = vrcp.pop %v3059
  %v3294 = vmul.f32 %v3059, %v3293
  %v3295 = vsub.f32 1.0, %v3294
  %v3296 = vmul.f32 %v3293, %v3295
  %v3297 = vadd.f32 %v3293, %v3296
  %vm3298 = vweird.f32 %v3059
  %vm3299 = vweird.f32 %v3293
  %vm3300 = vmor %vm3298, %vm3299
  %v3301 = vsel %vm3300, %v3293, %v3297
  %v3302 = vand.u32 2147483647, %v3059
  %vm3303 = vcmp.eq.f32.partialorder %v3302, 8.507059e+37
  %v3304 = vand.u32 %v3059, 2147483648
  %v3305 = vor.u32 1.1754944e-38, %v3304
  %v3306 = vsel %vm3303, %v3305, %v3301
  %v3307 = vmul.f32 %v2918, %v3306
  %v3308 = vmul.f32 %v2920, %v3306
  %v3309 = vrcp.pop %v3068
  %v3310 = vmul.f32 %v3068, %v3309
  %v3311 = vsub.f32 1.0, %v3310
  %v3312 = vmul.f32 %v3309, %v3311
  %v3313 = vadd.f32 %v3309, %v3312
  %vm3314 = vweird.f32 %v3068
  %vm3315 = vweird.f32 %v3309
  %vm3316 = vmor %vm3314, %vm3315
  %v3317 = vsel %vm3316, %v3309, %v3313
  %v3318 = vand.u32 2147483647, %v3068
  %vm3319 = vcmp.eq.f32.partialorder %v3318, 8.507059e+37
  %v3320 = vand.u32 %v3068, 2147483648
  %v3321 = vor.u32 1.1754944e-38, %v3320
  %v3322 = vsel %vm3319, %v3321, %v3317
  %v3323 = vmul.f32 %v2922, %v3322
  %v3324 = vmul.f32 %v2924, %v3322
  %v3325 = vld [vmem:[%s11] sm:$0xf]
  %v3327 = vsel %vm822, %v3083, 0
  %v3330 = vsel %vm822, %v3084, 0
  %v3333 = vsel %vm822, %v3099, 0
  %v3336 = vsel %vm822, %v3100, 0
  %v3339 = vsel %vm822, %v3115, 0
  %v3342 = vsel %vm822, %v3116, 0
  %v3345 = vsel %vm822, %v3131, 0
  %v3348 = vsel %vm822, %v3132, 0
  %v3351 = vsel %vm822, %v3147, 0
  %v3354 = vsel %vm822, %v3148, 0
  %v3357 = vsel %vm822, %v3163, 0
  %v3360 = vsel %vm822, %v3164, 0
  %v3363 = vsel %vm822, %v3179, 0
  %v3366 = vsel %vm822, %v3180, 0
  %v3369 = vsel %vm822, %v3195, 0
  %v3372 = vsel %vm822, %v3196, 0
  %v3375 = vsel %vm822, %v3211, 0
  %v3378 = vsel %vm822, %v3212, 0
  %v3381 = vsel %vm822, %v3227, 0
  %v3384 = vsel %vm822, %v3228, 0
  %v3387 = vsel %vm822, %v3243, 0
  %v3390 = vsel %vm822, %v3244, 0
  %v3393 = vsel %vm822, %v3259, 0
  %v3396 = vsel %vm822, %v3260, 0
  %v3399 = vsel %vm822, %v3275, 0
  %v3402 = vsel %vm822, %v3276, 0
  %v3405 = vsel %vm822, %v3291, 0
  %v3408 = vsel %vm822, %v3292, 0
  %v3411 = vsel %vm822, %v3307, 0
  %v3414 = vsel %vm822, %v3308, 0
  %v3417 = vsel %vm822, %v3323, 0
  %v3420 = vsel %vm822, %v3324, 0
  %v3423 = vsel %vm1560, %v3325, 0
  %3425 = vmatpush.msra.mxu0 0.0
  %3426 = vmatpush.msra.mxu0 0.0
  %3427 = vmatpush.msra.mxu0 0.0
  %3428 = vmatpush.msra.mxu0 0.0
  %3429 = vmatpush.msra.mxu0 0.0
  %3430 = vmatpush.msra.mxu0 0.0
  %3431 = vmatpush.msra.mxu0 0.0
  %3432 = vmatpush.msra.mxu0 0.0
  %3433 = vmatpush.msra.mxu0 0.0
  %3434 = vmatpush.msra.mxu0 0.0
  %3435 = vmatpush.msra.mxu0 0.0
  %3436 = vmatpush.msra.mxu0 0.0
  %3437 = vmatpush.msra.mxu0 0.0
  %3438 = vmatpush.msra.mxu0 0.0
  %3439 = vmatpush.msra.mxu0 0.0
  %3440 = vmatpush.msra.mxu0 %v3423
  %3441 = vmatmul.f32.gmra.mxu0 %v3327
  %v3442 = vpop.f32.mrf.mxu0
  %v3443 = vadd.f32 0.0, %v3442
  %3444 = vmatmul.f32.gmra.mxu0 %v3330
  %v3445 = vpop.f32.mrf.mxu0
  %v3446 = vadd.f32 0.0, %v3445
  %3447 = vmatmul.f32.gmra.mxu0 %v3333
  %v3448 = vpop.f32.mrf.mxu0
  %v3449 = vadd.f32 0.0, %v3448
  %3450 = vmatmul.f32.gmra.mxu0 %v3336
  %v3451 = vpop.f32.mrf.mxu0
  %v3452 = vadd.f32 0.0, %v3451
  %3453 = vmatmul.f32.gmra.mxu0 %v3339
  %v3454 = vpop.f32.mrf.mxu0
  %v3455 = vadd.f32 0.0, %v3454
  %3456 = vmatmul.f32.gmra.mxu0 %v3342
  %v3457 = vpop.f32.mrf.mxu0
  %v3458 = vadd.f32 0.0, %v3457
  %3459 = vmatmul.f32.gmra.mxu0 %v3345
  %v3460 = vpop.f32.mrf.mxu0
  %v3461 = vadd.f32 0.0, %v3460
  %3462 = vmatmul.f32.gmra.mxu0 %v3348
  %v3463 = vpop.f32.mrf.mxu0
  %v3464 = vadd.f32 0.0, %v3463
  %3465 = vmatmul.f32.gmra.mxu0 %v3351
  %v3466 = vpop.f32.mrf.mxu0
  %v3467 = vadd.f32 0.0, %v3466
  %3468 = vmatmul.f32.gmra.mxu0 %v3354
  %v3469 = vpop.f32.mrf.mxu0
  %v3470 = vadd.f32 0.0, %v3469
  %3471 = vmatmul.f32.gmra.mxu0 %v3357
  %v3472 = vpop.f32.mrf.mxu0
  %v3473 = vadd.f32 0.0, %v3472
  %3474 = vmatmul.f32.gmra.mxu0 %v3360
  %v3475 = vpop.f32.mrf.mxu0
  %v3476 = vadd.f32 0.0, %v3475
  %3477 = vmatmul.f32.gmra.mxu0 %v3363
  %v3478 = vpop.f32.mrf.mxu0
  %v3479 = vadd.f32 0.0, %v3478
  %3480 = vmatmul.f32.gmra.mxu0 %v3366
  %v3481 = vpop.f32.mrf.mxu0
  %v3482 = vadd.f32 0.0, %v3481
  %3483 = vmatmul.f32.gmra.mxu0 %v3369
  %v3484 = vpop.f32.mrf.mxu0
  %v3485 = vadd.f32 0.0, %v3484
  %3486 = vmatmul.f32.gmra.mxu0 %v3372
  %v3487 = vpop.f32.mrf.mxu0
  %v3488 = vadd.f32 0.0, %v3487
  %3489 = vmatmul.f32.gmra.mxu0 %v3375
  %v3490 = vpop.f32.mrf.mxu0
  %v3491 = vadd.f32 0.0, %v3490
  %3492 = vmatmul.f32.gmra.mxu0 %v3378
  %v3493 = vpop.f32.mrf.mxu0
  %v3494 = vadd.f32 0.0, %v3493
  %3495 = vmatmul.f32.gmra.mxu0 %v3381
  %v3496 = vpop.f32.mrf.mxu0
  %v3497 = vadd.f32 0.0, %v3496
  %3498 = vmatmul.f32.gmra.mxu0 %v3384
  %v3499 = vpop.f32.mrf.mxu0
  %v3500 = vadd.f32 0.0, %v3499
  %3501 = vmatmul.f32.gmra.mxu0 %v3387
  %v3502 = vpop.f32.mrf.mxu0
  %v3503 = vadd.f32 0.0, %v3502
  %3504 = vmatmul.f32.gmra.mxu0 %v3390
  %v3505 = vpop.f32.mrf.mxu0
  %v3506 = vadd.f32 0.0, %v3505
  %3507 = vmatmul.f32.gmra.mxu0 %v3393
  %v3508 = vpop.f32.mrf.mxu0
  %v3509 = vadd.f32 0.0, %v3508
  %3510 = vmatmul.f32.gmra.mxu0 %v3396
  %v3511 = vpop.f32.mrf.mxu0
  %v3512 = vadd.f32 0.0, %v3511
  %3513 = vmatmul.f32.gmra.mxu0 %v3399
  %v3514 = vpop.f32.mrf.mxu0
  %v3515 = vadd.f32 0.0, %v3514
  %3516 = vmatmul.f32.gmra.mxu0 %v3402
  %v3517 = vpop.f32.mrf.mxu0
  %v3518 = vadd.f32 0.0, %v3517
  %3519 = vmatmul.f32.gmra.mxu0 %v3405
  %v3520 = vpop.f32.mrf.mxu0
  %v3521 = vadd.f32 0.0, %v3520
  %3522 = vmatmul.f32.gmra.mxu0 %v3408
  %v3523 = vpop.f32.mrf.mxu0
  %v3524 = vadd.f32 0.0, %v3523
  %3525 = vmatmul.f32.gmra.mxu0 %v3411
  %v3526 = vpop.f32.mrf.mxu0
  %v3527 = vadd.f32 0.0, %v3526
  %3528 = vmatmul.f32.gmra.mxu0 %v3414
  %v3529 = vpop.f32.mrf.mxu0
  %v3530 = vadd.f32 0.0, %v3529
  %3531 = vmatmul.f32.gmra.mxu0 %v3417
  %v3532 = vpop.f32.mrf.mxu0
  %v3533 = vadd.f32 0.0, %v3532
  %3534 = vmatmul.f32.gmra.mxu0 %v3420
  %v3535 = vpop.f32.mrf.mxu0
  %v3536 = vadd.f32 0.0, %v3535
  %3537 = vdwg.mxu0
  %v3538 = vmul.f32 %v3443, %v2221
  %v3539 = vmul.f32 %v3446, %v2224
  %v3540 = vmul.f32 %v3449, %v2221
  %v3541 = vmul.f32 %v3452, %v2224
  %v3542 = vmul.f32 %v3455, %v2221
  %v3543 = vmul.f32 %v3458, %v2224
  %v3544 = vmul.f32 %v3461, %v2221
  %v3545 = vmul.f32 %v3464, %v2224
  %v3546 = vmul.f32 %v3467, %v2221
  %v3547 = vmul.f32 %v3470, %v2224
  %v3548 = vmul.f32 %v3473, %v2221
  %v3549 = vmul.f32 %v3476, %v2224
  %v3550 = vmul.f32 %v3479, %v2221
  %v3551 = vmul.f32 %v3482, %v2224
  %v3552 = vmul.f32 %v3485, %v2221
  %v3553 = vmul.f32 %v3488, %v2224
  %v3554 = vmul.f32 %v3491, %v2221
  %v3555 = vmul.f32 %v3494, %v2224
  %v3556 = vmul.f32 %v3497, %v2221
  %v3557 = vmul.f32 %v3500, %v2224
  %v3558 = vmul.f32 %v3503, %v2221
  %v3559 = vmul.f32 %v3506, %v2224
  %v3560 = vmul.f32 %v3509, %v2221
  %v3561 = vmul.f32 %v3512, %v2224
  %v3562 = vmul.f32 %v3515, %v2221
  %v3563 = vmul.f32 %v3518, %v2224
  %v3564 = vmul.f32 %v3521, %v2221
  %v3565 = vmul.f32 %v3524, %v2224
  %v3566 = vmul.f32 %v3527, %v2221
  %v3567 = vmul.f32 %v3530, %v2224
  %v3568 = vmul.f32 %v3533, %v2221
  %v3569 = vmul.f32 %v3536, %v2224
  %v3570 = vsel %vm644, %v3538, 0.0
  %v3571 = vsel %vm644, %v3539, 0.0
  %v3572 = vadd.f32 %v3570, %v3571
  %v3573 = vrot.slane %v3572, 4
  %v3574 = vadd.f32 %v3572, %v3573
  %v3575 = vrot.slane %v3574, 2
  %v3576 = vadd.f32 %v3574, %v3575
  %v3577 = vrot.slane %v3576, 1
  %v3578 = vadd.f32 %v3576, %v3577
  %v3579 = vsel %vm644, %v3540, 0.0
  %v3580 = vsel %vm644, %v3541, 0.0
  %v3581 = vadd.f32 %v3579, %v3580
  %v3582 = vrot.slane %v3581, 4
  %v3583 = vadd.f32 %v3581, %v3582
  %v3584 = vrot.slane %v3583, 2
  %v3585 = vadd.f32 %v3583, %v3584
  %v3586 = vrot.slane %v3585, 1
  %v3587 = vadd.f32 %v3585, %v3586
  %v3588 = vsel %vm644, %v3542, 0.0
  %v3589 = vsel %vm644, %v3543, 0.0
  %v3590 = vadd.f32 %v3588, %v3589
  %v3591 = vrot.slane %v3590, 4
  %v3592 = vadd.f32 %v3590, %v3591
  %v3593 = vrot.slane %v3592, 2
  %v3594 = vadd.f32 %v3592, %v3593
  %v3595 = vrot.slane %v3594, 1
  %v3596 = vadd.f32 %v3594, %v3595
  %v3597 = vsel %vm644, %v3544, 0.0
  %v3598 = vsel %vm644, %v3545, 0.0
  %v3599 = vadd.f32 %v3597, %v3598
  %v3600 = vrot.slane %v3599, 4
  %v3601 = vadd.f32 %v3599, %v3600
  %v3602 = vrot.slane %v3601, 2
  %v3603 = vadd.f32 %v3601, %v3602
  %v3604 = vrot.slane %v3603, 1
  %v3605 = vadd.f32 %v3603, %v3604
  %v3606 = vsel %vm644, %v3546, 0.0
  %v3607 = vsel %vm644, %v3547, 0.0
  %v3608 = vadd.f32 %v3606, %v3607
  %v3609 = vrot.slane %v3608, 4
  %v3610 = vadd.f32 %v3608, %v3609
  %v3611 = vrot.slane %v3610, 2
  %v3612 = vadd.f32 %v3610, %v3611
  %v3613 = vrot.slane %v3612, 1
  %v3614 = vadd.f32 %v3612, %v3613
  %v3615 = vsel %vm644, %v3548, 0.0
  %v3616 = vsel %vm644, %v3549, 0.0
  %v3617 = vadd.f32 %v3615, %v3616
  %v3618 = vrot.slane %v3617, 4
  %v3619 = vadd.f32 %v3617, %v3618
  %v3620 = vrot.slane %v3619, 2
  %v3621 = vadd.f32 %v3619, %v3620
  %v3622 = vrot.slane %v3621, 1
  %v3623 = vadd.f32 %v3621, %v3622
  %v3624 = vsel %vm644, %v3550, 0.0
  %v3625 = vsel %vm644, %v3551, 0.0
  %v3626 = vadd.f32 %v3624, %v3625
  %v3627 = vrot.slane %v3626, 4
  %v3628 = vadd.f32 %v3626, %v3627
  %v3629 = vrot.slane %v3628, 2
  %v3630 = vadd.f32 %v3628, %v3629
  %v3631 = vrot.slane %v3630, 1
  %v3632 = vadd.f32 %v3630, %v3631
  %v3633 = vsel %vm644, %v3552, 0.0
  %v3634 = vsel %vm644, %v3553, 0.0
  %v3635 = vadd.f32 %v3633, %v3634
  %v3636 = vrot.slane %v3635, 4
  %v3637 = vadd.f32 %v3635, %v3636
  %v3638 = vrot.slane %v3637, 2
  %v3639 = vadd.f32 %v3637, %v3638
  %v3640 = vrot.slane %v3639, 1
  %v3641 = vadd.f32 %v3639, %v3640
  %v3642 = vsel %vm644, %v3554, 0.0
  %v3643 = vsel %vm644, %v3555, 0.0
  %v3644 = vadd.f32 %v3642, %v3643
  %v3645 = vrot.slane %v3644, 4
  %v3646 = vadd.f32 %v3644, %v3645
  %v3647 = vrot.slane %v3646, 2
  %v3648 = vadd.f32 %v3646, %v3647
  %v3649 = vrot.slane %v3648, 1
  %v3650 = vadd.f32 %v3648, %v3649
  %v3651 = vsel %vm644, %v3556, 0.0
  %v3652 = vsel %vm644, %v3557, 0.0
  %v3653 = vadd.f32 %v3651, %v3652
  %v3654 = vrot.slane %v3653, 4
  %v3655 = vadd.f32 %v3653, %v3654
  %v3656 = vrot.slane %v3655, 2
  %v3657 = vadd.f32 %v3655, %v3656
  %v3658 = vrot.slane %v3657, 1
  %v3659 = vadd.f32 %v3657, %v3658
  %v3660 = vsel %vm644, %v3558, 0.0
  %v3661 = vsel %vm644, %v3559, 0.0
  %v3662 = vadd.f32 %v3660, %v3661
  %v3663 = vrot.slane %v3662, 4
  %v3664 = vadd.f32 %v3662, %v3663
  %v3665 = vrot.slane %v3664, 2
  %v3666 = vadd.f32 %v3664, %v3665
  %v3667 = vrot.slane %v3666, 1
  %v3668 = vadd.f32 %v3666, %v3667
  %v3669 = vsel %vm644, %v3560, 0.0
  %v3670 = vsel %vm644, %v3561, 0.0
  %v3671 = vadd.f32 %v3669, %v3670
  %v3672 = vrot.slane %v3671, 4
  %v3673 = vadd.f32 %v3671, %v3672
  %v3674 = vrot.slane %v3673, 2
  %v3675 = vadd.f32 %v3673, %v3674
  %v3676 = vrot.slane %v3675, 1
  %v3677 = vadd.f32 %v3675, %v3676
  %v3678 = vsel %vm644, %v3562, 0.0
  %v3679 = vsel %vm644, %v3563, 0.0
  %v3680 = vadd.f32 %v3678, %v3679
  %v3681 = vrot.slane %v3680, 4
  %v3682 = vadd.f32 %v3680, %v3681
  %v3683 = vrot.slane %v3682, 2
  %v3684 = vadd.f32 %v3682, %v3683
  %v3685 = vrot.slane %v3684, 1
  %v3686 = vadd.f32 %v3684, %v3685
  %v3687 = vsel %vm644, %v3564, 0.0
  %v3688 = vsel %vm644, %v3565, 0.0
  %v3689 = vadd.f32 %v3687, %v3688
  %v3690 = vrot.slane %v3689, 4
  %v3691 = vadd.f32 %v3689, %v3690
  %v3692 = vrot.slane %v3691, 2
  %v3693 = vadd.f32 %v3691, %v3692
  %v3694 = vrot.slane %v3693, 1
  %v3695 = vadd.f32 %v3693, %v3694
  %v3696 = vsel %vm644, %v3566, 0.0
  %v3697 = vsel %vm644, %v3567, 0.0
  %v3698 = vadd.f32 %v3696, %v3697
  %v3699 = vrot.slane %v3698, 4
  %v3700 = vadd.f32 %v3698, %v3699
  %v3701 = vrot.slane %v3700, 2
  %v3702 = vadd.f32 %v3700, %v3701
  %v3703 = vrot.slane %v3702, 1
  %v3704 = vadd.f32 %v3702, %v3703
  %v3705 = vsel %vm644, %v3568, 0.0
  %v3706 = vsel %vm644, %v3569, 0.0
  %v3707 = vadd.f32 %v3705, %v3706
  %v3708 = vrot.slane %v3707, 4
  %v3709 = vadd.f32 %v3707, %v3708
  %v3710 = vrot.slane %v3709, 2
  %v3711 = vadd.f32 %v3709, %v3710
  %v3712 = vrot.slane %v3711, 1
  %v3713 = vadd.f32 %v3711, %v3712
  %v3714 = vld [vmem:[%s12] sm:$0x1]
  %v3715 = vld [vmem:[%s13] sm:$0x1]
  %v3732 = vsel %vm1871, %v3587, %v3578
  %v3733 = vsel %vm1873, %v3596, %v3732
  %v3734 = vsel %vm1875, %v3605, %v3733
  %v3735 = vsel %vm1877, %v3614, %v3734
  %v3736 = vsel %vm1879, %v3623, %v3735
  %v3737 = vsel %vm1881, %v3632, %v3736
  %v3738 = vsel %vm1883, %v3641, %v3737
  %v3739 = vsel %vm1871, %v3659, %v3650
  %v3740 = vsel %vm1873, %v3668, %v3739
  %v3741 = vsel %vm1875, %v3677, %v3740
  %v3742 = vsel %vm1877, %v3686, %v3741
  %v3743 = vsel %vm1879, %v3695, %v3742
  %v3744 = vsel %vm1881, %v3704, %v3743
  %v3745 = vsel %vm1883, %v3713, %v3744
  %v3748 = vsel %vm644, %v3738, 0.0
  %3749 = vadd.xlane.f32.xlu0 %v3748
  %v3750 = vpop.xlane.xlu0 %3749
  %v3751 = vsel %vm644, %v3745, 0.0
  %3752 = vadd.xlane.f32.xlu0 %v3751
  %v3753 = vpop.xlane.xlu0 %3752
  %v3754 = vmul.f32 %v3750, %v1906
  %v3755 = vmul.f32 %v3753, %v1906
  %v3758 = vrot.slane %v3754, 1
  %v3759 = vrot.slane %v3754, 2
  %v3760 = vrot.slane %v3754, 3
  %v3761 = vrot.slane %v3754, 4
  %v3762 = vrot.slane %v3754, 5
  %v3763 = vrot.slane %v3754, 6
  %v3764 = vrot.slane %v3754, 7
  %v3765 = vrot.slane %v3755, 1
  %v3766 = vrot.slane %v3755, 2
  %v3767 = vrot.slane %v3755, 3
  %v3768 = vrot.slane %v3755, 4
  %v3769 = vrot.slane %v3755, 5
  %v3770 = vrot.slane %v3755, 6
  %v3771 = vrot.slane %v3755, 7
  %v3788 = vsub.f32 %v3578, %v3754
  %v3789 = vsub.f32 %v3587, %v3758
  %v3790 = vsub.f32 %v3596, %v3759
  %v3791 = vsub.f32 %v3605, %v3760
  %v3792 = vsub.f32 %v3614, %v3761
  %v3793 = vsub.f32 %v3623, %v3762
  %v3794 = vsub.f32 %v3632, %v3763
  %v3795 = vsub.f32 %v3641, %v3764
  %v3796 = vsub.f32 %v3650, %v3755
  %v3797 = vsub.f32 %v3659, %v3765
  %v3798 = vsub.f32 %v3668, %v3766
  %v3799 = vsub.f32 %v3677, %v3767
  %v3800 = vsub.f32 %v3686, %v3768
  %v3801 = vsub.f32 %v3695, %v3769
  %v3802 = vsub.f32 %v3704, %v3770
  %v3803 = vsub.f32 %v3713, %v3771
  %v3804 = vmul.f32 %v3788, %v3788
  %v3805 = vmul.f32 %v3789, %v3789
  %v3806 = vmul.f32 %v3790, %v3790
  %v3807 = vmul.f32 %v3791, %v3791
  %v3808 = vmul.f32 %v3792, %v3792
  %v3809 = vmul.f32 %v3793, %v3793
  %v3810 = vmul.f32 %v3794, %v3794
  %v3811 = vmul.f32 %v3795, %v3795
  %v3812 = vmul.f32 %v3796, %v3796
  %v3813 = vmul.f32 %v3797, %v3797
  %v3814 = vmul.f32 %v3798, %v3798
  %v3815 = vmul.f32 %v3799, %v3799
  %v3816 = vmul.f32 %v3800, %v3800
  %v3817 = vmul.f32 %v3801, %v3801
  %v3818 = vmul.f32 %v3802, %v3802
  %v3819 = vmul.f32 %v3803, %v3803
  %v3836 = vrot.slane %v3805, 7
  %v3837 = vsel %vm1871, %v3836, %v3804
  %v3838 = vrot.slane %v3806, 6
  %v3839 = vsel %vm1873, %v3838, %v3837
  %v3840 = vrot.slane %v3807, 5
  %v3841 = vsel %vm1875, %v3840, %v3839
  %v3842 = vrot.slane %v3808, 4
  %v3843 = vsel %vm1877, %v3842, %v3841
  %v3844 = vrot.slane %v3809, 3
  %v3845 = vsel %vm1879, %v3844, %v3843
  %v3846 = vrot.slane %v3810, 2
  %v3847 = vsel %vm1881, %v3846, %v3845
  %v3848 = vrot.slane %v3811, 1
  %v3849 = vsel %vm1883, %v3848, %v3847
  %v3850 = vrot.slane %v3813, 7
  %v3851 = vsel %vm1871, %v3850, %v3812
  %v3852 = vrot.slane %v3814, 6
  %v3853 = vsel %vm1873, %v3852, %v3851
  %v3854 = vrot.slane %v3815, 5
  %v3855 = vsel %vm1875, %v3854, %v3853
  %v3856 = vrot.slane %v3816, 4
  %v3857 = vsel %vm1877, %v3856, %v3855
  %v3858 = vrot.slane %v3817, 3
  %v3859 = vsel %vm1879, %v3858, %v3857
  %v3860 = vrot.slane %v3818, 2
  %v3861 = vsel %vm1881, %v3860, %v3859
  %v3862 = vrot.slane %v3819, 1
  %v3863 = vsel %vm1883, %v3862, %v3861
  %v3866 = vsel %vm644, %v3849, 0.0
  %3867 = vadd.xlane.f32.xlu0 %v3866
  %v3868 = vpop.xlane.xlu0 %3867
  %v3869 = vsel %vm644, %v3863, 0.0
  %3870 = vadd.xlane.f32.xlu0 %v3869
  %v3871 = vpop.xlane.xlu0 %3870
  %v3872 = vmul.f32 %v3868, %v1906
  %v3873 = vmul.f32 %v3871, %v1906
  %v3874 = vadd.f32 %v3872, 1e-05
  %v3875 = vadd.f32 %v3873, 1e-05
  %v3876 = vrsqrt.pop %v3874
  %v3877 = vmul.f32 %v3876, %v3874
  %v3878 = vmul.f32 %v3877, %v3876
  %v3879 = vmul.f32 0.5, %v3878
  %v3880 = vsub.f32 1.5, %v3879
  %v3881 = vmul.f32 %v3876, %v3880
  %vm3882 = vweird.f32 %v3874
  %vm3883 = vweird.f32 %v3876
  %vm3884 = vmor %vm3882, %vm3883
  %v3885 = vsel %vm3884, %v3876, %v3881
  %v3886 = vrsqrt.pop %v3875
  %v3887 = vmul.f32 %v3886, %v3875
  %v3888 = vmul.f32 %v3887, %v3886
  %v3889 = vmul.f32 0.5, %v3888
  %v3890 = vsub.f32 1.5, %v3889
  %v3891 = vmul.f32 %v3886, %v3890
  %vm3892 = vweird.f32 %v3875
  %vm3893 = vweird.f32 %v3886
  %vm3894 = vmor %vm3892, %vm3893
  %v3895 = vsel %vm3894, %v3886, %v3891
  %v3898 = vrot.slane %v3885, 1
  %v3899 = vrot.slane %v3885, 2
  %v3900 = vrot.slane %v3885, 3
  %v3901 = vrot.slane %v3885, 4
  %v3902 = vrot.slane %v3885, 5
  %v3903 = vrot.slane %v3885, 6
  %v3904 = vrot.slane %v3885, 7
  %v3905 = vrot.slane %v3895, 1
  %v3906 = vrot.slane %v3895, 2
  %v3907 = vrot.slane %v3895, 3
  %v3908 = vrot.slane %v3895, 4
  %v3909 = vrot.slane %v3895, 5
  %v3910 = vrot.slane %v3895, 6
  %v3911 = vrot.slane %v3895, 7
  %v3928 = vmul.f32 %v3788, %v3885
  %v3929 = vmul.f32 %v3789, %v3898
  %v3930 = vmul.f32 %v3790, %v3899
  %v3931 = vmul.f32 %v3791, %v3900
  %v3932 = vmul.f32 %v3792, %v3901
  %v3933 = vmul.f32 %v3793, %v3902
  %v3934 = vmul.f32 %v3794, %v3903
  %v3935 = vmul.f32 %v3795, %v3904
  %v3936 = vmul.f32 %v3796, %v3895
  %v3937 = vmul.f32 %v3797, %v3905
  %v3938 = vmul.f32 %v3798, %v3906
  %v3939 = vmul.f32 %v3799, %v3907
  %v3940 = vmul.f32 %v3800, %v3908
  %v3941 = vmul.f32 %v3801, %v3909
  %v3942 = vmul.f32 %v3802, %v3910
  %v3943 = vmul.f32 %v3803, %v3911
  %v3945 = vperm.slane %v3714, 0
  %v3947 = vmul.f32 %v3928, %v3945
  %v3948 = vmul.f32 %v3929, %v3945
  %v3949 = vmul.f32 %v3930, %v3945
  %v3950 = vmul.f32 %v3931, %v3945
  %v3951 = vmul.f32 %v3932, %v3945
  %v3952 = vmul.f32 %v3933, %v3945
  %v3953 = vmul.f32 %v3934, %v3945
  %v3954 = vmul.f32 %v3935, %v3945
  %v3955 = vmul.f32 %v3936, %v3945
  %v3956 = vmul.f32 %v3937, %v3945
  %v3957 = vmul.f32 %v3938, %v3945
  %v3958 = vmul.f32 %v3939, %v3945
  %v3959 = vmul.f32 %v3940, %v3945
  %v3960 = vmul.f32 %v3941, %v3945
  %v3961 = vmul.f32 %v3942, %v3945
  %v3962 = vmul.f32 %v3943, %v3945
  %v3964 = vperm.slane %v3715, 0
  %v3966 = vadd.f32 %v3947, %v3964
  %v3967 = vadd.f32 %v3948, %v3964
  %v3968 = vadd.f32 %v3949, %v3964
  %v3969 = vadd.f32 %v3950, %v3964
  %v3970 = vadd.f32 %v3951, %v3964
  %v3971 = vadd.f32 %v3952, %v3964
  %v3972 = vadd.f32 %v3953, %v3964
  %v3973 = vadd.f32 %v3954, %v3964
  %v3974 = vadd.f32 %v3955, %v3964
  %v3975 = vadd.f32 %v3956, %v3964
  %v3976 = vadd.f32 %v3957, %v3964
  %v3977 = vadd.f32 %v3958, %v3964
  %v3978 = vadd.f32 %v3959, %v3964
  %v3979 = vadd.f32 %v3960, %v3964
  %v3980 = vadd.f32 %v3961, %v3964
  %v3981 = vadd.f32 %v3962, %v3964
  %v3982 = vmul.f32 %v2135, 0.1
  %v3983 = vmul.f32 %v2136, 0.1
  %v3984 = vmul.f32 %v2137, 0.1
  %v3985 = vmul.f32 %v2138, 0.1
  %v3986 = vmul.f32 %v2139, 0.1
  %v3987 = vmul.f32 %v2140, 0.1
  %v3988 = vmul.f32 %v2141, 0.1
  %v3989 = vmul.f32 %v2142, 0.1
  %v3990 = vmul.f32 %v2143, 0.1
  %v3991 = vmul.f32 %v2144, 0.1
  %v3992 = vmul.f32 %v2145, 0.1
  %v3993 = vmul.f32 %v2146, 0.1
  %v3994 = vmul.f32 %v2147, 0.1
  %v3995 = vmul.f32 %v2148, 0.1
  %v3996 = vmul.f32 %v2149, 0.1
  %v3997 = vmul.f32 %v2150, 0.1
  %v3998 = vadd.f32 %v3966, %v3982
  %v3999 = vadd.f32 %v3967, %v3983
  %v4000 = vadd.f32 %v3968, %v3984
  %v4001 = vadd.f32 %v3969, %v3985
  %v4002 = vadd.f32 %v3970, %v3986
  %v4003 = vadd.f32 %v3971, %v3987
  %v4004 = vadd.f32 %v3972, %v3988
  %v4005 = vadd.f32 %v3973, %v3989
  %v4006 = vadd.f32 %v3974, %v3990
  %v4007 = vadd.f32 %v3975, %v3991
  %v4008 = vadd.f32 %v3976, %v3992
  %v4009 = vadd.f32 %v3977, %v3993
  %v4010 = vadd.f32 %v3978, %v3994
  %v4011 = vadd.f32 %v3979, %v3995
  %v4012 = vadd.f32 %v3980, %v3996
  %v4013 = vadd.f32 %v3981, %v3997
  %v4014 = vmax.f32 %v3998, 0.0
  %v4015 = vmax.f32 %v3999, 0.0
  %v4016 = vmax.f32 %v4000, 0.0
  %v4017 = vmax.f32 %v4001, 0.0
  %v4018 = vmax.f32 %v4002, 0.0
  %v4019 = vmax.f32 %v4003, 0.0
  %v4020 = vmax.f32 %v4004, 0.0
  %v4021 = vmax.f32 %v4005, 0.0
  %v4022 = vmax.f32 %v4006, 0.0
  %v4023 = vmax.f32 %v4007, 0.0
  %v4024 = vmax.f32 %v4008, 0.0
  %v4025 = vmax.f32 %v4009, 0.0
  %v4026 = vmax.f32 %v4010, 0.0
  %v4027 = vmax.f32 %v4011, 0.0
  %v4028 = vmax.f32 %v4012, 0.0
  %v4029 = vmax.f32 %v4013, 0.0
  %v4030 = vld [vmem:[%s14] sm:$0xff]
  %v4031 = vld [vmem:[%s14 + $0x8] sm:$0xff]
  %v4032 = vld [vmem:[%s14 + $0x10] sm:$0xff]
  %v4033 = vld [vmem:[%s14 + $0x18] sm:$0xff]
  %v4050 = vrot.slane %v4015, 7
  %v4051 = vsel %vm1871, %v4050, %v4014
  %v4052 = vrot.slane %v4016, 6
  %v4053 = vsel %vm1873, %v4052, %v4051
  %v4054 = vrot.slane %v4017, 5
  %v4055 = vsel %vm1875, %v4054, %v4053
  %v4056 = vrot.slane %v4018, 4
  %v4057 = vsel %vm1877, %v4056, %v4055
  %v4058 = vrot.slane %v4019, 3
  %v4059 = vsel %vm1879, %v4058, %v4057
  %v4060 = vrot.slane %v4020, 2
  %v4061 = vsel %vm1881, %v4060, %v4059
  %v4062 = vrot.slane %v4021, 1
  %v4063 = vsel %vm1883, %v4062, %v4061
  %v4064 = vrot.slane %v4023, 7
  %v4065 = vsel %vm1871, %v4064, %v4022
  %v4066 = vrot.slane %v4024, 6
  %v4067 = vsel %vm1873, %v4066, %v4065
  %v4068 = vrot.slane %v4025, 5
  %v4069 = vsel %vm1875, %v4068, %v4067
  %v4070 = vrot.slane %v4026, 4
  %v4071 = vsel %vm1877, %v4070, %v4069
  %v4072 = vrot.slane %v4027, 3
  %v4073 = vsel %vm1879, %v4072, %v4071
  %v4074 = vrot.slane %v4028, 2
  %v4075 = vsel %vm1881, %v4074, %v4073
  %v4076 = vrot.slane %v4029, 1
  %v4077 = vsel %vm1883, %v4076, %v4075
  %v4078 = vsel %vm644, %v4063, 0
  %v4080 = vsel %vm644, %v4077, 0
  %4082 = vmatpush.msra.mxu0 0.0
  %4083 = vmatpush.msra.mxu0 0.0
  %4084 = vmatpush.msra.mxu0 0.0
  %4085 = vmatpush.msra.mxu0 0.0
  %4086 = vmatpush.msra.mxu0 0.0
  %4087 = vmatpush.msra.mxu0 0.0
  %4088 = vmatpush.msra.mxu0 0.0
  %4089 = vmatpush.msra.mxu0 0.0
  %4090 = vmatpush.msra.mxu0 0.0
  %4091 = vmatpush.msra.mxu0 0.0
  %4092 = vmatpush.msra.mxu0 0.0
  %4093 = vmatpush.msra.mxu0 0.0
  %4094 = vmatpush.msra.mxu0 %v4033
  %4095 = vmatpush.msra.mxu0 %v4032
  %4096 = vmatpush.msra.mxu0 %v4031
  %4097 = vmatpush.msra.mxu0 %v4030
  %4098 = vmatmul.f32.gmra.mxu0 %v4078
  %v4099 = vpop.f32.mrf.mxu0
  %v4100 = vadd.f32 0.0, %v4099
  %4101 = vmatmul.f32.gmra.mxu0 %v4080
  %v4102 = vpop.f32.mrf.mxu0
  %v4103 = vadd.f32 0.0, %v4102
  %4104 = vdwg.mxu0
  %v4107 = vrot.slane %v4100, 1
  %v4108 = vrot.slane %v4100, 2
  %v4109 = vrot.slane %v4100, 3
  %v4110 = vrot.slane %v4100, 4
  %v4111 = vrot.slane %v4100, 5
  %v4112 = vrot.slane %v4100, 6
  %v4113 = vrot.slane %v4100, 7
  %v4114 = vrot.slane %v4103, 1
  %v4115 = vrot.slane %v4103, 2
  %v4116 = vrot.slane %v4103, 3
  %v4117 = vrot.slane %v4103, 4
  %v4118 = vrot.slane %v4103, 5
  %v4119 = vrot.slane %v4103, 6
  %v4120 = vrot.slane %v4103, 7
  %v4121 = vperm.slane %v4100, 0
  %v4122 = vperm.slane %v4107, 0
  %v4123 = vperm.slane %v4108, 0
  %v4124 = vperm.slane %v4109, 0
  %v4125 = vperm.slane %v4110, 0
  %v4126 = vperm.slane %v4111, 0
  %v4127 = vperm.slane %v4112, 0
  %v4128 = vperm.slane %v4113, 0
  %v4129 = vperm.slane %v4103, 0
  %v4130 = vperm.slane %v4114, 0
  %v4131 = vperm.slane %v4115, 0
  %v4132 = vperm.slane %v4116, 0
  %v4133 = vperm.slane %v4117, 0
  %v4134 = vperm.slane %v4118, 0
  %v4135 = vperm.slane %v4119, 0
  %v4136 = vperm.slane %v4120, 0
  %4153 = vrot.lane.b32.xlu0 %v4100, 32
  %v4154 = vpop.permute.xlu0 %4153
  %4155 = vrot.lane.b32.xlu0 %v4103, 32
  %v4156 = vpop.permute.xlu0 %4155
  %v4159 = vadd.f32 %v4121, %v4154
  %v4160 = vadd.f32 %v4121, %v4156
  %v4161 = vadd.f32 %v4122, %v4154
  %v4162 = vadd.f32 %v4122, %v4156
  %v4163 = vadd.f32 %v4123, %v4154
  %v4164 = vadd.f32 %v4123, %v4156
  %v4165 = vadd.f32 %v4124, %v4154
  %v4166 = vadd.f32 %v4124, %v4156
  %v4167 = vadd.f32 %v4125, %v4154
  %v4168 = vadd.f32 %v4125, %v4156
  %v4169 = vadd.f32 %v4126, %v4154
  %v4170 = vadd.f32 %v4126, %v4156
  %v4171 = vadd.f32 %v4127, %v4154
  %v4172 = vadd.f32 %v4127, %v4156
  %v4173 = vadd.f32 %v4128, %v4154
  %v4174 = vadd.f32 %v4128, %v4156
  %v4175 = vadd.f32 %v4129, %v4154
  %v4176 = vadd.f32 %v4129, %v4156
  %v4177 = vadd.f32 %v4130, %v4154
  %v4178 = vadd.f32 %v4130, %v4156
  %v4179 = vadd.f32 %v4131, %v4154
  %v4180 = vadd.f32 %v4131, %v4156
  %v4181 = vadd.f32 %v4132, %v4154
  %v4182 = vadd.f32 %v4132, %v4156
  %v4183 = vadd.f32 %v4133, %v4154
  %v4184 = vadd.f32 %v4133, %v4156
  %v4185 = vadd.f32 %v4134, %v4154
  %v4186 = vadd.f32 %v4134, %v4156
  %v4187 = vadd.f32 %v4135, %v4154
  %v4188 = vadd.f32 %v4135, %v4156
  %v4189 = vadd.f32 %v4136, %v4154
  %v4190 = vadd.f32 %v4136, %v4156
  %vm4191 = vcmp.gt.f32.partialorder %v4159, 0.0
  %vm4192 = vcmp.gt.f32.partialorder %v4160, 0.0
  %vm4193 = vcmp.gt.f32.partialorder %v4161, 0.0
  %vm4194 = vcmp.gt.f32.partialorder %v4162, 0.0
  %vm4195 = vcmp.gt.f32.partialorder %v4163, 0.0
  %vm4196 = vcmp.gt.f32.partialorder %v4164, 0.0
  %vm4197 = vcmp.gt.f32.partialorder %v4165, 0.0
  %vm4198 = vcmp.gt.f32.partialorder %v4166, 0.0
  %vm4199 = vcmp.gt.f32.partialorder %v4167, 0.0
  %vm4200 = vcmp.gt.f32.partialorder %v4168, 0.0
  %vm4201 = vcmp.gt.f32.partialorder %v4169, 0.0
  %vm4202 = vcmp.gt.f32.partialorder %v4170, 0.0
  %vm4203 = vcmp.gt.f32.partialorder %v4171, 0.0
  %vm4204 = vcmp.gt.f32.partialorder %v4172, 0.0
  %vm4205 = vcmp.gt.f32.partialorder %v4173, 0.0
  %vm4206 = vcmp.gt.f32.partialorder %v4174, 0.0
  %vm4207 = vcmp.gt.f32.partialorder %v4175, 0.0
  %vm4208 = vcmp.gt.f32.partialorder %v4176, 0.0
  %vm4209 = vcmp.gt.f32.partialorder %v4177, 0.0
  %vm4210 = vcmp.gt.f32.partialorder %v4178, 0.0
  %vm4211 = vcmp.gt.f32.partialorder %v4179, 0.0
  %vm4212 = vcmp.gt.f32.partialorder %v4180, 0.0
  %vm4213 = vcmp.gt.f32.partialorder %v4181, 0.0
  %vm4214 = vcmp.gt.f32.partialorder %v4182, 0.0
  %vm4215 = vcmp.gt.f32.partialorder %v4183, 0.0
  %vm4216 = vcmp.gt.f32.partialorder %v4184, 0.0
  %vm4217 = vcmp.gt.f32.partialorder %v4185, 0.0
  %vm4218 = vcmp.gt.f32.partialorder %v4186, 0.0
  %vm4219 = vcmp.gt.f32.partialorder %v4187, 0.0
  %vm4220 = vcmp.gt.f32.partialorder %v4188, 0.0
  %vm4221 = vcmp.gt.f32.partialorder %v4189, 0.0
  %vm4222 = vcmp.gt.f32.partialorder %v4190, 0.0
  %v4223 = vmul.f32 %v4159, 0.2
  %v4224 = vmul.f32 %v4160, 0.2
  %v4225 = vmul.f32 %v4161, 0.2
  %v4226 = vmul.f32 %v4162, 0.2
  %v4227 = vmul.f32 %v4163, 0.2
  %v4228 = vmul.f32 %v4164, 0.2
  %v4229 = vmul.f32 %v4165, 0.2
  %v4230 = vmul.f32 %v4166, 0.2
  %v4231 = vmul.f32 %v4167, 0.2
  %v4232 = vmul.f32 %v4168, 0.2
  %v4233 = vmul.f32 %v4169, 0.2
  %v4234 = vmul.f32 %v4170, 0.2
  %v4235 = vmul.f32 %v4171, 0.2
  %v4236 = vmul.f32 %v4172, 0.2
  %v4237 = vmul.f32 %v4173, 0.2
  %v4238 = vmul.f32 %v4174, 0.2
  %v4239 = vmul.f32 %v4175, 0.2
  %v4240 = vmul.f32 %v4176, 0.2
  %v4241 = vmul.f32 %v4177, 0.2
  %v4242 = vmul.f32 %v4178, 0.2
  %v4243 = vmul.f32 %v4179, 0.2
  %v4244 = vmul.f32 %v4180, 0.2
  %v4245 = vmul.f32 %v4181, 0.2
  %v4246 = vmul.f32 %v4182, 0.2
  %v4247 = vmul.f32 %v4183, 0.2
  %v4248 = vmul.f32 %v4184, 0.2
  %v4249 = vmul.f32 %v4185, 0.2
  %v4250 = vmul.f32 %v4186, 0.2
  %v4251 = vmul.f32 %v4187, 0.2
  %v4252 = vmul.f32 %v4188, 0.2
  %v4253 = vmul.f32 %v4189, 0.2
  %v4254 = vmul.f32 %v4190, 0.2
  %v4255 = vsel %vm4191, %v4159, %v4223
  %v4256 = vsel %vm4192, %v4160, %v4224
  %v4257 = vsel %vm4193, %v4161, %v4225
  %v4258 = vsel %vm4194, %v4162, %v4226
  %v4259 = vsel %vm4195, %v4163, %v4227
  %v4260 = vsel %vm4196, %v4164, %v4228
  %v4261 = vsel %vm4197, %v4165, %v4229
  %v4262 = vsel %vm4198, %v4166, %v4230
  %v4263 = vsel %vm4199, %v4167, %v4231
  %v4264 = vsel %vm4200, %v4168, %v4232
  %v4265 = vsel %vm4201, %v4169, %v4233
  %v4266 = vsel %vm4202, %v4170, %v4234
  %v4267 = vsel %vm4203, %v4171, %v4235
  %v4268 = vsel %vm4204, %v4172, %v4236
  %v4269 = vsel %vm4205, %v4173, %v4237
  %v4270 = vsel %vm4206, %v4174, %v4238
  %v4271 = vsel %vm4207, %v4175, %v4239
  %v4272 = vsel %vm4208, %v4176, %v4240
  %v4273 = vsel %vm4209, %v4177, %v4241
  %v4274 = vsel %vm4210, %v4178, %v4242
  %v4275 = vsel %vm4211, %v4179, %v4243
  %v4276 = vsel %vm4212, %v4180, %v4244
  %v4277 = vsel %vm4213, %v4181, %v4245
  %v4278 = vsel %vm4214, %v4182, %v4246
  %v4279 = vsel %vm4215, %v4183, %v4247
  %v4280 = vsel %vm4216, %v4184, %v4248
  %v4281 = vsel %vm4217, %v4185, %v4249
  %v4282 = vsel %vm4218, %v4186, %v4250
  %v4283 = vsel %vm4219, %v4187, %v4251
  %v4284 = vsel %vm4220, %v4188, %v4252
  %v4285 = vsel %vm4221, %v4189, %v4253
  %v4286 = vsel %vm4222, %v4190, %v4254
  %v4287 = vld [vmem:[%s15] sm:$0xff]
  %v4288 = vld [vmem:[%s15 + $0x8] sm:$0xff]
  %v4289 = vld [vmem:[%s15 + $0x10] sm:$0xff]
  %v4290 = vld [vmem:[%s15 + $0x18] sm:$0xff]
  %4323 = vrot.lane.b32.xlu0 %v4255, 96
  %v4324 = vpop.permute.xlu0 %4323
  %4325 = vrot.lane.b32.xlu0 %v4256, 96
  %v4326 = vpop.permute.xlu0 %4325
  %4327 = vrot.lane.b32.xlu0 %v4257, 96
  %v4328 = vpop.permute.xlu0 %4327
  %4329 = vrot.lane.b32.xlu0 %v4258, 96
  %v4330 = vpop.permute.xlu0 %4329
  %4331 = vrot.lane.b32.xlu0 %v4259, 96
  %v4332 = vpop.permute.xlu0 %4331
  %4333 = vrot.lane.b32.xlu0 %v4260, 96
  %v4334 = vpop.permute.xlu0 %4333
  %4335 = vrot.lane.b32.xlu0 %v4261, 96
  %v4336 = vpop.permute.xlu0 %4335
  %4337 = vrot.lane.b32.xlu0 %v4262, 96
  %v4338 = vpop.permute.xlu0 %4337
  %4339 = vrot.lane.b32.xlu0 %v4263, 96
  %v4340 = vpop.permute.xlu0 %4339
  %4341 = vrot.lane.b32.xlu0 %v4264, 96
  %v4342 = vpop.permute.xlu0 %4341
  %4343 = vrot.lane.b32.xlu0 %v4265, 96
  %v4344 = vpop.permute.xlu0 %4343
  %4345 = vrot.lane.b32.xlu0 %v4266, 96
  %v4346 = vpop.permute.xlu0 %4345
  %4347 = vrot.lane.b32.xlu0 %v4267, 96
  %v4348 = vpop.permute.xlu0 %4347
  %4349 = vrot.lane.b32.xlu0 %v4268, 96
  %v4350 = vpop.permute.xlu0 %4349
  %4351 = vrot.lane.b32.xlu0 %v4269, 96
  %v4352 = vpop.permute.xlu0 %4351
  %4353 = vrot.lane.b32.xlu0 %v4270, 96
  %v4354 = vpop.permute.xlu0 %4353
  %4355 = vrot.lane.b32.xlu0 %v4271, 96
  %v4356 = vpop.permute.xlu0 %4355
  %4357 = vrot.lane.b32.xlu0 %v4272, 96
  %v4358 = vpop.permute.xlu0 %4357
  %4359 = vrot.lane.b32.xlu0 %v4273, 96
  %v4360 = vpop.permute.xlu0 %4359
  %4361 = vrot.lane.b32.xlu0 %v4274, 96
  %v4362 = vpop.permute.xlu0 %4361
  %4363 = vrot.lane.b32.xlu0 %v4275, 96
  %v4364 = vpop.permute.xlu0 %4363
  %4365 = vrot.lane.b32.xlu0 %v4276, 96
  %v4366 = vpop.permute.xlu0 %4365
  %4367 = vrot.lane.b32.xlu0 %v4277, 96
  %v4368 = vpop.permute.xlu0 %4367
  %4369 = vrot.lane.b32.xlu0 %v4278, 96
  %v4370 = vpop.permute.xlu0 %4369
  %4371 = vrot.lane.b32.xlu0 %v4279, 96
  %v4372 = vpop.permute.xlu0 %4371
  %4373 = vrot.lane.b32.xlu0 %v4280, 96
  %v4374 = vpop.permute.xlu0 %4373
  %4375 = vrot.lane.b32.xlu0 %v4281, 96
  %v4376 = vpop.permute.xlu0 %4375
  %4377 = vrot.lane.b32.xlu0 %v4282, 96
  %v4378 = vpop.permute.xlu0 %4377
  %4379 = vrot.lane.b32.xlu0 %v4283, 96
  %v4380 = vpop.permute.xlu0 %4379
  %4381 = vrot.lane.b32.xlu0 %v4284, 96
  %v4382 = vpop.permute.xlu0 %4381
  %4383 = vrot.lane.b32.xlu0 %v4285, 96
  %v4384 = vpop.permute.xlu0 %4383
  %4385 = vrot.lane.b32.xlu0 %v4286, 96
  %v4386 = vpop.permute.xlu0 %4385
  %v4387 = vsel %vm644, %v4324, 0
  %v4389 = vsel %vm644, %v4326, 0
  %v4391 = vsel %vm644, %v4328, 0
  %v4393 = vsel %vm644, %v4330, 0
  %v4395 = vsel %vm644, %v4332, 0
  %v4397 = vsel %vm644, %v4334, 0
  %v4399 = vsel %vm644, %v4336, 0
  %v4401 = vsel %vm644, %v4338, 0
  %v4403 = vsel %vm644, %v4340, 0
  %v4405 = vsel %vm644, %v4342, 0
  %v4407 = vsel %vm644, %v4344, 0
  %v4409 = vsel %vm644, %v4346, 0
  %v4411 = vsel %vm644, %v4348, 0
  %v4413 = vsel %vm644, %v4350, 0
  %v4415 = vsel %vm644, %v4352, 0
  %v4417 = vsel %vm644, %v4354, 0
  %v4419 = vsel %vm644, %v4356, 0
  %v4421 = vsel %vm644, %v4358, 0
  %v4423 = vsel %vm644, %v4360, 0
  %v4425 = vsel %vm644, %v4362, 0
  %v4427 = vsel %vm644, %v4364, 0
  %v4429 = vsel %vm644, %v4366, 0
  %v4431 = vsel %vm644, %v4368, 0
  %v4433 = vsel %vm644, %v4370, 0
  %v4435 = vsel %vm644, %v4372, 0
  %v4437 = vsel %vm644, %v4374, 0
  %v4439 = vsel %vm644, %v4376, 0
  %v4441 = vsel %vm644, %v4378, 0
  %v4443 = vsel %vm644, %v4380, 0
  %v4445 = vsel %vm644, %v4382, 0
  %v4447 = vsel %vm644, %v4384, 0
  %v4449 = vsel %vm644, %v4386, 0
  %4451 = vmatpush.msra.mxu0 0.0
  %4452 = vmatpush.msra.mxu0 0.0
  %4453 = vmatpush.msra.mxu0 0.0
  %4454 = vmatpush.msra.mxu0 0.0
  %4455 = vmatpush.msra.mxu0 0.0
  %4456 = vmatpush.msra.mxu0 0.0
  %4457 = vmatpush.msra.mxu0 0.0
  %4458 = vmatpush.msra.mxu0 0.0
  %4459 = vmatpush.msra.mxu0 0.0
  %4460 = vmatpush.msra.mxu0 0.0
  %4461 = vmatpush.msra.mxu0 0.0
  %4462 = vmatpush.msra.mxu0 0.0
  %4463 = vmatpush.msra.mxu0 %v4290
  %4464 = vmatpush.msra.mxu0 %v4289
  %4465 = vmatpush.msra.mxu0 %v4288
  %4466 = vmatpush.msra.mxu0 %v4287
  %4467 = vmatmul.f32.gmra.mxu0 %v4387
  %v4468 = vpop.f32.mrf.mxu0
  %v4469 = vadd.f32 %v76, %v4468
  %4470 = vmatmul.f32.gmra.mxu0 %v4389
  %v4471 = vpop.f32.mrf.mxu0
  %v4472 = vadd.f32 %v77, %v4471
  %4473 = vmatmul.f32.gmra.mxu0 %v4391
  %v4474 = vpop.f32.mrf.mxu0
  %v4475 = vadd.f32 %v78, %v4474
  %4476 = vmatmul.f32.gmra.mxu0 %v4393
  %v4477 = vpop.f32.mrf.mxu0
  %v4478 = vadd.f32 %v79, %v4477
  %4479 = vmatmul.f32.gmra.mxu0 %v4395
  %v4480 = vpop.f32.mrf.mxu0
  %v4481 = vadd.f32 %v80, %v4480
  %4482 = vmatmul.f32.gmra.mxu0 %v4397
  %v4483 = vpop.f32.mrf.mxu0
  %v4484 = vadd.f32 %v81, %v4483
  %4485 = vmatmul.f32.gmra.mxu0 %v4399
  %v4486 = vpop.f32.mrf.mxu0
  %v4487 = vadd.f32 %v82, %v4486
  %4488 = vmatmul.f32.gmra.mxu0 %v4401
  %v4489 = vpop.f32.mrf.mxu0
  %v4490 = vadd.f32 %v83, %v4489
  %4491 = vmatmul.f32.gmra.mxu0 %v4403
  %v4492 = vpop.f32.mrf.mxu0
  %v4493 = vadd.f32 %v84, %v4492
  %4494 = vmatmul.f32.gmra.mxu0 %v4405
  %v4495 = vpop.f32.mrf.mxu0
  %v4496 = vadd.f32 %v85, %v4495
  %4497 = vmatmul.f32.gmra.mxu0 %v4407
  %v4498 = vpop.f32.mrf.mxu0
  %v4499 = vadd.f32 %v86, %v4498
  %4500 = vmatmul.f32.gmra.mxu0 %v4409
  %v4501 = vpop.f32.mrf.mxu0
  %v4502 = vadd.f32 %v87, %v4501
  %4503 = vmatmul.f32.gmra.mxu0 %v4411
  %v4504 = vpop.f32.mrf.mxu0
  %v4505 = vadd.f32 %v88, %v4504
  %4506 = vmatmul.f32.gmra.mxu0 %v4413
  %v4507 = vpop.f32.mrf.mxu0
  %v4508 = vadd.f32 %v89, %v4507
  %4509 = vmatmul.f32.gmra.mxu0 %v4415
  %v4510 = vpop.f32.mrf.mxu0
  %v4511 = vadd.f32 %v90, %v4510
  %4512 = vmatmul.f32.gmra.mxu0 %v4417
  %v4513 = vpop.f32.mrf.mxu0
  %v4514 = vadd.f32 %v91, %v4513
  %4515 = vmatmul.f32.gmra.mxu0 %v4419
  %v4516 = vpop.f32.mrf.mxu0
  %v4517 = vadd.f32 %v92, %v4516
  %4518 = vmatmul.f32.gmra.mxu0 %v4421
  %v4519 = vpop.f32.mrf.mxu0
  %v4520 = vadd.f32 %v93, %v4519
  %4521 = vmatmul.f32.gmra.mxu0 %v4423
  %v4522 = vpop.f32.mrf.mxu0
  %v4523 = vadd.f32 %v94, %v4522
  %4524 = vmatmul.f32.gmra.mxu0 %v4425
  %v4525 = vpop.f32.mrf.mxu0
  %v4526 = vadd.f32 %v95, %v4525
  %4527 = vmatmul.f32.gmra.mxu0 %v4427
  %v4528 = vpop.f32.mrf.mxu0
  %v4529 = vadd.f32 %v96, %v4528
  %4530 = vmatmul.f32.gmra.mxu0 %v4429
  %v4531 = vpop.f32.mrf.mxu0
  %v4532 = vadd.f32 %v97, %v4531
  %4533 = vmatmul.f32.gmra.mxu0 %v4431
  %v4534 = vpop.f32.mrf.mxu0
  %v4535 = vadd.f32 %v98, %v4534
  %4536 = vmatmul.f32.gmra.mxu0 %v4433
  %v4537 = vpop.f32.mrf.mxu0
  %v4538 = vadd.f32 %v99, %v4537
  %4539 = vmatmul.f32.gmra.mxu0 %v4435
  %v4540 = vpop.f32.mrf.mxu0
  %v4541 = vadd.f32 %v100, %v4540
  %4542 = vmatmul.f32.gmra.mxu0 %v4437
  %v4543 = vpop.f32.mrf.mxu0
  %v4544 = vadd.f32 %v101, %v4543
  %4545 = vmatmul.f32.gmra.mxu0 %v4439
  %v4546 = vpop.f32.mrf.mxu0
  %v4547 = vadd.f32 %v102, %v4546
  %4548 = vmatmul.f32.gmra.mxu0 %v4441
  %v4549 = vpop.f32.mrf.mxu0
  %v4550 = vadd.f32 %v103, %v4549
  %4551 = vmatmul.f32.gmra.mxu0 %v4443
  %v4552 = vpop.f32.mrf.mxu0
  %v4553 = vadd.f32 %v104, %v4552
  %4554 = vmatmul.f32.gmra.mxu0 %v4445
  %v4555 = vpop.f32.mrf.mxu0
  %v4556 = vadd.f32 %v105, %v4555
  %4557 = vmatmul.f32.gmra.mxu0 %v4447
  %v4558 = vpop.f32.mrf.mxu0
  %v4559 = vadd.f32 %v106, %v4558
  %4560 = vmatmul.f32.gmra.mxu0 %v4449
  %v4561 = vpop.f32.mrf.mxu0
  %v4562 = vadd.f32 %v107, %v4561
  %4563 = vdwg.mxu0
  %vm4564 = vcmask 7168
  %v4565 = vsel %vm4564, %v4469, -inf
  %v4566 = vsel %vm4564, %v4472, -inf
  %v4567 = vmax.f32 %v4565, %v4566
  %v4568 = vrot.slane %v4567, 4
  %v4569 = vmax.f32 %v4567, %v4568
  %v4570 = vrot.slane %v4569, 2
  %v4571 = vmax.f32 %v4569, %v4570
  %v4572 = vrot.slane %v4571, 1
  %v4573 = vmax.f32 %v4571, %v4572
  %v4574 = vsel %vm4564, %v4475, -inf
  %v4575 = vsel %vm4564, %v4478, -inf
  %v4576 = vmax.f32 %v4574, %v4575
  %v4577 = vrot.slane %v4576, 4
  %v4578 = vmax.f32 %v4576, %v4577
  %v4579 = vrot.slane %v4578, 2
  %v4580 = vmax.f32 %v4578, %v4579
  %v4581 = vrot.slane %v4580, 1
  %v4582 = vmax.f32 %v4580, %v4581
  %v4583 = vsel %vm4564, %v4481, -inf
  %v4584 = vsel %vm4564, %v4484, -inf
  %v4585 = vmax.f32 %v4583, %v4584
  %v4586 = vrot.slane %v4585, 4
  %v4587 = vmax.f32 %v4585, %v4586
  %v4588 = vrot.slane %v4587, 2
  %v4589 = vmax.f32 %v4587, %v4588
  %v4590 = vrot.slane %v4589, 1
  %v4591 = vmax.f32 %v4589, %v4590
  %v4592 = vsel %vm4564, %v4487, -inf
  %v4593 = vsel %vm4564, %v4490, -inf
  %v4594 = vmax.f32 %v4592, %v4593
  %v4595 = vrot.slane %v4594, 4
  %v4596 = vmax.f32 %v4594, %v4595
  %v4597 = vrot.slane %v4596, 2
  %v4598 = vmax.f32 %v4596, %v4597
  %v4599 = vrot.slane %v4598, 1
  %v4600 = vmax.f32 %v4598, %v4599
  %v4601 = vsel %vm4564, %v4493, -inf
  %v4602 = vsel %vm4564, %v4496, -inf
  %v4603 = vmax.f32 %v4601, %v4602
  %v4604 = vrot.slane %v4603, 4
  %v4605 = vmax.f32 %v4603, %v4604
  %v4606 = vrot.slane %v4605, 2
  %v4607 = vmax.f32 %v4605, %v4606
  %v4608 = vrot.slane %v4607, 1
  %v4609 = vmax.f32 %v4607, %v4608
  %v4610 = vsel %vm4564, %v4499, -inf
  %v4611 = vsel %vm4564, %v4502, -inf
  %v4612 = vmax.f32 %v4610, %v4611
  %v4613 = vrot.slane %v4612, 4
  %v4614 = vmax.f32 %v4612, %v4613
  %v4615 = vrot.slane %v4614, 2
  %v4616 = vmax.f32 %v4614, %v4615
  %v4617 = vrot.slane %v4616, 1
  %v4618 = vmax.f32 %v4616, %v4617
  %v4619 = vsel %vm4564, %v4505, -inf
  %v4620 = vsel %vm4564, %v4508, -inf
  %v4621 = vmax.f32 %v4619, %v4620
  %v4622 = vrot.slane %v4621, 4
  %v4623 = vmax.f32 %v4621, %v4622
  %v4624 = vrot.slane %v4623, 2
  %v4625 = vmax.f32 %v4623, %v4624
  %v4626 = vrot.slane %v4625, 1
  %v4627 = vmax.f32 %v4625, %v4626
  %v4628 = vsel %vm4564, %v4511, -inf
  %v4629 = vsel %vm4564, %v4514, -inf
  %v4630 = vmax.f32 %v4628, %v4629
  %v4631 = vrot.slane %v4630, 4
  %v4632 = vmax.f32 %v4630, %v4631
  %v4633 = vrot.slane %v4632, 2
  %v4634 = vmax.f32 %v4632, %v4633
  %v4635 = vrot.slane %v4634, 1
  %v4636 = vmax.f32 %v4634, %v4635
  %v4637 = vsel %vm4564, %v4517, -inf
  %v4638 = vsel %vm4564, %v4520, -inf
  %v4639 = vmax.f32 %v4637, %v4638
  %v4640 = vrot.slane %v4639, 4
  %v4641 = vmax.f32 %v4639, %v4640
  %v4642 = vrot.slane %v4641, 2
  %v4643 = vmax.f32 %v4641, %v4642
  %v4644 = vrot.slane %v4643, 1
  %v4645 = vmax.f32 %v4643, %v4644
  %v4646 = vsel %vm4564, %v4523, -inf
  %v4647 = vsel %vm4564, %v4526, -inf
  %v4648 = vmax.f32 %v4646, %v4647
  %v4649 = vrot.slane %v4648, 4
  %v4650 = vmax.f32 %v4648, %v4649
  %v4651 = vrot.slane %v4650, 2
  %v4652 = vmax.f32 %v4650, %v4651
  %v4653 = vrot.slane %v4652, 1
  %v4654 = vmax.f32 %v4652, %v4653
  %v4655 = vsel %vm4564, %v4529, -inf
  %v4656 = vsel %vm4564, %v4532, -inf
  %v4657 = vmax.f32 %v4655, %v4656
  %v4658 = vrot.slane %v4657, 4
  %v4659 = vmax.f32 %v4657, %v4658
  %v4660 = vrot.slane %v4659, 2
  %v4661 = vmax.f32 %v4659, %v4660
  %v4662 = vrot.slane %v4661, 1
  %v4663 = vmax.f32 %v4661, %v4662
  %v4664 = vsel %vm4564, %v4535, -inf
  %v4665 = vsel %vm4564, %v4538, -inf
  %v4666 = vmax.f32 %v4664, %v4665
  %v4667 = vrot.slane %v4666, 4
  %v4668 = vmax.f32 %v4666, %v4667
  %v4669 = vrot.slane %v4668, 2
  %v4670 = vmax.f32 %v4668, %v4669
  %v4671 = vrot.slane %v4670, 1
  %v4672 = vmax.f32 %v4670, %v4671
  %v4673 = vsel %vm4564, %v4541, -inf
  %v4674 = vsel %vm4564, %v4544, -inf
  %v4675 = vmax.f32 %v4673, %v4674
  %v4676 = vrot.slane %v4675, 4
  %v4677 = vmax.f32 %v4675, %v4676
  %v4678 = vrot.slane %v4677, 2
  %v4679 = vmax.f32 %v4677, %v4678
  %v4680 = vrot.slane %v4679, 1
  %v4681 = vmax.f32 %v4679, %v4680
  %v4682 = vsel %vm4564, %v4547, -inf
  %v4683 = vsel %vm4564, %v4550, -inf
  %v4684 = vmax.f32 %v4682, %v4683
  %v4685 = vrot.slane %v4684, 4
  %v4686 = vmax.f32 %v4684, %v4685
  %v4687 = vrot.slane %v4686, 2
  %v4688 = vmax.f32 %v4686, %v4687
  %v4689 = vrot.slane %v4688, 1
  %v4690 = vmax.f32 %v4688, %v4689
  %v4691 = vsel %vm4564, %v4553, -inf
  %v4692 = vsel %vm4564, %v4556, -inf
  %v4693 = vmax.f32 %v4691, %v4692
  %v4694 = vrot.slane %v4693, 4
  %v4695 = vmax.f32 %v4693, %v4694
  %v4696 = vrot.slane %v4695, 2
  %v4697 = vmax.f32 %v4695, %v4696
  %v4698 = vrot.slane %v4697, 1
  %v4699 = vmax.f32 %v4697, %v4698
  %v4700 = vsel %vm4564, %v4559, -inf
  %v4701 = vsel %vm4564, %v4562, -inf
  %v4702 = vmax.f32 %v4700, %v4701
  %v4703 = vrot.slane %v4702, 4
  %v4704 = vmax.f32 %v4702, %v4703
  %v4705 = vrot.slane %v4704, 2
  %v4706 = vmax.f32 %v4704, %v4705
  %v4707 = vrot.slane %v4706, 1
  %v4708 = vmax.f32 %v4706, %v4707
  %v4709 = vsub.f32 %v4469, %v4573
  %v4710 = vsub.f32 %v4472, %v4573
  %v4711 = vsub.f32 %v4475, %v4582
  %v4712 = vsub.f32 %v4478, %v4582
  %v4713 = vsub.f32 %v4481, %v4591
  %v4714 = vsub.f32 %v4484, %v4591
  %v4715 = vsub.f32 %v4487, %v4600
  %v4716 = vsub.f32 %v4490, %v4600
  %v4717 = vsub.f32 %v4493, %v4609
  %v4718 = vsub.f32 %v4496, %v4609
  %v4719 = vsub.f32 %v4499, %v4618
  %v4720 = vsub.f32 %v4502, %v4618
  %v4721 = vsub.f32 %v4505, %v4627
  %v4722 = vsub.f32 %v4508, %v4627
  %v4723 = vsub.f32 %v4511, %v4636
  %v4724 = vsub.f32 %v4514, %v4636
  %v4725 = vsub.f32 %v4517, %v4645
  %v4726 = vsub.f32 %v4520, %v4645
  %v4727 = vsub.f32 %v4523, %v4654
  %v4728 = vsub.f32 %v4526, %v4654
  %v4729 = vsub.f32 %v4529, %v4663
  %v4730 = vsub.f32 %v4532, %v4663
  %v4731 = vsub.f32 %v4535, %v4672
  %v4732 = vsub.f32 %v4538, %v4672
  %v4733 = vsub.f32 %v4541, %v4681
  %v4734 = vsub.f32 %v4544, %v4681
  %v4735 = vsub.f32 %v4547, %v4690
  %v4736 = vsub.f32 %v4550, %v4690
  %v4737 = vsub.f32 %v4553, %v4699
  %v4738 = vsub.f32 %v4556, %v4699
  %v4739 = vsub.f32 %v4559, %v4708
  %v4740 = vsub.f32 %v4562, %v4708
  %v4741 = vmul.f32 %v4709, 1.442695
  %v4742 = vpow.pop %v4741
  %v4743 = vmul.f32 %v4710, 1.442695
  %v4744 = vpow.pop %v4743
  %v4745 = vmul.f32 %v4711, 1.442695
  %v4746 = vpow.pop %v4745
  %v4747 = vmul.f32 %v4712, 1.442695
  %v4748 = vpow.pop %v4747
  %v4749 = vmul.f32 %v4713, 1.442695
  %v4750 = vpow.pop %v4749
  %v4751 = vmul.f32 %v4714, 1.442695
  %v4752 = vpow.pop %v4751
  %v4753 = vmul.f32 %v4715, 1.442695
  %v4754 = vpow.pop %v4753
  %v4755 = vmul.f32 %v4716, 1.442695
  %v4756 = vpow.pop %v4755
  %v4757 = vmul.f32 %v4717, 1.442695
  %v4758 = vpow.pop %v4757
  %v4759 = vmul.f32 %v4718, 1.442695
  %v4760 = vpow.pop %v4759
  %v4761 = vmul.f32 %v4719, 1.442695
  %v4762 = vpow.pop %v4761
  %v4763 = vmul.f32 %v4720, 1.442695
  %v4764 = vpow.pop %v4763
  %v4765 = vmul.f32 %v4721, 1.442695
  %v4766 = vpow.pop %v4765
  %v4767 = vmul.f32 %v4722, 1.442695
  %v4768 = vpow.pop %v4767
  %v4769 = vmul.f32 %v4723, 1.442695
  %v4770 = vpow.pop %v4769
  %v4771 = vmul.f32 %v4724, 1.442695
  %v4772 = vpow.pop %v4771
  %v4773 = vmul.f32 %v4725, 1.442695
  %v4774 = vpow.pop %v4773
  %v4775 = vmul.f32 %v4726, 1.442695
  %v4776 = vpow.pop %v4775
  %v4777 = vmul.f32 %v4727, 1.442695
  %v4778 = vpow.pop %v4777
  %v4779 = vmul.f32 %v4728, 1.442695
  %v4780 = vpow.pop %v4779
  %v4781 = vmul.f32 %v4729, 1.442695
  %v4782 = vpow.pop %v4781
  %v4783 = vmul.f32 %v4730, 1.442695
  %v4784 = vpow.pop %v4783
  %v4785 = vmul.f32 %v4731, 1.442695
  %v4786 = vpow.pop %v4785
  %v4787 = vmul.f32 %v4732, 1.442695
  %v4788 = vpow.pop %v4787
  %v4789 = vmul.f32 %v4733, 1.442695
  %v4790 = vpow.pop %v4789
  %v4791 = vmul.f32 %v4734, 1.442695
  %v4792 = vpow.pop %v4791
  %v4793 = vmul.f32 %v4735, 1.442695
  %v4794 = vpow.pop %v4793
  %v4795 = vmul.f32 %v4736, 1.442695
  %v4796 = vpow.pop %v4795
  %v4797 = vmul.f32 %v4737, 1.442695
  %v4798 = vpow.pop %v4797
  %v4799 = vmul.f32 %v4738, 1.442695
  %v4800 = vpow.pop %v4799
  %v4801 = vmul.f32 %v4739, 1.442695
  %v4802 = vpow.pop %v4801
  %v4803 = vmul.f32 %v4740, 1.442695
  %v4804 = vpow.pop %v4803
  %v4805 = vsel %vm4564, %v4742, 0.0
  %v4806 = vsel %vm4564, %v4744, 0.0
  %v4807 = vadd.f32 %v4805, %v4806
  %v4808 = vrot.slane %v4807, 4
  %v4809 = vadd.f32 %v4807, %v4808
  %v4810 = vrot.slane %v4809, 2
  %v4811 = vadd.f32 %v4809, %v4810
  %v4812 = vrot.slane %v4811, 1
  %v4813 = vadd.f32 %v4811, %v4812
  %v4814 = vsel %vm4564, %v4746, 0.0
  %v4815 = vsel %vm4564, %v4748, 0.0
  %v4816 = vadd.f32 %v4814, %v4815
  %v4817 = vrot.slane %v4816, 4
  %v4818 = vadd.f32 %v4816, %v4817
  %v4819 = vrot.slane %v4818, 2
  %v4820 = vadd.f32 %v4818, %v4819
  %v4821 = vrot.slane %v4820, 1
  %v4822 = vadd.f32 %v4820, %v4821
  %v4823 = vsel %vm4564, %v4750, 0.0
  %v4824 = vsel %vm4564, %v4752, 0.0
  %v4825 = vadd.f32 %v4823, %v4824
  %v4826 = vrot.slane %v4825, 4
  %v4827 = vadd.f32 %v4825, %v4826
  %v4828 = vrot.slane %v4827, 2
  %v4829 = vadd.f32 %v4827, %v4828
  %v4830 = vrot.slane %v4829, 1
  %v4831 = vadd.f32 %v4829, %v4830
  %v4832 = vsel %vm4564, %v4754, 0.0
  %v4833 = vsel %vm4564, %v4756, 0.0
  %v4834 = vadd.f32 %v4832, %v4833
  %v4835 = vrot.slane %v4834, 4
  %v4836 = vadd.f32 %v4834, %v4835
  %v4837 = vrot.slane %v4836, 2
  %v4838 = vadd.f32 %v4836, %v4837
  %v4839 = vrot.slane %v4838, 1
  %v4840 = vadd.f32 %v4838, %v4839
  %v4841 = vsel %vm4564, %v4758, 0.0
  %v4842 = vsel %vm4564, %v4760, 0.0
  %v4843 = vadd.f32 %v4841, %v4842
  %v4844 = vrot.slane %v4843, 4
  %v4845 = vadd.f32 %v4843, %v4844
  %v4846 = vrot.slane %v4845, 2
  %v4847 = vadd.f32 %v4845, %v4846
  %v4848 = vrot.slane %v4847, 1
  %v4849 = vadd.f32 %v4847, %v4848
  %v4850 = vsel %vm4564, %v4762, 0.0
  %v4851 = vsel %vm4564, %v4764, 0.0
  %v4852 = vadd.f32 %v4850, %v4851
  %v4853 = vrot.slane %v4852, 4
  %v4854 = vadd.f32 %v4852, %v4853
  %v4855 = vrot.slane %v4854, 2
  %v4856 = vadd.f32 %v4854, %v4855
  %v4857 = vrot.slane %v4856, 1
  %v4858 = vadd.f32 %v4856, %v4857
  %v4859 = vsel %vm4564, %v4766, 0.0
  %v4860 = vsel %vm4564, %v4768, 0.0
  %v4861 = vadd.f32 %v4859, %v4860
  %v4862 = vrot.slane %v4861, 4
  %v4863 = vadd.f32 %v4861, %v4862
  %v4864 = vrot.slane %v4863, 2
  %v4865 = vadd.f32 %v4863, %v4864
  %v4866 = vrot.slane %v4865, 1
  %v4867 = vadd.f32 %v4865, %v4866
  %v4868 = vsel %vm4564, %v4770, 0.0
  %v4869 = vsel %vm4564, %v4772, 0.0
  %v4870 = vadd.f32 %v4868, %v4869
  %v4871 = vrot.slane %v4870, 4
  %v4872 = vadd.f32 %v4870, %v4871
  %v4873 = vrot.slane %v4872, 2
  %v4874 = vadd.f32 %v4872, %v4873
  %v4875 = vrot.slane %v4874, 1
  %v4876 = vadd.f32 %v4874, %v4875
  %v4877 = vsel %vm4564, %v4774, 0.0
  %v4878 = vsel %vm4564, %v4776, 0.0
  %v4879 = vadd.f32 %v4877, %v4878
  %v4880 = vrot.slane %v4879, 4
  %v4881 = vadd.f32 %v4879, %v4880
  %v4882 = vrot.slane %v4881, 2
  %v4883 = vadd.f32 %v4881, %v4882
  %v4884 = vrot.slane %v4883, 1
  %v4885 = vadd.f32 %v4883, %v4884
  %v4886 = vsel %vm4564, %v4778, 0.0
  %v4887 = vsel %vm4564, %v4780, 0.0
  %v4888 = vadd.f32 %v4886, %v4887
  %v4889 = vrot.slane %v4888, 4
  %v4890 = vadd.f32 %v4888, %v4889
  %v4891 = vrot.slane %v4890, 2
  %v4892 = vadd.f32 %v4890, %v4891
  %v4893 = vrot.slane %v4892, 1
  %v4894 = vadd.f32 %v4892, %v4893
  %v4895 = vsel %vm4564, %v4782, 0.0
  %v4896 = vsel %vm4564, %v4784, 0.0
  %v4897 = vadd.f32 %v4895, %v4896
  %v4898 = vrot.slane %v4897, 4
  %v4899 = vadd.f32 %v4897, %v4898
  %v4900 = vrot.slane %v4899, 2
  %v4901 = vadd.f32 %v4899, %v4900
  %v4902 = vrot.slane %v4901, 1
  %v4903 = vadd.f32 %v4901, %v4902
  %v4904 = vsel %vm4564, %v4786, 0.0
  %v4905 = vsel %vm4564, %v4788, 0.0
  %v4906 = vadd.f32 %v4904, %v4905
  %v4907 = vrot.slane %v4906, 4
  %v4908 = vadd.f32 %v4906, %v4907
  %v4909 = vrot.slane %v4908, 2
  %v4910 = vadd.f32 %v4908, %v4909
  %v4911 = vrot.slane %v4910, 1
  %v4912 = vadd.f32 %v4910, %v4911
  %v4913 = vsel %vm4564, %v4790, 0.0
  %v4914 = vsel %vm4564, %v4792, 0.0
  %v4915 = vadd.f32 %v4913, %v4914
  %v4916 = vrot.slane %v4915, 4
  %v4917 = vadd.f32 %v4915, %v4916
  %v4918 = vrot.slane %v4917, 2
  %v4919 = vadd.f32 %v4917, %v4918
  %v4920 = vrot.slane %v4919, 1
  %v4921 = vadd.f32 %v4919, %v4920
  %v4922 = vsel %vm4564, %v4794, 0.0
  %v4923 = vsel %vm4564, %v4796, 0.0
  %v4924 = vadd.f32 %v4922, %v4923
  %v4925 = vrot.slane %v4924, 4
  %v4926 = vadd.f32 %v4924, %v4925
  %v4927 = vrot.slane %v4926, 2
  %v4928 = vadd.f32 %v4926, %v4927
  %v4929 = vrot.slane %v4928, 1
  %v4930 = vadd.f32 %v4928, %v4929
  %v4931 = vsel %vm4564, %v4798, 0.0
  %v4932 = vsel %vm4564, %v4800, 0.0
  %v4933 = vadd.f32 %v4931, %v4932
  %v4934 = vrot.slane %v4933, 4
  %v4935 = vadd.f32 %v4933, %v4934
  %v4936 = vrot.slane %v4935, 2
  %v4937 = vadd.f32 %v4935, %v4936
  %v4938 = vrot.slane %v4937, 1
  %v4939 = vadd.f32 %v4937, %v4938
  %v4940 = vsel %vm4564, %v4802, 0.0
  %v4941 = vsel %vm4564, %v4804, 0.0
  %v4942 = vadd.f32 %v4940, %v4941
  %v4943 = vrot.slane %v4942, 4
  %v4944 = vadd.f32 %v4942, %v4943
  %v4945 = vrot.slane %v4944, 2
  %v4946 = vadd.f32 %v4944, %v4945
  %v4947 = vrot.slane %v4946, 1
  %v4948 = vadd.f32 %v4946, %v4947
  %v4949 = vrcp.pop %v4813
  %v4950 = vmul.f32 %v4813, %v4949
  %v4951 = vsub.f32 1.0, %v4950
  %v4952 = vmul.f32 %v4949, %v4951
  %v4953 = vadd.f32 %v4949, %v4952
  %vm4954 = vweird.f32 %v4813
  %vm4955 = vweird.f32 %v4949
  %vm4956 = vmor %vm4954, %vm4955
  %v4957 = vsel %vm4956, %v4949, %v4953
  %v4958 = vand.u32 2147483647, %v4813
  %vm4959 = vcmp.eq.f32.partialorder %v4958, 8.507059e+37
  %v4960 = vand.u32 %v4813, 2147483648
  %v4961 = vor.u32 1.1754944e-38, %v4960
  %v4962 = vsel %vm4959, %v4961, %v4957
  %v4963 = vmul.f32 %v4742, %v4962
  %v4964 = vmul.f32 %v4744, %v4962
  %v4965 = vrcp.pop %v4822
  %v4966 = vmul.f32 %v4822, %v4965
  %v4967 = vsub.f32 1.0, %v4966
  %v4968 = vmul.f32 %v4965, %v4967
  %v4969 = vadd.f32 %v4965, %v4968
  %vm4970 = vweird.f32 %v4822
  %vm4971 = vweird.f32 %v4965
  %vm4972 = vmor %vm4970, %vm4971
  %v4973 = vsel %vm4972, %v4965, %v4969
  %v4974 = vand.u32 2147483647, %v4822
  %vm4975 = vcmp.eq.f32.partialorder %v4974, 8.507059e+37
  %v4976 = vand.u32 %v4822, 2147483648
  %v4977 = vor.u32 1.1754944e-38, %v4976
  %v4978 = vsel %vm4975, %v4977, %v4973
  %v4979 = vmul.f32 %v4746, %v4978
  %v4980 = vmul.f32 %v4748, %v4978
  %v4981 = vrcp.pop %v4831
  %v4982 = vmul.f32 %v4831, %v4981
  %v4983 = vsub.f32 1.0, %v4982
  %v4984 = vmul.f32 %v4981, %v4983
  %v4985 = vadd.f32 %v4981, %v4984
  %vm4986 = vweird.f32 %v4831
  %vm4987 = vweird.f32 %v4981
  %vm4988 = vmor %vm4986, %vm4987
  %v4989 = vsel %vm4988, %v4981, %v4985
  %v4990 = vand.u32 2147483647, %v4831
  %vm4991 = vcmp.eq.f32.partialorder %v4990, 8.507059e+37
  %v4992 = vand.u32 %v4831, 2147483648
  %v4993 = vor.u32 1.1754944e-38, %v4992
  %v4994 = vsel %vm4991, %v4993, %v4989
  %v4995 = vmul.f32 %v4750, %v4994
  %v4996 = vmul.f32 %v4752, %v4994
  %v4997 = vrcp.pop %v4840
  %v4998 = vmul.f32 %v4840, %v4997
  %v4999 = vsub.f32 1.0, %v4998
  %v5000 = vmul.f32 %v4997, %v4999
  %v5001 = vadd.f32 %v4997, %v5000
  %vm5002 = vweird.f32 %v4840
  %vm5003 = vweird.f32 %v4997
  %vm5004 = vmor %vm5002, %vm5003
  %v5005 = vsel %vm5004, %v4997, %v5001
  %v5006 = vand.u32 2147483647, %v4840
  %vm5007 = vcmp.eq.f32.partialorder %v5006, 8.507059e+37
  %v5008 = vand.u32 %v4840, 2147483648
  %v5009 = vor.u32 1.1754944e-38, %v5008
  %v5010 = vsel %vm5007, %v5009, %v5005
  %v5011 = vmul.f32 %v4754, %v5010
  %v5012 = vmul.f32 %v4756, %v5010
  %v5013 = vrcp.pop %v4849
  %v5014 = vmul.f32 %v4849, %v5013
  %v5015 = vsub.f32 1.0, %v5014
  %v5016 = vmul.f32 %v5013, %v5015
  %v5017 = vadd.f32 %v5013, %v5016
  %vm5018 = vweird.f32 %v4849
  %vm5019 = vweird.f32 %v5013
  %vm5020 = vmor %vm5018, %vm5019
  %v5021 = vsel %vm5020, %v5013, %v5017
  %v5022 = vand.u32 2147483647, %v4849
  %vm5023 = vcmp.eq.f32.partialorder %v5022, 8.507059e+37
  %v5024 = vand.u32 %v4849, 2147483648
  %v5025 = vor.u32 1.1754944e-38, %v5024
  %v5026 = vsel %vm5023, %v5025, %v5021
  %v5027 = vmul.f32 %v4758, %v5026
  %v5028 = vmul.f32 %v4760, %v5026
  %v5029 = vrcp.pop %v4858
  %v5030 = vmul.f32 %v4858, %v5029
  %v5031 = vsub.f32 1.0, %v5030
  %v5032 = vmul.f32 %v5029, %v5031
  %v5033 = vadd.f32 %v5029, %v5032
  %vm5034 = vweird.f32 %v4858
  %vm5035 = vweird.f32 %v5029
  %vm5036 = vmor %vm5034, %vm5035
  %v5037 = vsel %vm5036, %v5029, %v5033
  %v5038 = vand.u32 2147483647, %v4858
  %vm5039 = vcmp.eq.f32.partialorder %v5038, 8.507059e+37
  %v5040 = vand.u32 %v4858, 2147483648
  %v5041 = vor.u32 1.1754944e-38, %v5040
  %v5042 = vsel %vm5039, %v5041, %v5037
  %v5043 = vmul.f32 %v4762, %v5042
  %v5044 = vmul.f32 %v4764, %v5042
  %v5045 = vrcp.pop %v4867
  %v5046 = vmul.f32 %v4867, %v5045
  %v5047 = vsub.f32 1.0, %v5046
  %v5048 = vmul.f32 %v5045, %v5047
  %v5049 = vadd.f32 %v5045, %v5048
  %vm5050 = vweird.f32 %v4867
  %vm5051 = vweird.f32 %v5045
  %vm5052 = vmor %vm5050, %vm5051
  %v5053 = vsel %vm5052, %v5045, %v5049
  %v5054 = vand.u32 2147483647, %v4867
  %vm5055 = vcmp.eq.f32.partialorder %v5054, 8.507059e+37
  %v5056 = vand.u32 %v4867, 2147483648
  %v5057 = vor.u32 1.1754944e-38, %v5056
  %v5058 = vsel %vm5055, %v5057, %v5053
  %v5059 = vmul.f32 %v4766, %v5058
  %v5060 = vmul.f32 %v4768, %v5058
  %v5061 = vrcp.pop %v4876
  %v5062 = vmul.f32 %v4876, %v5061
  %v5063 = vsub.f32 1.0, %v5062
  %v5064 = vmul.f32 %v5061, %v5063
  %v5065 = vadd.f32 %v5061, %v5064
  %vm5066 = vweird.f32 %v4876
  %vm5067 = vweird.f32 %v5061
  %vm5068 = vmor %vm5066, %vm5067
  %v5069 = vsel %vm5068, %v5061, %v5065
  %v5070 = vand.u32 2147483647, %v4876
  %vm5071 = vcmp.eq.f32.partialorder %v5070, 8.507059e+37
  %v5072 = vand.u32 %v4876, 2147483648
  %v5073 = vor.u32 1.1754944e-38, %v5072
  %v5074 = vsel %vm5071, %v5073, %v5069
  %v5075 = vmul.f32 %v4770, %v5074
  %v5076 = vmul.f32 %v4772, %v5074
  %v5077 = vrcp.pop %v4885
  %v5078 = vmul.f32 %v4885, %v5077
  %v5079 = vsub.f32 1.0, %v5078
  %v5080 = vmul.f32 %v5077, %v5079
  %v5081 = vadd.f32 %v5077, %v5080
  %vm5082 = vweird.f32 %v4885
  %vm5083 = vweird.f32 %v5077
  %vm5084 = vmor %vm5082, %vm5083
  %v5085 = vsel %vm5084, %v5077, %v5081
  %v5086 = vand.u32 2147483647, %v4885
  %vm5087 = vcmp.eq.f32.partialorder %v5086, 8.507059e+37
  %v5088 = vand.u32 %v4885, 2147483648
  %v5089 = vor.u32 1.1754944e-38, %v5088
  %v5090 = vsel %vm5087, %v5089, %v5085
  %v5091 = vmul.f32 %v4774, %v5090
  %v5092 = vmul.f32 %v4776, %v5090
  %v5093 = vrcp.pop %v4894
  %v5094 = vmul.f32 %v4894, %v5093
  %v5095 = vsub.f32 1.0, %v5094
  %v5096 = vmul.f32 %v5093, %v5095
  %v5097 = vadd.f32 %v5093, %v5096
  %vm5098 = vweird.f32 %v4894
  %vm5099 = vweird.f32 %v5093
  %vm5100 = vmor %vm5098, %vm5099
  %v5101 = vsel %vm5100, %v5093, %v5097
  %v5102 = vand.u32 2147483647, %v4894
  %vm5103 = vcmp.eq.f32.partialorder %v5102, 8.507059e+37
  %v5104 = vand.u32 %v4894, 2147483648
  %v5105 = vor.u32 1.1754944e-38, %v5104
  %v5106 = vsel %vm5103, %v5105, %v5101
  %v5107 = vmul.f32 %v4778, %v5106
  %v5108 = vmul.f32 %v4780, %v5106
  %v5109 = vrcp.pop %v4903
  %v5110 = vmul.f32 %v4903, %v5109
  %v5111 = vsub.f32 1.0, %v5110
  %v5112 = vmul.f32 %v5109, %v5111
  %v5113 = vadd.f32 %v5109, %v5112
  %vm5114 = vweird.f32 %v4903
  %vm5115 = vweird.f32 %v5109
  %vm5116 = vmor %vm5114, %vm5115
  %v5117 = vsel %vm5116, %v5109, %v5113
  %v5118 = vand.u32 2147483647, %v4903
  %vm5119 = vcmp.eq.f32.partialorder %v5118, 8.507059e+37
  %v5120 = vand.u32 %v4903, 2147483648
  %v5121 = vor.u32 1.1754944e-38, %v5120
  %v5122 = vsel %vm5119, %v5121, %v5117
  %v5123 = vmul.f32 %v4782, %v5122
  %v5124 = vmul.f32 %v4784, %v5122
  %v5125 = vrcp.pop %v4912
  %v5126 = vmul.f32 %v4912, %v5125
  %v5127 = vsub.f32 1.0, %v5126
  %v5128 = vmul.f32 %v5125, %v5127
  %v5129 = vadd.f32 %v5125, %v5128
  %vm5130 = vweird.f32 %v4912
  %vm5131 = vweird.f32 %v5125
  %vm5132 = vmor %vm5130, %vm5131
  %v5133 = vsel %vm5132, %v5125, %v5129
  %v5134 = vand.u32 2147483647, %v4912
  %vm5135 = vcmp.eq.f32.partialorder %v5134, 8.507059e+37
  %v5136 = vand.u32 %v4912, 2147483648
  %v5137 = vor.u32 1.1754944e-38, %v5136
  %v5138 = vsel %vm5135, %v5137, %v5133
  %v5139 = vmul.f32 %v4786, %v5138
  %v5140 = vmul.f32 %v4788, %v5138
  %v5141 = vrcp.pop %v4921
  %v5142 = vmul.f32 %v4921, %v5141
  %v5143 = vsub.f32 1.0, %v5142
  %v5144 = vmul.f32 %v5141, %v5143
  %v5145 = vadd.f32 %v5141, %v5144
  %vm5146 = vweird.f32 %v4921
  %vm5147 = vweird.f32 %v5141
  %vm5148 = vmor %vm5146, %vm5147
  %v5149 = vsel %vm5148, %v5141, %v5145
  %v5150 = vand.u32 2147483647, %v4921
  %vm5151 = vcmp.eq.f32.partialorder %v5150, 8.507059e+37
  %v5152 = vand.u32 %v4921, 2147483648
  %v5153 = vor.u32 1.1754944e-38, %v5152
  %v5154 = vsel %vm5151, %v5153, %v5149
  %v5155 = vmul.f32 %v4790, %v5154
  %v5156 = vmul.f32 %v4792, %v5154
  %v5157 = vrcp.pop %v4930
  %v5158 = vmul.f32 %v4930, %v5157
  %v5159 = vsub.f32 1.0, %v5158
  %v5160 = vmul.f32 %v5157, %v5159
  %v5161 = vadd.f32 %v5157, %v5160
  %vm5162 = vweird.f32 %v4930
  %vm5163 = vweird.f32 %v5157
  %vm5164 = vmor %vm5162, %vm5163
  %v5165 = vsel %vm5164, %v5157, %v5161
  %v5166 = vand.u32 2147483647, %v4930
  %vm5167 = vcmp.eq.f32.partialorder %v5166, 8.507059e+37
  %v5168 = vand.u32 %v4930, 2147483648
  %v5169 = vor.u32 1.1754944e-38, %v5168
  %v5170 = vsel %vm5167, %v5169, %v5165
  %v5171 = vmul.f32 %v4794, %v5170
  %v5172 = vmul.f32 %v4796, %v5170
  %v5173 = vrcp.pop %v4939
  %v5174 = vmul.f32 %v4939, %v5173
  %v5175 = vsub.f32 1.0, %v5174
  %v5176 = vmul.f32 %v5173, %v5175
  %v5177 = vadd.f32 %v5173, %v5176
  %vm5178 = vweird.f32 %v4939
  %vm5179 = vweird.f32 %v5173
  %vm5180 = vmor %vm5178, %vm5179
  %v5181 = vsel %vm5180, %v5173, %v5177
  %v5182 = vand.u32 2147483647, %v4939
  %vm5183 = vcmp.eq.f32.partialorder %v5182, 8.507059e+37
  %v5184 = vand.u32 %v4939, 2147483648
  %v5185 = vor.u32 1.1754944e-38, %v5184
  %v5186 = vsel %vm5183, %v5185, %v5181
  %v5187 = vmul.f32 %v4798, %v5186
  %v5188 = vmul.f32 %v4800, %v5186
  %v5189 = vrcp.pop %v4948
  %v5190 = vmul.f32 %v4948, %v5189
  %v5191 = vsub.f32 1.0, %v5190
  %v5192 = vmul.f32 %v5189, %v5191
  %v5193 = vadd.f32 %v5189, %v5192
  %vm5194 = vweird.f32 %v4948
  %vm5195 = vweird.f32 %v5189
  %vm5196 = vmor %vm5194, %vm5195
  %v5197 = vsel %vm5196, %v5189, %v5193
  %v5198 = vand.u32 2147483647, %v4948
  %vm5199 = vcmp.eq.f32.partialorder %v5198, 8.507059e+37
  %v5200 = vand.u32 %v4948, 2147483648
  %v5201 = vor.u32 1.1754944e-38, %v5200
  %v5202 = vsel %vm5199, %v5201, %v5197
  %v5203 = vmul.f32 %v4802, %v5202
  %v5204 = vmul.f32 %v4804, %v5202
  %v5205 = vld [vmem:[%s16] sm:$0x1]
  %v5207 = vsel %vm4564, %v4963, 0
  %v5210 = vsel %vm4564, %v4964, 0
  %v5213 = vsel %vm4564, %v4979, 0
  %v5216 = vsel %vm4564, %v4980, 0
  %v5219 = vsel %vm4564, %v4995, 0
  %v5222 = vsel %vm4564, %v4996, 0
  %v5225 = vsel %vm4564, %v5011, 0
  %v5228 = vsel %vm4564, %v5012, 0
  %v5231 = vsel %vm4564, %v5027, 0
  %v5234 = vsel %vm4564, %v5028, 0
  %v5237 = vsel %vm4564, %v5043, 0
  %v5240 = vsel %vm4564, %v5044, 0
  %v5243 = vsel %vm4564, %v5059, 0
  %v5246 = vsel %vm4564, %v5060, 0
  %v5249 = vsel %vm4564, %v5075, 0
  %v5252 = vsel %vm4564, %v5076, 0
  %v5255 = vsel %vm4564, %v5091, 0
  %v5258 = vsel %vm4564, %v5092, 0
  %v5261 = vsel %vm4564, %v5107, 0
  %v5264 = vsel %vm4564, %v5108, 0
  %v5267 = vsel %vm4564, %v5123, 0
  %v5270 = vsel %vm4564, %v5124, 0
  %v5273 = vsel %vm4564, %v5139, 0
  %v5276 = vsel %vm4564, %v5140, 0
  %v5279 = vsel %vm4564, %v5155, 0
  %v5282 = vsel %vm4564, %v5156, 0
  %v5285 = vsel %vm4564, %v5171, 0
  %v5288 = vsel %vm4564, %v5172, 0
  %v5291 = vsel %vm4564, %v5187, 0
  %v5294 = vsel %vm4564, %v5188, 0
  %v5297 = vsel %vm4564, %v5203, 0
  %v5300 = vsel %vm4564, %v5204, 0
  %vm5302 = vcmask 1040384
  %v5304 = vsel %vm5302, %v5205, 0
  %5306 = vmatpush.msra.mxu0 0.0
  %5307 = vmatpush.msra.mxu0 0.0
  %5308 = vmatpush.msra.mxu0 0.0
  %5309 = vmatpush.msra.mxu0 0.0
  %5310 = vmatpush.msra.mxu0 0.0
  %5311 = vmatpush.msra.mxu0 0.0
  %5312 = vmatpush.msra.mxu0 0.0
  %5313 = vmatpush.msra.mxu0 0.0
  %5314 = vmatpush.msra.mxu0 0.0
  %5315 = vmatpush.msra.mxu0 0.0
  %5316 = vmatpush.msra.mxu0 0.0
  %5317 = vmatpush.msra.mxu0 0.0
  %5318 = vmatpush.msra.mxu0 0.0
  %5319 = vmatpush.msra.mxu0 0.0
  %5320 = vmatpush.msra.mxu0 0.0
  %5321 = vmatpush.msra.mxu0 %v5304
  %5322 = vmatmul.f32.gmra.mxu0 %v5207
  %v5323 = vpop.f32.mrf.mxu0
  %v5324 = vadd.f32 0.0, %v5323
  %5325 = vmatmul.f32.gmra.mxu0 %v5210
  %v5326 = vpop.f32.mrf.mxu0
  %v5327 = vadd.f32 0.0, %v5326
  %5328 = vmatmul.f32.gmra.mxu0 %v5213
  %v5329 = vpop.f32.mrf.mxu0
  %v5330 = vadd.f32 0.0, %v5329
  %5331 = vmatmul.f32.gmra.mxu0 %v5216
  %v5332 = vpop.f32.mrf.mxu0
  %v5333 = vadd.f32 0.0, %v5332
  %5334 = vmatmul.f32.gmra.mxu0 %v5219
  %v5335 = vpop.f32.mrf.mxu0
  %v5336 = vadd.f32 0.0, %v5335
  %5337 = vmatmul.f32.gmra.mxu0 %v5222
  %v5338 = vpop.f32.mrf.mxu0
  %v5339 = vadd.f32 0.0, %v5338
  %5340 = vmatmul.f32.gmra.mxu0 %v5225
  %v5341 = vpop.f32.mrf.mxu0
  %v5342 = vadd.f32 0.0, %v5341
  %5343 = vmatmul.f32.gmra.mxu0 %v5228
  %v5344 = vpop.f32.mrf.mxu0
  %v5345 = vadd.f32 0.0, %v5344
  %5346 = vmatmul.f32.gmra.mxu0 %v5231
  %v5347 = vpop.f32.mrf.mxu0
  %v5348 = vadd.f32 0.0, %v5347
  %5349 = vmatmul.f32.gmra.mxu0 %v5234
  %v5350 = vpop.f32.mrf.mxu0
  %v5351 = vadd.f32 0.0, %v5350
  %5352 = vmatmul.f32.gmra.mxu0 %v5237
  %v5353 = vpop.f32.mrf.mxu0
  %v5354 = vadd.f32 0.0, %v5353
  %5355 = vmatmul.f32.gmra.mxu0 %v5240
  %v5356 = vpop.f32.mrf.mxu0
  %v5357 = vadd.f32 0.0, %v5356
  %5358 = vmatmul.f32.gmra.mxu0 %v5243
  %v5359 = vpop.f32.mrf.mxu0
  %v5360 = vadd.f32 0.0, %v5359
  %5361 = vmatmul.f32.gmra.mxu0 %v5246
  %v5362 = vpop.f32.mrf.mxu0
  %v5363 = vadd.f32 0.0, %v5362
  %5364 = vmatmul.f32.gmra.mxu0 %v5249
  %v5365 = vpop.f32.mrf.mxu0
  %v5366 = vadd.f32 0.0, %v5365
  %5367 = vmatmul.f32.gmra.mxu0 %v5252
  %v5368 = vpop.f32.mrf.mxu0
  %v5369 = vadd.f32 0.0, %v5368
  %5370 = vmatmul.f32.gmra.mxu0 %v5255
  %v5371 = vpop.f32.mrf.mxu0
  %v5372 = vadd.f32 0.0, %v5371
  %5373 = vmatmul.f32.gmra.mxu0 %v5258
  %v5374 = vpop.f32.mrf.mxu0
  %v5375 = vadd.f32 0.0, %v5374
  %5376 = vmatmul.f32.gmra.mxu0 %v5261
  %v5377 = vpop.f32.mrf.mxu0
  %v5378 = vadd.f32 0.0, %v5377
  %5379 = vmatmul.f32.gmra.mxu0 %v5264
  %v5380 = vpop.f32.mrf.mxu0
  %v5381 = vadd.f32 0.0, %v5380
  %5382 = vmatmul.f32.gmra.mxu0 %v5267
  %v5383 = vpop.f32.mrf.mxu0
  %v5384 = vadd.f32 0.0, %v5383
  %5385 = vmatmul.f32.gmra.mxu0 %v5270
  %v5386 = vpop.f32.mrf.mxu0
  %v5387 = vadd.f32 0.0, %v5386
  %5388 = vmatmul.f32.gmra.mxu0 %v5273
  %v5389 = vpop.f32.mrf.mxu0
  %v5390 = vadd.f32 0.0, %v5389
  %5391 = vmatmul.f32.gmra.mxu0 %v5276
  %v5392 = vpop.f32.mrf.mxu0
  %v5393 = vadd.f32 0.0, %v5392
  %5394 = vmatmul.f32.gmra.mxu0 %v5279
  %v5395 = vpop.f32.mrf.mxu0
  %v5396 = vadd.f32 0.0, %v5395
  %5397 = vmatmul.f32.gmra.mxu0 %v5282
  %v5398 = vpop.f32.mrf.mxu0
  %v5399 = vadd.f32 0.0, %v5398
  %5400 = vmatmul.f32.gmra.mxu0 %v5285
  %v5401 = vpop.f32.mrf.mxu0
  %v5402 = vadd.f32 0.0, %v5401
  %5403 = vmatmul.f32.gmra.mxu0 %v5288
  %v5404 = vpop.f32.mrf.mxu0
  %v5405 = vadd.f32 0.0, %v5404
  %5406 = vmatmul.f32.gmra.mxu0 %v5291
  %v5407 = vpop.f32.mrf.mxu0
  %v5408 = vadd.f32 0.0, %v5407
  %5409 = vmatmul.f32.gmra.mxu0 %v5294
  %v5410 = vpop.f32.mrf.mxu0
  %v5411 = vadd.f32 0.0, %v5410
  %5412 = vmatmul.f32.gmra.mxu0 %v5297
  %v5413 = vpop.f32.mrf.mxu0
  %v5414 = vadd.f32 0.0, %v5413
  %5415 = vmatmul.f32.gmra.mxu0 %v5300
  %v5416 = vpop.f32.mrf.mxu0
  %v5417 = vadd.f32 0.0, %v5416
  %5418 = vdwg.mxu0
  %v5419 = vmul.f32 %v5324, %v4100
  %v5420 = vmul.f32 %v5327, %v4103
  %v5421 = vmul.f32 %v5330, %v4100
  %v5422 = vmul.f32 %v5333, %v4103
  %v5423 = vmul.f32 %v5336, %v4100
  %v5424 = vmul.f32 %v5339, %v4103
  %v5425 = vmul.f32 %v5342, %v4100
  %v5426 = vmul.f32 %v5345, %v4103
  %v5427 = vmul.f32 %v5348, %v4100
  %v5428 = vmul.f32 %v5351, %v4103
  %v5429 = vmul.f32 %v5354, %v4100
  %v5430 = vmul.f32 %v5357, %v4103
  %v5431 = vmul.f32 %v5360, %v4100
  %v5432 = vmul.f32 %v5363, %v4103
  %v5433 = vmul.f32 %v5366, %v4100
  %v5434 = vmul.f32 %v5369, %v4103
  %v5435 = vmul.f32 %v5372, %v4100
  %v5436 = vmul.f32 %v5375, %v4103
  %v5437 = vmul.f32 %v5378, %v4100
  %v5438 = vmul.f32 %v5381, %v4103
  %v5439 = vmul.f32 %v5384, %v4100
  %v5440 = vmul.f32 %v5387, %v4103
  %v5441 = vmul.f32 %v5390, %v4100
  %v5442 = vmul.f32 %v5393, %v4103
  %v5443 = vmul.f32 %v5396, %v4100
  %v5444 = vmul.f32 %v5399, %v4103
  %v5445 = vmul.f32 %v5402, %v4100
  %v5446 = vmul.f32 %v5405, %v4103
  %v5447 = vmul.f32 %v5408, %v4100
  %v5448 = vmul.f32 %v5411, %v4103
  %v5449 = vmul.f32 %v5414, %v4100
  %v5450 = vmul.f32 %v5417, %v4103
  %v5451 = vsel %vm644, %v5419, 0.0
  %v5452 = vsel %vm644, %v5420, 0.0
  %v5453 = vadd.f32 %v5451, %v5452
  %v5454 = vrot.slane %v5453, 4
  %v5455 = vadd.f32 %v5453, %v5454
  %v5456 = vrot.slane %v5455, 2
  %v5457 = vadd.f32 %v5455, %v5456
  %v5458 = vrot.slane %v5457, 1
  %v5459 = vadd.f32 %v5457, %v5458
  %v5460 = vsel %vm644, %v5421, 0.0
  %v5461 = vsel %vm644, %v5422, 0.0
  %v5462 = vadd.f32 %v5460, %v5461
  %v5463 = vrot.slane %v5462, 4
  %v5464 = vadd.f32 %v5462, %v5463
  %v5465 = vrot.slane %v5464, 2
  %v5466 = vadd.f32 %v5464, %v5465
  %v5467 = vrot.slane %v5466, 1
  %v5468 = vadd.f32 %v5466, %v5467
  %v5469 = vsel %vm644, %v5423, 0.0
  %v5470 = vsel %vm644, %v5424, 0.0
  %v5471 = vadd.f32 %v5469, %v5470
  %v5472 = vrot.slane %v5471, 4
  %v5473 = vadd.f32 %v5471, %v5472
  %v5474 = vrot.slane %v5473, 2
  %v5475 = vadd.f32 %v5473, %v5474
  %v5476 = vrot.slane %v5475, 1
  %v5477 = vadd.f32 %v5475, %v5476
  %v5478 = vsel %vm644, %v5425, 0.0
  %v5479 = vsel %vm644, %v5426, 0.0
  %v5480 = vadd.f32 %v5478, %v5479
  %v5481 = vrot.slane %v5480, 4
  %v5482 = vadd.f32 %v5480, %v5481
  %v5483 = vrot.slane %v5482, 2
  %v5484 = vadd.f32 %v5482, %v5483
  %v5485 = vrot.slane %v5484, 1
  %v5486 = vadd.f32 %v5484, %v5485
  %v5487 = vsel %vm644, %v5427, 0.0
  %v5488 = vsel %vm644, %v5428, 0.0
  %v5489 = vadd.f32 %v5487, %v5488
  %v5490 = vrot.slane %v5489, 4
  %v5491 = vadd.f32 %v5489, %v5490
  %v5492 = vrot.slane %v5491, 2
  %v5493 = vadd.f32 %v5491, %v5492
  %v5494 = vrot.slane %v5493, 1
  %v5495 = vadd.f32 %v5493, %v5494
  %v5496 = vsel %vm644, %v5429, 0.0
  %v5497 = vsel %vm644, %v5430, 0.0
  %v5498 = vadd.f32 %v5496, %v5497
  %v5499 = vrot.slane %v5498, 4
  %v5500 = vadd.f32 %v5498, %v5499
  %v5501 = vrot.slane %v5500, 2
  %v5502 = vadd.f32 %v5500, %v5501
  %v5503 = vrot.slane %v5502, 1
  %v5504 = vadd.f32 %v5502, %v5503
  %v5505 = vsel %vm644, %v5431, 0.0
  %v5506 = vsel %vm644, %v5432, 0.0
  %v5507 = vadd.f32 %v5505, %v5506
  %v5508 = vrot.slane %v5507, 4
  %v5509 = vadd.f32 %v5507, %v5508
  %v5510 = vrot.slane %v5509, 2
  %v5511 = vadd.f32 %v5509, %v5510
  %v5512 = vrot.slane %v5511, 1
  %v5513 = vadd.f32 %v5511, %v5512
  %v5514 = vsel %vm644, %v5433, 0.0
  %v5515 = vsel %vm644, %v5434, 0.0
  %v5516 = vadd.f32 %v5514, %v5515
  %v5517 = vrot.slane %v5516, 4
  %v5518 = vadd.f32 %v5516, %v5517
  %v5519 = vrot.slane %v5518, 2
  %v5520 = vadd.f32 %v5518, %v5519
  %v5521 = vrot.slane %v5520, 1
  %v5522 = vadd.f32 %v5520, %v5521
  %v5523 = vsel %vm644, %v5435, 0.0
  %v5524 = vsel %vm644, %v5436, 0.0
  %v5525 = vadd.f32 %v5523, %v5524
  %v5526 = vrot.slane %v5525, 4
  %v5527 = vadd.f32 %v5525, %v5526
  %v5528 = vrot.slane %v5527, 2
  %v5529 = vadd.f32 %v5527, %v5528
  %v5530 = vrot.slane %v5529, 1
  %v5531 = vadd.f32 %v5529, %v5530
  %v5532 = vsel %vm644, %v5437, 0.0
  %v5533 = vsel %vm644, %v5438, 0.0
  %v5534 = vadd.f32 %v5532, %v5533
  %v5535 = vrot.slane %v5534, 4
  %v5536 = vadd.f32 %v5534, %v5535
  %v5537 = vrot.slane %v5536, 2
  %v5538 = vadd.f32 %v5536, %v5537
  %v5539 = vrot.slane %v5538, 1
  %v5540 = vadd.f32 %v5538, %v5539
  %v5541 = vsel %vm644, %v5439, 0.0
  %v5542 = vsel %vm644, %v5440, 0.0
  %v5543 = vadd.f32 %v5541, %v5542
  %v5544 = vrot.slane %v5543, 4
  %v5545 = vadd.f32 %v5543, %v5544
  %v5546 = vrot.slane %v5545, 2
  %v5547 = vadd.f32 %v5545, %v5546
  %v5548 = vrot.slane %v5547, 1
  %v5549 = vadd.f32 %v5547, %v5548
  %v5550 = vsel %vm644, %v5441, 0.0
  %v5551 = vsel %vm644, %v5442, 0.0
  %v5552 = vadd.f32 %v5550, %v5551
  %v5553 = vrot.slane %v5552, 4
  %v5554 = vadd.f32 %v5552, %v5553
  %v5555 = vrot.slane %v5554, 2
  %v5556 = vadd.f32 %v5554, %v5555
  %v5557 = vrot.slane %v5556, 1
  %v5558 = vadd.f32 %v5556, %v5557
  %v5559 = vsel %vm644, %v5443, 0.0
  %v5560 = vsel %vm644, %v5444, 0.0
  %v5561 = vadd.f32 %v5559, %v5560
  %v5562 = vrot.slane %v5561, 4
  %v5563 = vadd.f32 %v5561, %v5562
  %v5564 = vrot.slane %v5563, 2
  %v5565 = vadd.f32 %v5563, %v5564
  %v5566 = vrot.slane %v5565, 1
  %v5567 = vadd.f32 %v5565, %v5566
  %v5568 = vsel %vm644, %v5445, 0.0
  %v5569 = vsel %vm644, %v5446, 0.0
  %v5570 = vadd.f32 %v5568, %v5569
  %v5571 = vrot.slane %v5570, 4
  %v5572 = vadd.f32 %v5570, %v5571
  %v5573 = vrot.slane %v5572, 2
  %v5574 = vadd.f32 %v5572, %v5573
  %v5575 = vrot.slane %v5574, 1
  %v5576 = vadd.f32 %v5574, %v5575
  %v5577 = vsel %vm644, %v5447, 0.0
  %v5578 = vsel %vm644, %v5448, 0.0
  %v5579 = vadd.f32 %v5577, %v5578
  %v5580 = vrot.slane %v5579, 4
  %v5581 = vadd.f32 %v5579, %v5580
  %v5582 = vrot.slane %v5581, 2
  %v5583 = vadd.f32 %v5581, %v5582
  %v5584 = vrot.slane %v5583, 1
  %v5585 = vadd.f32 %v5583, %v5584
  %v5586 = vsel %vm644, %v5449, 0.0
  %v5587 = vsel %vm644, %v5450, 0.0
  %v5588 = vadd.f32 %v5586, %v5587
  %v5589 = vrot.slane %v5588, 4
  %v5590 = vadd.f32 %v5588, %v5589
  %v5591 = vrot.slane %v5590, 2
  %v5592 = vadd.f32 %v5590, %v5591
  %v5593 = vrot.slane %v5592, 1
  %v5594 = vadd.f32 %v5592, %v5593
  %v5595 = vld [vmem:[%s17] sm:$0x1]
  %v5596 = vld [vmem:[%s18] sm:$0x1]
  %v5613 = vsel %vm1871, %v5468, %v5459
  %v5614 = vsel %vm1873, %v5477, %v5613
  %v5615 = vsel %vm1875, %v5486, %v5614
  %v5616 = vsel %vm1877, %v5495, %v5615
  %v5617 = vsel %vm1879, %v5504, %v5616
  %v5618 = vsel %vm1881, %v5513, %v5617
  %v5619 = vsel %vm1883, %v5522, %v5618
  %v5620 = vsel %vm1871, %v5540, %v5531
  %v5621 = vsel %vm1873, %v5549, %v5620
  %v5622 = vsel %vm1875, %v5558, %v5621
  %v5623 = vsel %vm1877, %v5567, %v5622
  %v5624 = vsel %vm1879, %v5576, %v5623
  %v5625 = vsel %vm1881, %v5585, %v5624
  %v5626 = vsel %vm1883, %v5594, %v5625
  %v5629 = vsel %vm644, %v5619, 0.0
  %5630 = vadd.xlane.f32.xlu0 %v5629
  %v5631 = vpop.xlane.xlu0 %5630
  %v5632 = vsel %vm644, %v5626, 0.0
  %5633 = vadd.xlane.f32.xlu0 %v5632
  %v5634 = vpop.xlane.xlu0 %5633
  %v5635 = vmul.f32 %v5631, %v1906
  %v5636 = vmul.f32 %v5634, %v1906
  %v5639 = vrot.slane %v5635, 1
  %v5640 = vrot.slane %v5635, 2
  %v5641 = vrot.slane %v5635, 3
  %v5642 = vrot.slane %v5635, 4
  %v5643 = vrot.slane %v5635, 5
  %v5644 = vrot.slane %v5635, 6
  %v5645 = vrot.slane %v5635, 7
  %v5646 = vrot.slane %v5636, 1
  %v5647 = vrot.slane %v5636, 2
  %v5648 = vrot.slane %v5636, 3
  %v5649 = vrot.slane %v5636, 4
  %v5650 = vrot.slane %v5636, 5
  %v5651 = vrot.slane %v5636, 6
  %v5652 = vrot.slane %v5636, 7
  %v5669 = vsub.f32 %v5459, %v5635
  %v5670 = vsub.f32 %v5468, %v5639
  %v5671 = vsub.f32 %v5477, %v5640
  %v5672 = vsub.f32 %v5486, %v5641
  %v5673 = vsub.f32 %v5495, %v5642
  %v5674 = vsub.f32 %v5504, %v5643
  %v5675 = vsub.f32 %v5513, %v5644
  %v5676 = vsub.f32 %v5522, %v5645
  %v5677 = vsub.f32 %v5531, %v5636
  %v5678 = vsub.f32 %v5540, %v5646
  %v5679 = vsub.f32 %v5549, %v5647
  %v5680 = vsub.f32 %v5558, %v5648
  %v5681 = vsub.f32 %v5567, %v5649
  %v5682 = vsub.f32 %v5576, %v5650
  %v5683 = vsub.f32 %v5585, %v5651
  %v5684 = vsub.f32 %v5594, %v5652
  %v5685 = vmul.f32 %v5669, %v5669
  %v5686 = vmul.f32 %v5670, %v5670
  %v5687 = vmul.f32 %v5671, %v5671
  %v5688 = vmul.f32 %v5672, %v5672
  %v5689 = vmul.f32 %v5673, %v5673
  %v5690 = vmul.f32 %v5674, %v5674
  %v5691 = vmul.f32 %v5675, %v5675
  %v5692 = vmul.f32 %v5676, %v5676
  %v5693 = vmul.f32 %v5677, %v5677
  %v5694 = vmul.f32 %v5678, %v5678
  %v5695 = vmul.f32 %v5679, %v5679
  %v5696 = vmul.f32 %v5680, %v5680
  %v5697 = vmul.f32 %v5681, %v5681
  %v5698 = vmul.f32 %v5682, %v5682
  %v5699 = vmul.f32 %v5683, %v5683
  %v5700 = vmul.f32 %v5684, %v5684
  %v5717 = vrot.slane %v5686, 7
  %v5718 = vsel %vm1871, %v5717, %v5685
  %v5719 = vrot.slane %v5687, 6
  %v5720 = vsel %vm1873, %v5719, %v5718
  %v5721 = vrot.slane %v5688, 5
  %v5722 = vsel %vm1875, %v5721, %v5720
  %v5723 = vrot.slane %v5689, 4
  %v5724 = vsel %vm1877, %v5723, %v5722
  %v5725 = vrot.slane %v5690, 3
  %v5726 = vsel %vm1879, %v5725, %v5724
  %v5727 = vrot.slane %v5691, 2
  %v5728 = vsel %vm1881, %v5727, %v5726
  %v5729 = vrot.slane %v5692, 1
  %v5730 = vsel %vm1883, %v5729, %v5728
  %v5731 = vrot.slane %v5694, 7
  %v5732 = vsel %vm1871, %v5731, %v5693
  %v5733 = vrot.slane %v5695, 6
  %v5734 = vsel %vm1873, %v5733, %v5732
  %v5735 = vrot.slane %v5696, 5
  %v5736 = vsel %vm1875, %v5735, %v5734
  %v5737 = vrot.slane %v5697, 4
  %v5738 = vsel %vm1877, %v5737, %v5736
  %v5739 = vrot.slane %v5698, 3
  %v5740 = vsel %vm1879, %v5739, %v5738
  %v5741 = vrot.slane %v5699, 2
  %v5742 = vsel %vm1881, %v5741, %v5740
  %v5743 = vrot.slane %v5700, 1
  %v5744 = vsel %vm1883, %v5743, %v5742
  %v5747 = vsel %vm644, %v5730, 0.0
  %5748 = vadd.xlane.f32.xlu0 %v5747
  %v5749 = vpop.xlane.xlu0 %5748
  %v5750 = vsel %vm644, %v5744, 0.0
  %5751 = vadd.xlane.f32.xlu0 %v5750
  %v5752 = vpop.xlane.xlu0 %5751
  %v5753 = vmul.f32 %v5749, %v1906
  %v5754 = vmul.f32 %v5752, %v1906
  %v5755 = vadd.f32 %v5753, 1e-05
  %v5756 = vadd.f32 %v5754, 1e-05
  %v5757 = vrsqrt.pop %v5755
  %v5758 = vmul.f32 %v5757, %v5755
  %v5759 = vmul.f32 %v5758, %v5757
  %v5760 = vmul.f32 0.5, %v5759
  %v5761 = vsub.f32 1.5, %v5760
  %v5762 = vmul.f32 %v5757, %v5761
  %vm5763 = vweird.f32 %v5755
  %vm5764 = vweird.f32 %v5757
  %vm5765 = vmor %vm5763, %vm5764
  %v5766 = vsel %vm5765, %v5757, %v5762
  %v5767 = vrsqrt.pop %v5756
  %v5768 = vmul.f32 %v5767, %v5756
  %v5769 = vmul.f32 %v5768, %v5767
  %v5770 = vmul.f32 0.5, %v5769
  %v5771 = vsub.f32 1.5, %v5770
  %v5772 = vmul.f32 %v5767, %v5771
  %vm5773 = vweird.f32 %v5756
  %vm5774 = vweird.f32 %v5767
  %vm5775 = vmor %vm5773, %vm5774
  %v5776 = vsel %vm5775, %v5767, %v5772
  %v5779 = vrot.slane %v5766, 1
  %v5780 = vrot.slane %v5766, 2
  %v5781 = vrot.slane %v5766, 3
  %v5782 = vrot.slane %v5766, 4
  %v5783 = vrot.slane %v5766, 5
  %v5784 = vrot.slane %v5766, 6
  %v5785 = vrot.slane %v5766, 7
  %v5786 = vrot.slane %v5776, 1
  %v5787 = vrot.slane %v5776, 2
  %v5788 = vrot.slane %v5776, 3
  %v5789 = vrot.slane %v5776, 4
  %v5790 = vrot.slane %v5776, 5
  %v5791 = vrot.slane %v5776, 6
  %v5792 = vrot.slane %v5776, 7
  %v5809 = vmul.f32 %v5669, %v5766
  %v5810 = vmul.f32 %v5670, %v5779
  %v5811 = vmul.f32 %v5671, %v5780
  %v5812 = vmul.f32 %v5672, %v5781
  %v5813 = vmul.f32 %v5673, %v5782
  %v5814 = vmul.f32 %v5674, %v5783
  %v5815 = vmul.f32 %v5675, %v5784
  %v5816 = vmul.f32 %v5676, %v5785
  %v5817 = vmul.f32 %v5677, %v5776
  %v5818 = vmul.f32 %v5678, %v5786
  %v5819 = vmul.f32 %v5679, %v5787
  %v5820 = vmul.f32 %v5680, %v5788
  %v5821 = vmul.f32 %v5681, %v5789
  %v5822 = vmul.f32 %v5682, %v5790
  %v5823 = vmul.f32 %v5683, %v5791
  %v5824 = vmul.f32 %v5684, %v5792
  %v5826 = vperm.slane %v5595, 0
  %v5828 = vmul.f32 %v5809, %v5826
  %v5829 = vmul.f32 %v5810, %v5826
  %v5830 = vmul.f32 %v5811, %v5826
  %v5831 = vmul.f32 %v5812, %v5826
  %v5832 = vmul.f32 %v5813, %v5826
  %v5833 = vmul.f32 %v5814, %v5826
  %v5834 = vmul.f32 %v5815, %v5826
  %v5835 = vmul.f32 %v5816, %v5826
  %v5836 = vmul.f32 %v5817, %v5826
  %v5837 = vmul.f32 %v5818, %v5826
  %v5838 = vmul.f32 %v5819, %v5826
  %v5839 = vmul.f32 %v5820, %v5826
  %v5840 = vmul.f32 %v5821, %v5826
  %v5841 = vmul.f32 %v5822, %v5826
  %v5842 = vmul.f32 %v5823, %v5826
  %v5843 = vmul.f32 %v5824, %v5826
  %v5845 = vperm.slane %v5596, 0
  %v5847 = vadd.f32 %v5828, %v5845
  %v5848 = vadd.f32 %v5829, %v5845
  %v5849 = vadd.f32 %v5830, %v5845
  %v5850 = vadd.f32 %v5831, %v5845
  %v5851 = vadd.f32 %v5832, %v5845
  %v5852 = vadd.f32 %v5833, %v5845
  %v5853 = vadd.f32 %v5834, %v5845
  %v5854 = vadd.f32 %v5835, %v5845
  %v5855 = vadd.f32 %v5836, %v5845
  %v5856 = vadd.f32 %v5837, %v5845
  %v5857 = vadd.f32 %v5838, %v5845
  %v5858 = vadd.f32 %v5839, %v5845
  %v5859 = vadd.f32 %v5840, %v5845
  %v5860 = vadd.f32 %v5841, %v5845
  %v5861 = vadd.f32 %v5842, %v5845
  %v5862 = vadd.f32 %v5843, %v5845
  %v5863 = vmul.f32 %v4014, 0.1
  %v5864 = vmul.f32 %v4015, 0.1
  %v5865 = vmul.f32 %v4016, 0.1
  %v5866 = vmul.f32 %v4017, 0.1
  %v5867 = vmul.f32 %v4018, 0.1
  %v5868 = vmul.f32 %v4019, 0.1
  %v5869 = vmul.f32 %v4020, 0.1
  %v5870 = vmul.f32 %v4021, 0.1
  %v5871 = vmul.f32 %v4022, 0.1
  %v5872 = vmul.f32 %v4023, 0.1
  %v5873 = vmul.f32 %v4024, 0.1
  %v5874 = vmul.f32 %v4025, 0.1
  %v5875 = vmul.f32 %v4026, 0.1
  %v5876 = vmul.f32 %v4027, 0.1
  %v5877 = vmul.f32 %v4028, 0.1
  %v5878 = vmul.f32 %v4029, 0.1
  %v5879 = vadd.f32 %v5847, %v5863
  %v5880 = vadd.f32 %v5848, %v5864
  %v5881 = vadd.f32 %v5849, %v5865
  %v5882 = vadd.f32 %v5850, %v5866
  %v5883 = vadd.f32 %v5851, %v5867
  %v5884 = vadd.f32 %v5852, %v5868
  %v5885 = vadd.f32 %v5853, %v5869
  %v5886 = vadd.f32 %v5854, %v5870
  %v5887 = vadd.f32 %v5855, %v5871
  %v5888 = vadd.f32 %v5856, %v5872
  %v5889 = vadd.f32 %v5857, %v5873
  %v5890 = vadd.f32 %v5858, %v5874
  %v5891 = vadd.f32 %v5859, %v5875
  %v5892 = vadd.f32 %v5860, %v5876
  %v5893 = vadd.f32 %v5861, %v5877
  %v5894 = vadd.f32 %v5862, %v5878
  %v5895 = vld [vmem:[%s19] sm:$0xff]
  %v5896 = vld [vmem:[%s19 + $0x8] sm:$0xff]
  %v5897 = vld [vmem:[%s19 + $0x10] sm:$0xff]
  %v5898 = vld [vmem:[%s19 + $0x18] sm:$0xff]
  %v5899 = vld [vmem:[%s20] sm:$0x1]
  %v5901 = vperm.slane %v5899, 0
  %v5919 = vrot.slane %v5880, 7
  %v5920 = vsel %vm1871, %v5919, %v5879
  %v5921 = vrot.slane %v5881, 6
  %v5922 = vsel %vm1873, %v5921, %v5920
  %v5923 = vrot.slane %v5882, 5
  %v5924 = vsel %vm1875, %v5923, %v5922
  %v5925 = vrot.slane %v5883, 4
  %v5926 = vsel %vm1877, %v5925, %v5924
  %v5927 = vrot.slane %v5884, 3
  %v5928 = vsel %vm1879, %v5927, %v5926
  %v5929 = vrot.slane %v5885, 2
  %v5930 = vsel %vm1881, %v5929, %v5928
  %v5931 = vrot.slane %v5886, 1
  %v5932 = vsel %vm1883, %v5931, %v5930
  %v5933 = vrot.slane %v5888, 7
  %v5934 = vsel %vm1871, %v5933, %v5887
  %v5935 = vrot.slane %v5889, 6
  %v5936 = vsel %vm1873, %v5935, %v5934
  %v5937 = vrot.slane %v5890, 5
  %v5938 = vsel %vm1875, %v5937, %v5936
  %v5939 = vrot.slane %v5891, 4
  %v5940 = vsel %vm1877, %v5939, %v5938
  %v5941 = vrot.slane %v5892, 3
  %v5942 = vsel %vm1879, %v5941, %v5940
  %v5943 = vrot.slane %v5893, 2
  %v5944 = vsel %vm1881, %v5943, %v5942
  %v5945 = vrot.slane %v5894, 1
  %v5946 = vsel %vm1883, %v5945, %v5944
  %v5947 = vsel %vm644, %v5932, 0
  %v5949 = vsel %vm644, %v5946, 0
  %5951 = vmatpush.msra.mxu0 0.0
  %5952 = vmatpush.msra.mxu0 0.0
  %5953 = vmatpush.msra.mxu0 0.0
  %5954 = vmatpush.msra.mxu0 0.0
  %5955 = vmatpush.msra.mxu0 0.0
  %5956 = vmatpush.msra.mxu0 0.0
  %5957 = vmatpush.msra.mxu0 0.0
  %5958 = vmatpush.msra.mxu0 0.0
  %5959 = vmatpush.msra.mxu0 0.0
  %5960 = vmatpush.msra.mxu0 0.0
  %5961 = vmatpush.msra.mxu0 0.0
  %5962 = vmatpush.msra.mxu0 0.0
  %5963 = vmatpush.msra.mxu0 %v5898
  %5964 = vmatpush.msra.mxu0 %v5897
  %5965 = vmatpush.msra.mxu0 %v5896
  %5966 = vmatpush.msra.mxu0 %v5895
  %5967 = vmatmul.f32.gmra.mxu0 %v5947
  %v5968 = vpop.f32.mrf.mxu0
  %v5969 = vadd.f32 %v5901, %v5968
  %5970 = vmatmul.f32.gmra.mxu0 %v5949
  %v5971 = vpop.f32.mrf.mxu0
  %v5972 = vadd.f32 %v5901, %v5971
  %5973 = vdwg.mxu0
  %v5974 = vmax.f32 %v5969, 0.0
  %v5975 = vmax.f32 %v5972, 0.0
  %v5976 = vld [vmem:[%s21] sm:$0x1]
  %v5978 = vperm.slane %v5976, 0
  %v5980 = vmul.f32 %v5974, %v5978
  %v5981 = vmul.f32 %v5975, %v5978
  %vm5982 = vcmask 130048
  %v5983 = vsel %vm5982, %v5980, 0.0
  %5984 = vadd.xlane.f32.xlu0 %v5983
  %v5985 = vpop.xlane.xlu0 %5984
  %v5986 = vsel %vm5982, %v5981, 0.0
  %5987 = vadd.xlane.f32.xlu0 %v5986
  %v5988 = vpop.xlane.xlu0 %5987
  %5991 = vrot.lane.b32.xlu0 %v5980, 112
  %v5992 = vpop.permute.xlu0 %5991
  %5993 = vrot.lane.b32.xlu0 %v5981, 112
  %v5994 = vpop.permute.xlu0 %5993
  %v5997 = vsel %vm5982, %v5992, 0.0
  %5998 = vadd.xlane.f32.xlu0 %v5997
  %v5999 = vpop.xlane.xlu0 %5998
  %v6000 = vsel %vm5982, %v5994, 0.0
  %6001 = vadd.xlane.f32.xlu0 %v6000
  %v6002 = vpop.xlane.xlu0 %6001
  %v6003 = vsel %vm4564, %v5985, %v5999
  %v6004 = vsel %vm4564, %v5988, %v6002
  %v6005 = vld [vmem:[%s22] sm:$0x1]
  %v6007 = vperm.slane %v6005, 0
  %v6009 = vadd.f32 %v6003, %v6007
  %v6010 = vadd.f32 %v6004, %v6007
  %vm6011 = vcmask 15360
  %6012 = vst.msk [vmem:[%s23] sm:$0xff] %vm6011, %v6009
  %6013 = vst.msk [vmem:[%s23 + $0x8] sm:$0xff] %vm6011, %v6010
  // Predicated region
  $region94: #{tpu_custom_call.1} parent=0 // pred_check
    _
  $region95: #{tpu_custom_call.1} parent=0 // pred_check_branch
    %6015 = sbr.rel (0) target = $region97
  $region96: #{tpu_custom_call.1} parent=0 // pred_region
    _
  $region97: #{tpu_custom_call.1} parent=0 // pred_fallthru
    _
  // Predicated region
  $region98: #{tpu_custom_call.1} parent=0 // pred_check
    _
  $region99: #{tpu_custom_call.1} parent=0 // pred_check_branch
    %6017 = sbr.rel (0) target = $region101
  $region100: #{tpu_custom_call.1} parent=0 // pred_region
    _
  $region101: #{tpu_custom_call.1} parent=0 // pred_fallthru
    _

</llo_original>
